<compile_context>
chip_gen: v7x
topology: tpu7x:2x2x1
jax: 0.10.0
libtpu: 0.0.40
codegen_flags: <defaults>
</compile_context>

<pallas_src>
import jax
import jax.numpy as jnp
from jax import lax
from jax.experimental import pallas as pl
from jax.experimental.pallas import tpu as pltpu

BN_EPS = 1e-5                        # PyTorch BatchNorm2d default eps
VMEM_LIMIT_BYTES = 32 * 1024 * 1024  # leaves headroom even on v7x's 64 MiB physical VMEM


def _round_up(x, m):
    return ((x + m - 1) // m) * m


def _choose_tm(k, m, dmax):
    """Per-layer row tile.  Small tiles for the K=4608 layers (weight VMEM residency),
    large tiles for the HBM-bound small-K tail.  Must satisfy TM//2 >= dmax (halo)."""
    if k >= 4096:
        base = 256
    elif k >= 2048:
        base = 512
    else:
        base = 1024
    tm = min(base, _round_up(max(m, 16), 16))
    tm = max(tm, _round_up(2 * dmax, 16), 16)
    return tm


# ---------------------------------------------------------------------------
# Pallas kernel: fused (ConvTranspose as tap-accumulated stride-1 conv) + BN + act
# ---------------------------------------------------------------------------
def _make_conv_kernel(taps, cin, cout, tm, final):
    """taps: list of (tap_index, row_offset) into the flattened padded activation.
    Window rows per grid step = tm + tm//2 (haloed)."""

    def kernel(a_ref, b_ref, w_ref, shift_ref, *out_and_scratch):
        if final:
            logits_ref, probs_ref, win_ref = out_and_scratch
        else:
            out_ref, win_ref = out_and_scratch

        # Assemble the haloed row window [i*TM, i*TM + 1.5*TM) in VMEM.  Kept in f32 so
        # the per-tap (sublane-unaligned) row slices stay on the native 32-bit layout.
        win_ref[0:tm, :] = a_ref[...].astype(jnp.float32)
        win_ref[tm:tm + tm // 2, :] = b_ref[...].astype(jnp.float32)

        acc = jnp.zeros((tm, cout), jnp.float32)
        for t, d in taps:
            x_t = win_ref[d:d + tm, :].astype(jnp.bfloat16)      # shifted patch rows (bf16 MXU)
            w_t = w_ref[t * cin:(t + 1) * cin, :]                # (cin, cout) tap weights (bf16)
            acc = acc + jnp.dot(x_t, w_t, preferred_element_type=jnp.float32)

        z = acc + shift_ref[...]                                 # folded ConvT bias + BN shift
        if final:
            logits_ref[...] = z.astype(logits_ref.dtype)
            probs_ref[...] = jax.nn.sigmoid(z).astype(probs_ref.dtype)
        else:
            out_ref[...] = jnp.maximum(z, 0.0).astype(out_ref.dtype)

    return kernel


# ---------------------------------------------------------------------------
# One decoder layer: ConvTranspose2d (+BN eval-mode, +ReLU / +sigmoid on the last layer)
# ---------------------------------------------------------------------------
def _conv_transpose_bn_act(x_nhwc, layer, *, final):
    KH, KW = layer["ksize"]
    sh, sw = layer["stride"]
    ph, pw = layer["padding"]
    oph, opw = layer["output_padding"]
    cin, cout = layer["cin"], layer["cout"]
    N, H, W, _ = x_nhwc.shape

    # zero-insertion (transposed-conv "dilation" of the input) for stride > 1
    if sh > 1 or sw > 1:
        Hd, Wd = (H - 1) * sh + 1, (W - 1) * sw + 1
        y = jnp.zeros((N, Hd, Wd, cin), x_nhwc.dtype).at[:, ::sh, ::sw, :].set(x_nhwc)
    else:
        y = x_nhwc

    # padding of the equivalent stride-1 convolution (+ output_padding bottom/right)
    p_top, p_bot = KH - 1 - ph, KH - 1 - ph + oph
    p_lft, p_rgt = KW - 1 - pw, KW - 1 - pw + opw
    y = jnp.pad(y, ((0, 0), (p_top, p_bot), (p_lft, p_rgt), (0, 0)))
    Hp, Wp = y.shape[1], y.shape[2]
    Hout, Wout = Hp - KH + 1, Wp - KW + 1

    # flattened-offset trick: compute an oversized (N, Hp, Wp) output and crop later;
    # tap (kh, kw) reads row  m + kh*Wp + kw  of the flattened padded activation.
    taps = [(kh * KW + kw, kh * Wp + kw) for kh in range(KH) for kw in range(KW)]
    dmax = (KH - 1) * Wp + (KW - 1)
    K = KH * KW * cin
    M = N * Hp * Wp
    TM = _choose_tm(K, M, dmax)          # TM % 16 == 0 and TM//2 >= dmax
    Mpad = _round_up(M, TM)
    grid = Mpad // TM

    y_flat = y.reshape(M, cin)
    # zero rows for the last tile + halo; divisible by both TM and TM//2
    y_flat = jnp.pad(y_flat, ((0, Mpad + TM - M), (0, 0)))

    in_specs = [
        pl.BlockSpec((TM, cin), lambda i: (i, 0)),               # rows [i*TM, (i+1)*TM)
        pl.BlockSpec((TM // 2, cin), lambda i: (2 * i + 2, 0)),  # halo [(i+1)*TM, +TM/2)
        pl.BlockSpec((K, cout), lambda i: (0, 0)),               # folded bf16 weights (invariant)
        pl.BlockSpec((1, cout), lambda i: (0, 0)),               # per-channel f32 shift
    ]
    scratch = [pltpu.VMEM((TM + TM // 2, cin), jnp.float32)]
    cparams = pltpu.CompilerParams(
        dimension_semantics=("parallel",),
        vmem_limit_bytes=VMEM_LIMIT_BYTES,
    )
    kernel = _make_conv_kernel(taps, cin, cout, TM, final)
    args = (y_flat, y_flat, layer["w2d"], layer["shift"])

    if final:
        out_specs = (pl.BlockSpec((TM, cout), lambda i: (i, 0)),
                     pl.BlockSpec((TM, cout), lambda i: (i, 0)))
        out_shape = (jax.ShapeDtypeStruct((Mpad, cout), jnp.float32),
                     jax.ShapeDtypeStruct((Mpad, cout), jnp.float32))
    else:
        out_specs = pl.BlockSpec((TM, cout), lambda i: (i, 0))
        out_shape = jax.ShapeDtypeStruct((Mpad, cout), jnp.bfloat16)

    out = pl.pallas_call(
        kernel,
        out_shape=out_shape,
        grid_spec=pltpu.PrefetchScalarGridSpec(
            num_scalar_prefetch=0,
            grid=(grid,),
            in_specs=in_specs,
            out_specs=out_specs,
            scratch_shapes=scratch),
        compiler_params=cparams,
    )(*args)

    def crop(o):
        return o[:M].reshape(N, Hp, Wp, cout)[:, :Hout, :Wout, :]

    if final:
        return crop(out[0]), crop(out[1])
    return crop(out)


# ---------------------------------------------------------------------------
# Module definition: layer configs, deterministic init, parameter preparation
# ---------------------------------------------------------------------------
def _decoder_configs(input_channels):
    cfgs = []

    def add(cin, cout, k, s, p, op, bn):
        cfgs.append(dict(cin=cin, cout=cout, ksize=k, stride=s, padding=p,
                         output_padding=op, has_bn=bn))

    add(input_channels, 512, (5, 3), (3, 3), (1, 1), (1, 0), True)   # dec1
    add(512, 512, (3, 3), (1, 1), (1, 1), (0, 0), True)              # dec2
    add(512, 512, (3, 3), (1, 1), (1, 1), (0, 0), True)              # dec3
    add(512, 512, (3, 3), (2, 2), (1, 1), (1, 1), True)              # dec4
    add(512, 512, (3, 3), (1, 1), (1, 1), (0, 0), True)              # dec5
    add(512, 256, (3, 3), (1, 1), (1, 1), (0, 0), True)              # dec6
    add(256, 256, (3, 3), (2, 2), (1, 1), (1, 1), True)              # dec7
    add(256, 256, (3, 3), (1, 1), (1, 1), (0, 0), True)              # dec8
    add(256, 128, (3, 3), (1, 1), (1, 1), (0, 0), True)              # dec9
    add(128, 128, (3, 3), (2, 2), (1, 1), (1, 1), True)              # dec10
    add(128, 64, (3, 3), (1, 1), (1, 1), (0, 0), True)               # dec11
    add(64, 64, (3, 3), (2, 2), (1, 1), (1, 1), True)                # dec12
    add(64, 32, (3, 3), (1, 1), (1, 1), (0, 0), True)                # dec13
    add(32, 32, (3, 3), (2, 2), (1, 1), (1, 1), True)                # dec14
    add(32, 1, (3, 3), (1, 1), (1, 1), (0, 0), False)                # dec15
    return cfgs


def init_decoder_params(key, input_channels):
    """Deterministic parameters in the PyTorch layout (ConvTranspose weight (Cin,Cout,KH,KW))."""
    params = []
    for cfg in _decoder_configs(input_channels):
        key, kw, kb, kg, kbe, km, kv = jax.random.split(key, 7)
        cin, cout = cfg["cin"], cfg["cout"]
        KH, KW = cfg["ksize"]
        fan = cin * KH * KW
        weight = jax.random.normal(kw, (cin, cout, KH, KW), jnp.float32) * \
            jnp.sqrt(2.0 / fan)
        bias = 0.01 * jax.random.normal(kb, (cout,), jnp.float32)
        if cfg["has_bn"]:
            bn = (1.0 + 0.1 * jax.random.normal(kg, (cout,), jnp.float32),           # gamma
                  0.1 * jax.random.normal(kbe, (cout,), jnp.float32),                # beta
                  0.1 * jax.random.normal(km, (cout,), jnp.float32),                 # running_mean
                  1.0 + 0.1 * jnp.abs(jax.random.normal(kv, (cout,), jnp.float32)))  # running_var
        else:
            bn = None
        params.append(dict(weight=weight, bias=bias, bn=bn,
                           ksize=cfg["ksize"], stride=cfg["stride"],
                           padding=cfg["padding"], output_padding=cfg["output_padding"]))
    return params


def prepare_decoder_params(raw_params):
    """One-time prep: flip/transpose weights to (KH*KW*Cin, Cout), fold BN scale into the
    (bf16) weights and ConvT-bias + BN shift into a per-channel f32 shift."""
    prepped = []
    for layer in raw_params:
        w = layer["weight"]                                     # (Cin, Cout, KH, KW)
        cin, cout, KH, KW = w.shape
        w_conv = jnp.transpose(jnp.flip(w, (2, 3)), (2, 3, 0, 1))   # (KH, KW, Cin, Cout)
        if layer["bn"] is not None:
            gamma, beta, mean, var = layer["bn"]
            s = gamma / jnp.sqrt(var + BN_EPS)
            shift = beta + (layer["bias"] - mean) * s
        else:
            s = jnp.ones((cout,), jnp.float32)
            shift = layer["bias"]
        w2d = (w_conv * s).reshape(KH * KW * cin, cout).astype(jnp.bfloat16)
        prepped.append(dict(
            w2d=w2d,
            shift=shift.reshape(1, cout).astype(jnp.float32),
            ksize=(KH, KW), cin=cin, cout=cout,
            stride=layer["stride"], padding=layer["padding"],
            output_padding=layer["output_padding"]))
    return prepped


def road_segmentation_decoder_forward(x_nchw, prepped_params):
    """x_nchw: (N, C_in, H, W) like PyTorch.  Returns (logits, probs), each (N, H_out, W_out)."""
    x = jnp.transpose(x_nchw, (0, 2, 3, 1)).astype(jnp.bfloat16)     # NCHW -> NHWC, bf16
    for layer in prepped_params[:-1]:
        x = _conv_transpose_bn_act(x, layer, final=False)
    logits_nhwc, probs_nhwc = _conv_transpose_bn_act(x, prepped_params[-1], final=True)
    # torch.squeeze(logits, 1) in NCHW == dropping the (single) channel axis here
    return logits_nhwc[..., 0], probs_nhwc[..., 0]


# ---------------------------------------------------------------------------
# Plain-JAX (XLA conv) reference with the same bf16 operands / f32 accumulation
# ---------------------------------------------------------------------------
def _reference_forward(x_nchw, prepped_params):
    x = jnp.transpose(x_nchw, (0, 2, 3, 1)).astype(jnp.bfloat16)
    n_layers = len(prepped_params)
    logits = probs = None
    for li, layer in enumerate(prepped_params):
        KH, KW = layer["ksize"]
        sh, sw = layer["stride"]
        ph, pw = layer["padding"]
        oph, opw = layer["output_padding"]
        cin, cout = layer["cin"], layer["cout"]
        w_hwio = layer["w2d"].reshape(KH, KW, cin, cout)
        z = lax.conv_general_dilated(
            x, w_hwio, window_strides=(1, 1),
            padding=[(KH - 1 - ph, KH - 1 - ph + oph),
                     (KW - 1 - pw, KW - 1 - pw + opw)],
            lhs_dilation=(sh, sw), rhs_dilation=(1, 1),
            dimension_numbers=("NHWC", "HWIO", "NHWC"),
            preferred_element_type=jnp.float32)
        z = z + layer["shift"][0]
        if li < n_layers - 1:
            x = jnp.maximum(z, 0.0).astype(jnp.bfloat16)
        else:
            logits = z[..., 0]
            probs = jax.nn.sigmoid(logits)
    return logits, probs


# ---------------------------------------------------------------------------
if __name__ == "__main__":
    input_channels = 8
    x = jax.random.normal(jax.random.PRNGKey(0),
                          (2, input_channels, 2, 2), jnp.float32)    # NCHW decoder feature map
    raw_params = init_decoder_params(jax.random.PRNGKey(1), input_channels)
    params = prepare_decoder_params(raw_params)

    logits, probs = road_segmentation_decoder_forward(x, params)
    jax.block_until_ready((logits, probs))

    # input (2,2) -> decoder upsamples to (224,128) with the module's strides/paddings
    assert logits.shape == (2, 224, 128), logits.shape
    assert probs.shape == (2, 224, 128), probs.shape
    assert bool(jnp.all(jnp.isfinite(logits)))
    assert bool(jnp.all((probs >= 0.0) & (probs <= 1.0)))

    # numerical cross-check against the XLA conv reference (same bf16 operands, f32 accum)
    ref_logits, ref_probs = _reference_forward(x, params)
    scale = max(1.0, float(jnp.max(jnp.abs(ref_logits))))
    rel_err = float(jnp.max(jnp.abs(logits - ref_logits))) / scale
    p_err = float(jnp.max(jnp.abs(probs - ref_probs)))
    assert rel_err < 5e-2, f"logits mismatch: rel_err={rel_err}"
    assert p_err < 5e-2, f"probs mismatch: abs_err={p_err}"

    print("KERNEL_OK")
</pallas_src>

<mosaic_0001>
module attributes {stable_mosaic.version = 11 : i64} {
  func.func @kernel(%arg0: i32, %arg1: memref<144x8xbf16, #tpu.memory_space<vmem>>, %arg2: memref<72x8xbf16, #tpu.memory_space<vmem>>, %arg3: memref<120x512xbf16, #tpu.memory_space<vmem>>, %arg4: memref<1x512xf32, #tpu.memory_space<vmem>>, %arg5: memref<144x512xbf16, #tpu.memory_space<vmem>>, %arg6: memref<216x8xf32, #tpu.memory_space<vmem>>) attributes {dimension_semantics = [#tpu.dimension_semantics<parallel>], iteration_bounds = array<i64: 1>, scalar_prefetch = 0 : i64, scratch_operands = 1 : i64, tpu.core_type = #tpu.core_type<tc>, window_params = [{transform_indices = @transform_0, window_bounds = array<i64: 144, 8>}, {transform_indices = @transform_1, window_bounds = array<i64: 72, 8>}, {pipeline_mode = #tpu.pipeline_mode<synchronous>, transform_indices = @transform_2, window_bounds = array<i64: 120, 512>}, {pipeline_mode = #tpu.pipeline_mode<synchronous>, transform_indices = @transform_3, window_bounds = array<i64: 1, 512>}, {transform_indices = @transform_4, window_bounds = array<i64: 144, 512>}]} {
    %c0 = arith.constant 0 : index
    %c0_0 = arith.constant 0 : index
    %0 = vector.load %arg1[%c0, %c0_0] : memref<144x8xbf16, #tpu.memory_space<vmem>>, vector<144x8xbf16>
    %1 = arith.extf %0 : vector<144x8xbf16> to vector<144x8xf32>
    %c0_1 = arith.constant 0 : index
    %c0_2 = arith.constant 0 : index
    %2 = vector.load %arg6[%c0_1, %c0_2] : memref<216x8xf32, #tpu.memory_space<vmem>>, vector<144x8xf32>
    tpu.vector_store %arg6[%c0_1, %c0_2], %1 {strides = array<i32>} : memref<216x8xf32, #tpu.memory_space<vmem>>, vector<144x8xf32>,
    %c0_3 = arith.constant 0 : index
    %c0_4 = arith.constant 0 : index
    %3 = vector.load %arg2[%c0_3, %c0_4] : memref<72x8xbf16, #tpu.memory_space<vmem>>, vector<72x8xbf16>
    %4 = arith.extf %3 : vector<72x8xbf16> to vector<72x8xf32>
    %c144 = arith.constant 144 : index
    %c0_5 = arith.constant 0 : index
    %5 = vector.load %arg6[%c144, %c0_5] : memref<216x8xf32, #tpu.memory_space<vmem>>, vector<72x8xf32>
    tpu.vector_store %arg6[%c144, %c0_5], %4 {strides = array<i32>} : memref<216x8xf32, #tpu.memory_space<vmem>>, vector<72x8xf32>,
    %cst = arith.constant 0.000000e+00 : f32
    %6 = vector.broadcast %cst : f32 to vector<144x512xf32>
    %c0_6 = arith.constant 0 : index
    %c0_7 = arith.constant 0 : index
    %7 = vector.load %arg6[%c0_6, %c0_7] : memref<216x8xf32, #tpu.memory_space<vmem>>, vector<144x8xf32>
    %8 = arith.truncf %7 : vector<144x8xf32> to vector<144x8xbf16>
    %c0_8 = arith.constant 0 : index
    %c0_9 = arith.constant 0 : index
    %9 = vector.load %arg3[%c0_8, %c0_9] : memref<120x512xbf16, #tpu.memory_space<vmem>>, vector<8x512xbf16>
    %cst_10 = arith.constant dense<0.000000e+00> : vector<144x512xf32>
    %10 = tpu.matmul %8, %9, %cst_10 {dimension_numbers = #tpu.dot_dimension_numbers<[1], [0], [0], [1], [0, 0, 1, 1], [], []>} : vector<144x8xbf16>, vector<8x512xbf16>, vector<144x512xf32> -> vector<144x512xf32>
    %11 = arith.addf %6, %10 : vector<144x512xf32>
    %c1 = arith.constant 1 : index
    %c0_11 = arith.constant 0 : index
    %12 = vector.load %arg6[%c1, %c0_11] : memref<216x8xf32, #tpu.memory_space<vmem>>, vector<144x8xf32>
    %13 = arith.truncf %12 : vector<144x8xf32> to vector<144x8xbf16>
    %c8 = arith.constant 8 : index
    %c0_12 = arith.constant 0 : index
    %14 = vector.load %arg3[%c8, %c0_12] : memref<120x512xbf16, #tpu.memory_space<vmem>>, vector<8x512xbf16>
    %cst_13 = arith.constant dense<0.000000e+00> : vector<144x512xf32>
    %15 = tpu.matmul %13, %14, %cst_13 {dimension_numbers = #tpu.dot_dimension_numbers<[1], [0], [0], [1], [0, 0, 1, 1], [], []>} : vector<144x8xbf16>, vector<8x512xbf16>, vector<144x512xf32> -> vector<144x512xf32>
    %16 = arith.addf %11, %15 : vector<144x512xf32>
    %c2 = arith.constant 2 : index
    %c0_14 = arith.constant 0 : index
    %17 = vector.load %arg6[%c2, %c0_14] : memref<216x8xf32, #tpu.memory_space<vmem>>, vector<144x8xf32>
    %18 = arith.truncf %17 : vector<144x8xf32> to vector<144x8xbf16>
    %c16 = arith.constant 16 : index
    %c0_15 = arith.constant 0 : index
    %19 = vector.load %arg3[%c16, %c0_15] : memref<120x512xbf16, #tpu.memory_space<vmem>>, vector<8x512xbf16>
    %cst_16 = arith.constant dense<0.000000e+00> : vector<144x512xf32>
    %20 = tpu.matmul %18, %19, %cst_16 {dimension_numbers = #tpu.dot_dimension_numbers<[1], [0], [0], [1], [0, 0, 1, 1], [], []>} : vector<144x8xbf16>, vector<8x512xbf16>, vector<144x512xf32> -> vector<144x512xf32>
    %21 = arith.addf %16, %20 : vector<144x512xf32>
    %c6 = arith.constant 6 : index
    %c0_17 = arith.constant 0 : index
    %22 = vector.load %arg6[%c6, %c0_17] : memref<216x8xf32, #tpu.memory_space<vmem>>, vector<144x8xf32>
    %23 = arith.truncf %22 : vector<144x8xf32> to vector<144x8xbf16>
    %c24 = arith.constant 24 : index
    %c0_18 = arith.constant 0 : index
    %24 = vector.load %arg3[%c24, %c0_18] : memref<120x512xbf16, #tpu.memory_space<vmem>>, vector<8x512xbf16>
    %cst_19 = arith.constant dense<0.000000e+00> : vector<144x512xf32>
    %25 = tpu.matmul %23, %24, %cst_19 {dimension_numbers = #tpu.dot_dimension_numbers<[1], [0], [0], [1], [0, 0, 1, 1], [], []>} : vector<144x8xbf16>, vector<8x512xbf16>, vector<144x512xf32> -> vector<144x512xf32>
    %26 = arith.addf %21, %25 : vector<144x512xf32>
    %c7 = arith.constant 7 : index
    %c0_20 = arith.constant 0 : index
    %27 = vector.load %arg6[%c7, %c0_20] : memref<216x8xf32, #tpu.memory_space<vmem>>, vector<144x8xf32>
    %28 = arith.truncf %27 : vector<144x8xf32> to vector<144x8xbf16>
    %c32 = arith.constant 32 : index
    %c0_21 = arith.constant 0 : index
    %29 = vector.load %arg3[%c32, %c0_21] : memref<120x512xbf16, #tpu.memory_space<vmem>>, vector<8x512xbf16>
    %cst_22 = arith.constant dense<0.000000e+00> : vector<144x512xf32>
    %30 = tpu.matmul %28, %29, %cst_22 {dimension_numbers = #tpu.dot_dimension_numbers<[1], [0], [0], [1], [0, 0, 1, 1], [], []>} : vector<144x8xbf16>, vector<8x512xbf16>, vector<144x512xf32> -> vector<144x512xf32>
    %31 = arith.addf %26, %30 : vector<144x512xf32>
    %c8_23 = arith.constant 8 : index
    %c0_24 = arith.constant 0 : index
    %32 = vector.load %arg6[%c8_23, %c0_24] : memref<216x8xf32, #tpu.memory_space<vmem>>, vector<144x8xf32>
    %33 = arith.truncf %32 : vector<144x8xf32> to vector<144x8xbf16>
    %c40 = arith.constant 40 : index
    %c0_25 = arith.constant 0 : index
    %34 = vector.load %arg3[%c40, %c0_25] : memref<120x512xbf16, #tpu.memory_space<vmem>>, vector<8x512xbf16>
    %cst_26 = arith.constant dense<0.000000e+00> : vector<144x512xf32>
    %35 = tpu.matmul %33, %34, %cst_26 {dimension_numbers = #tpu.dot_dimension_numbers<[1], [0], [0], [1], [0, 0, 1, 1], [], []>} : vector<144x8xbf16>, vector<8x512xbf16>, vector<144x512xf32> -> vector<144x512xf32>
    %36 = arith.addf %31, %35 : vector<144x512xf32>
    %c12 = arith.constant 12 : index
    %c0_27 = arith.constant 0 : index
    %37 = vector.load %arg6[%c12, %c0_27] : memref<216x8xf32, #tpu.memory_space<vmem>>, vector<144x8xf32>
    %38 = arith.truncf %37 : vector<144x8xf32> to vector<144x8xbf16>
    %c48 = arith.constant 48 : index
    %c0_28 = arith.constant 0 : index
    %39 = vector.load %arg3[%c48, %c0_28] : memref<120x512xbf16, #tpu.memory_space<vmem>>, vector<8x512xbf16>
    %cst_29 = arith.constant dense<0.000000e+00> : vector<144x512xf32>
    %40 = tpu.matmul %38, %39, %cst_29 {dimension_numbers = #tpu.dot_dimension_numbers<[1], [0], [0], [1], [0, 0, 1, 1], [], []>} : vector<144x8xbf16>, vector<8x512xbf16>, vector<144x512xf32> -> vector<144x512xf32>
    %41 = arith.addf %36, %40 : vector<144x512xf32>
    %c13 = arith.constant 13 : index
    %c0_30 = arith.constant 0 : index
    %42 = vector.load %arg6[%c13, %c0_30] : memref<216x8xf32, #tpu.memory_space<vmem>>, vector<144x8xf32>
    %43 = arith.truncf %42 : vector<144x8xf32> to vector<144x8xbf16>
    %c56 = arith.constant 56 : index
    %c0_31 = arith.constant 0 : index
    %44 = vector.load %arg3[%c56, %c0_31] : memref<120x512xbf16, #tpu.memory_space<vmem>>, vector<8x512xbf16>
    %cst_32 = arith.constant dense<0.000000e+00> : vector<144x512xf32>
    %45 = tpu.matmul %43, %44, %cst_32 {dimension_numbers = #tpu.dot_dimension_numbers<[1], [0], [0], [1], [0, 0, 1, 1], [], []>} : vector<144x8xbf16>, vector<8x512xbf16>, vector<144x512xf32> -> vector<144x512xf32>
    %46 = arith.addf %41, %45 : vector<144x512xf32>
    %c14 = arith.constant 14 : index
    %c0_33 = arith.constant 0 : index
    %47 = vector.load %arg6[%c14, %c0_33] : memref<216x8xf32, #tpu.memory_space<vmem>>, vector<144x8xf32>
    %48 = arith.truncf %47 : vector<144x8xf32> to vector<144x8xbf16>
    %c64 = arith.constant 64 : index
    %c0_34 = arith.constant 0 : index
    %49 = vector.load %arg3[%c64, %c0_34] : memref<120x512xbf16, #tpu.memory_space<vmem>>, vector<8x512xbf16>
    %cst_35 = arith.constant dense<0.000000e+00> : vector<144x512xf32>
    %50 = tpu.matmul %48, %49, %cst_35 {dimension_numbers = #tpu.dot_dimension_numbers<[1], [0], [0], [1], [0, 0, 1, 1], [], []>} : vector<144x8xbf16>, vector<8x512xbf16>, vector<144x512xf32> -> vector<144x512xf32>
    %51 = arith.addf %46, %50 : vector<144x512xf32>
    %c18 = arith.constant 18 : index
    %c0_36 = arith.constant 0 : index
    %52 = vector.load %arg6[%c18, %c0_36] : memref<216x8xf32, #tpu.memory_space<vmem>>, vector<144x8xf32>
    %53 = arith.truncf %52 : vector<144x8xf32> to vector<144x8xbf16>
    %c72 = arith.constant 72 : index
    %c0_37 = arith.constant 0 : index
    %54 = vector.load %arg3[%c72, %c0_37] : memref<120x512xbf16, #tpu.memory_space<vmem>>, vector<8x512xbf16>
    %cst_38 = arith.constant dense<0.000000e+00> : vector<144x512xf32>
    %55 = tpu.matmul %53, %54, %cst_38 {dimension_numbers = #tpu.dot_dimension_numbers<[1], [0], [0], [1], [0, 0, 1, 1], [], []>} : vector<144x8xbf16>, vector<8x512xbf16>, vector<144x512xf32> -> vector<144x512xf32>
    %56 = arith.addf %51, %55 : vector<144x512xf32>
    %c19 = arith.constant 19 : index
    %c0_39 = arith.constant 0 : index
    %57 = vector.load %arg6[%c19, %c0_39] : memref<216x8xf32, #tpu.memory_space<vmem>>, vector<144x8xf32>
    %58 = arith.truncf %57 : vector<144x8xf32> to vector<144x8xbf16>
    %c80 = arith.constant 80 : index
    %c0_40 = arith.constant 0 : index
    %59 = vector.load %arg3[%c80, %c0_40] : memref<120x512xbf16, #tpu.memory_space<vmem>>, vector<8x512xbf16>
    %cst_41 = arith.constant dense<0.000000e+00> : vector<144x512xf32>
    %60 = tpu.matmul %58, %59, %cst_41 {dimension_numbers = #tpu.dot_dimension_numbers<[1], [0], [0], [1], [0, 0, 1, 1], [], []>} : vector<144x8xbf16>, vector<8x512xbf16>, vector<144x512xf32> -> vector<144x512xf32>
    %61 = arith.addf %56, %60 : vector<144x512xf32>
    %c20 = arith.constant 20 : index
    %c0_42 = arith.constant 0 : index
    %62 = vector.load %arg6[%c20, %c0_42] : memref<216x8xf32, #tpu.memory_space<vmem>>, vector<144x8xf32>
    %63 = arith.truncf %62 : vector<144x8xf32> to vector<144x8xbf16>
    %c88 = arith.constant 88 : index
    %c0_43 = arith.constant 0 : index
    %64 = vector.load %arg3[%c88, %c0_43] : memref<120x512xbf16, #tpu.memory_space<vmem>>, vector<8x512xbf16>
    %cst_44 = arith.constant dense<0.000000e+00> : vector<144x512xf32>
    %65 = tpu.matmul %63, %64, %cst_44 {dimension_numbers = #tpu.dot_dimension_numbers<[1], [0], [0], [1], [0, 0, 1, 1], [], []>} : vector<144x8xbf16>, vector<8x512xbf16>, vector<144x512xf32> -> vector<144x512xf32>
    %66 = arith.addf %61, %65 : vector<144x512xf32>
    %c24_45 = arith.constant 24 : index
    %c0_46 = arith.constant 0 : index
    %67 = vector.load %arg6[%c24_45, %c0_46] : memref<216x8xf32, #tpu.memory_space<vmem>>, vector<144x8xf32>
    %68 = arith.truncf %67 : vector<144x8xf32> to vector<144x8xbf16>
    %c96 = arith.constant 96 : index
    %c0_47 = arith.constant 0 : index
    %69 = vector.load %arg3[%c96, %c0_47] : memref<120x512xbf16, #tpu.memory_space<vmem>>, vector<8x512xbf16>
    %cst_48 = arith.constant dense<0.000000e+00> : vector<144x512xf32>
    %70 = tpu.matmul %68, %69, %cst_48 {dimension_numbers = #tpu.dot_dimension_numbers<[1], [0], [0], [1], [0, 0, 1, 1], [], []>} : vector<144x8xbf16>, vector<8x512xbf16>, vector<144x512xf32> -> vector<144x512xf32>
    %71 = arith.addf %66, %70 : vector<144x512xf32>
    %c25 = arith.constant 25 : index
    %c0_49 = arith.constant 0 : index
    %72 = vector.load %arg6[%c25, %c0_49] : memref<216x8xf32, #tpu.memory_space<vmem>>, vector<144x8xf32>
    %73 = arith.truncf %72 : vector<144x8xf32> to vector<144x8xbf16>
    %c104 = arith.constant 104 : index
    %c0_50 = arith.constant 0 : index
    %74 = vector.load %arg3[%c104, %c0_50] : memref<120x512xbf16, #tpu.memory_space<vmem>>, vector<8x512xbf16>
    %cst_51 = arith.constant dense<0.000000e+00> : vector<144x512xf32>
    %75 = tpu.matmul %73, %74, %cst_51 {dimension_numbers = #tpu.dot_dimension_numbers<[1], [0], [0], [1], [0, 0, 1, 1], [], []>} : vector<144x8xbf16>, vector<8x512xbf16>, vector<144x512xf32> -> vector<144x512xf32>
    %76 = arith.addf %71, %75 : vector<144x512xf32>
    %c26 = arith.constant 26 : index
    %c0_52 = arith.constant 0 : index
    %77 = vector.load %arg6[%c26, %c0_52] : memref<216x8xf32, #tpu.memory_space<vmem>>, vector<144x8xf32>
    %78 = arith.truncf %77 : vector<144x8xf32> to vector<144x8xbf16>
    %c112 = arith.constant 112 : index
    %c0_53 = arith.constant 0 : index
    %79 = vector.load %arg3[%c112, %c0_53] : memref<120x512xbf16, #tpu.memory_space<vmem>>, vector<8x512xbf16>
    %cst_54 = arith.constant dense<0.000000e+00> : vector<144x512xf32>
    %80 = tpu.matmul %78, %79, %cst_54 {dimension_numbers = #tpu.dot_dimension_numbers<[1], [0], [0], [1], [0, 0, 1, 1], [], []>} : vector<144x8xbf16>, vector<8x512xbf16>, vector<144x512xf32> -> vector<144x512xf32>
    %81 = arith.addf %76, %80 : vector<144x512xf32>
    %c0_55 = arith.constant 0 : index
    %c0_56 = arith.constant 0 : index
    %82 = vector.load %arg4[%c0_55, %c0_56] : memref<1x512xf32, #tpu.memory_space<vmem>>, vector<1x512xf32>
    %83 = vector.broadcast %82 : vector<1x512xf32> to vector<144x512xf32>
    %84 = arith.addf %81, %83 : vector<144x512xf32>
    %cst_57 = arith.constant 0.000000e+00 : f32
    %85 = vector.broadcast %cst_57 : f32 to vector<144x512xf32>
    %86 = arith.maximumf %84, %85 : vector<144x512xf32>
    %87 = arith.truncf %86 : vector<144x512xf32> to vector<144x512xbf16>
    %c0_58 = arith.constant 0 : index
    %c0_59 = arith.constant 0 : index
    %88 = vector.load %arg5[%c0_58, %c0_59] : memref<144x512xbf16, #tpu.memory_space<vmem>>, vector<144x512xbf16>
    tpu.vector_store %arg5[%c0_58, %c0_59], %87 {strides = array<i32>} : memref<144x512xbf16, #tpu.memory_space<vmem>>, vector<144x512xbf16>,
    return
  }
  func.func @transform_0(%arg0: i32) -> (i32, i32) {
    %c0_i32 = arith.constant 0 : i32
    %c0_i32_0 = arith.constant 0 : i32
    return %arg0, %c0_i32 : i32, i32
  }
  func.func @transform_1(%arg0: i32) -> (i32, i32) {
    %c2_i32 = arith.constant 2 : i32
    %0 = arith.muli %c2_i32, %arg0 : i32
    %c2_i32_0 = arith.constant 2 : i32
    %1 = arith.addi %0, %c2_i32_0 : i32
    %c0_i32 = arith.constant 0 : i32
    %c0_i32_1 = arith.constant 0 : i32
    return %1, %c0_i32 : i32, i32
  }
  func.func @transform_2(%arg0: i32) -> (i32, i32) {
    %c0_i32 = arith.constant 0 : i32
    %c0_i32_0 = arith.constant 0 : i32
    %c0_i32_1 = arith.constant 0 : i32
    return %c0_i32, %c0_i32_0 : i32, i32
  }
  func.func @transform_3(%arg0: i32) -> (i32, i32) {
    %c0_i32 = arith.constant 0 : i32
    %c0_i32_0 = arith.constant 0 : i32
    %c0_i32_1 = arith.constant 0 : i32
    return %c0_i32, %c0_i32_0 : i32, i32
  }
  func.func @transform_4(%arg0: i32) -> (i32, i32) {
    %c0_i32 = arith.constant 0 : i32
    %c0_i32_0 = arith.constant 0 : i32
    return %arg0, %c0_i32 : i32, i32
  }
}

</mosaic_0001>

<llo_original>
// kernel: tpu_custom_call.1
$region0: #{tpu_custom_call.1}
  #allocation0 [shape = 'u32[]', space=smem, size = 0x4, offset = 0x4, fixed_abs, tag = 'smem constant byte address 0x4 - core index']
  #allocation1 [shape = 'u32[144,128]{1,0:T(1,128)}', space=vmem, size = 0x12000, scoped, tag = 'internal scratch']
  #allocation2 [shape = 'f32[216,8]{1,0:T(8,128)}', space=vmem, size = 0x1b000, scoped, tag = 'scratch operand']
  %s0 = inlined_call_operand.vmem [shape: bf16[288,8], index: 0, kind: input, shape index: {}]
  %s1 = inlined_call_operand.vmem [shape: bf16[288,8], index: 1, kind: input, shape index: {}]
  %s2 = inlined_call_operand.vmem [shape: bf16[120,512], index: 2, kind: input, shape index: {}]
  %s3 = inlined_call_operand.vmem [shape: f32[1,512], index: 3, kind: input, shape index: {}]
  %s4 = inlined_call_operand.hbm [shape: bf16[144,512], index: 4, kind: output, shape index: {}]
  %s5 = sld [smem:[#allocation0]]
  $region26: #{tpu_custom_call.1} parent=0
    _
  %s7 = ssub.s32 1, %s5
  %s8 = scalar_select 0, %s7, %s5
  $region1: #{tpu_custom_call.1} parent=0
    #allocation3 [shape = 'u8[147456]{0}', space=vmem, size = 0x24000, scoped, tag = 'output window, operand 0, single buffered']
    #allocation4 [shape = 's32[1]{0}', space=sflag, size = 0x4, scoped, tag = 'scoped memory for tpu_custom_call.1']
    %9 = vsyncpa [#allocation4], 0
    // Predicated region
    $region2: #{tpu_custom_call.1} parent=1 // pred_check
      _
    $region3: #{tpu_custom_call.1} parent=1 // pred_check_branch
      %11 = sbr.rel (0) target = $region5
    $region4: #{tpu_custom_call.1} parent=1 // pred_region
      _
    $region5: #{tpu_custom_call.1} parent=1 // pred_fallthru
      _
    // Predicated region
    $region6: #{tpu_custom_call.1} parent=1 // pred_check
      _
    $region7: #{tpu_custom_call.1} parent=1 // pred_check_branch
      %13 = sbr.rel (0) target = $region9
    $region8: #{tpu_custom_call.1} parent=1 // pred_region
      %s14 = smul.u32 0, 2
      %s15 = sadd.s32 %s14, 2
      %s16 = smul.u32 9, %s15
      %p17 = scmp.lt.s32.totalorder %s16, 35
      %s18 = scalar_select %p17, %s16, 35
      %s19 = smul.addr %s18, 4
      %s20 = scalar_lea.vmem %s1, %s19
      %s21 = smul.u32 0, 2
      %s22 = sadd.s32 %s21, 2
      %s23 = smul.u32 9, %s22
    $region9: #{tpu_custom_call.1} parent=1 // pred_fallthru
      _
    // Predicated region
    $region10: #{tpu_custom_call.1} parent=1 // pred_check
      _
    $region11: #{tpu_custom_call.1} parent=1 // pred_check_branch
      %25 = sbr.rel (0) target = $region13
    $region12: #{tpu_custom_call.1} parent=1 // pred_region
      _
    $region13: #{tpu_custom_call.1} parent=1 // pred_fallthru
      _
    // Predicated region
    $region14: #{tpu_custom_call.1} parent=1 // pred_check
      _
    $region15: #{tpu_custom_call.1} parent=1 // pred_check_branch
      %27 = sbr.rel (0) target = $region17
    $region16: #{tpu_custom_call.1} parent=1 // pred_region
      _
    $region17: #{tpu_custom_call.1} parent=1 // pred_fallthru
      _
    %s28 = smul.u32 0, 2
    %s29 = sadd.s32 %s28, 2
    %s30 = smul.u32 9, %s29
    %p31 = scmp.lt.s32.totalorder %s30, 35
    %s32 = scalar_select %p31, %s30, 35
    %s33 = smul.addr %s32, 4
    %s34 = scalar_lea.vmem %s1, %s33
    %s35 = smul.u32 0, 2
    %s36 = sadd.s32 %s35, 2
    %s37 = smul.u32 9, %s36
    %p38 = scmp.lt.s32.totalorder %s37, 35
    %s39 = scalar_select %p38, %s37, 35
    %s40 = smul.addr %s39, 4
    %s41 = scalar_lea.vmem %s1, %s40
    %s42 = smul.u32 0, 2
    %s43 = sadd.s32 %s42, 2
    %s44 = smul.u32 9, %s43
    %v46 = vld [vmem:[%s0] sm:$0xf]
    %v47 = vld [vmem:[%s0 + $0x4] sm:$0xf]
    %v48 = vld [vmem:[%s0 + $0x8] sm:$0xf]
    %v49 = vld [vmem:[%s0 + $0xc] sm:$0xf]
    %v50 = vld [vmem:[%s0 + $0x10] sm:$0xf]
    %v51 = vld [vmem:[%s0 + $0x14] sm:$0xf]
    %v52 = vld [vmem:[%s0 + $0x18] sm:$0xf]
    %v53 = vld [vmem:[%s0 + $0x1c] sm:$0xf]
    %v54 = vld [vmem:[%s0 + $0x20] sm:$0xf]
    %v55 = vld [vmem:[%s0 + $0x24] sm:$0xf]
    %v56 = vld [vmem:[%s0 + $0x28] sm:$0xf]
    %v57 = vld [vmem:[%s0 + $0x2c] sm:$0xf]
    %v58 = vld [vmem:[%s0 + $0x30] sm:$0xf]
    %v59 = vld [vmem:[%s0 + $0x34] sm:$0xf]
    %v60 = vld [vmem:[%s0 + $0x38] sm:$0xf]
    %v61 = vld [vmem:[%s0 + $0x3c] sm:$0xf]
    %v62 = vld [vmem:[%s0 + $0x40] sm:$0xf]
    %v63 = vld [vmem:[%s0 + $0x44] sm:$0xf]
    %v64 = vunpack.c.l.bf16 %v46
    %v65 = vunpack.c.l.bf16 %v47
    %v66 = vunpack.c.l.bf16 %v48
    %v67 = vunpack.c.l.bf16 %v49
    %v68 = vunpack.c.l.bf16 %v50
    %v69 = vunpack.c.l.bf16 %v51
    %v70 = vunpack.c.l.bf16 %v52
    %v71 = vunpack.c.l.bf16 %v53
    %v72 = vunpack.c.l.bf16 %v54
    %v73 = vunpack.c.l.bf16 %v55
    %v74 = vunpack.c.l.bf16 %v56
    %v75 = vunpack.c.l.bf16 %v57
    %v76 = vunpack.c.l.bf16 %v58
    %v77 = vunpack.c.l.bf16 %v59
    %v78 = vunpack.c.l.bf16 %v60
    %v79 = vunpack.c.l.bf16 %v61
    %v80 = vunpack.c.l.bf16 %v62
    %v81 = vunpack.c.l.bf16 %v63
    %vm82 = vcmask 64512
    %83 = vst.msk [vmem:[#allocation2] sm:$0xff] %vm82, %v64
    %84 = vst.msk [vmem:[#allocation2 + $0x8] sm:$0xff] %vm82, %v65
    %85 = vst.msk [vmem:[#allocation2 + $0x10] sm:$0xff] %vm82, %v66
    %86 = vst.msk [vmem:[#allocation2 + $0x18] sm:$0xff] %vm82, %v67
    %87 = vst.msk [vmem:[#allocation2 + $0x20] sm:$0xff] %vm82, %v68
    %88 = vst.msk [vmem:[#allocation2 + $0x28] sm:$0xff] %vm82, %v69
    %89 = vst.msk [vmem:[#allocation2 + $0x30] sm:$0xff] %vm82, %v70
    %90 = vst.msk [vmem:[#allocation2 + $0x38] sm:$0xff] %vm82, %v71
    %91 = vst.msk [vmem:[#allocation2 + $0x40] sm:$0xff] %vm82, %v72
    %92 = vst.msk [vmem:[#allocation2 + $0x48] sm:$0xff] %vm82, %v73
    %93 = vst.msk [vmem:[#allocation2 + $0x50] sm:$0xff] %vm82, %v74
    %94 = vst.msk [vmem:[#allocation2 + $0x58] sm:$0xff] %vm82, %v75
    %95 = vst.msk [vmem:[#allocation2 + $0x60] sm:$0xff] %vm82, %v76
    %96 = vst.msk [vmem:[#allocation2 + $0x68] sm:$0xff] %vm82, %v77
    %97 = vst.msk [vmem:[#allocation2 + $0x70] sm:$0xff] %vm82, %v78
    %98 = vst.msk [vmem:[#allocation2 + $0x78] sm:$0xff] %vm82, %v79
    %99 = vst.msk [vmem:[#allocation2 + $0x80] sm:$0xff] %vm82, %v80
    %100 = vst.msk [vmem:[#allocation2 + $0x88] sm:$0xff] %vm82, %v81
    %v101 = vld [vmem:[%s41] sm:$0xf]
    %v102 = vld [vmem:[%s41 + $0x4] sm:$0xf]
    %v103 = vld [vmem:[%s41 + $0x8] sm:$0xf]
    %v104 = vld [vmem:[%s41 + $0xc] sm:$0xf]
    %v105 = vld [vmem:[%s41 + $0x10] sm:$0xf]
    %v106 = vld [vmem:[%s41 + $0x14] sm:$0xf]
    %v107 = vld [vmem:[%s41 + $0x18] sm:$0xf]
    %v108 = vld [vmem:[%s41 + $0x1c] sm:$0xf]
    %v109 = vld [vmem:[%s41 + $0x20] sm:$0xf]
    %v110 = vunpack.c.l.bf16 %v101
    %v111 = vunpack.c.l.bf16 %v102
    %v112 = vunpack.c.l.bf16 %v103
    %v113 = vunpack.c.l.bf16 %v104
    %v114 = vunpack.c.l.bf16 %v105
    %v115 = vunpack.c.l.bf16 %v106
    %v116 = vunpack.c.l.bf16 %v107
    %v117 = vunpack.c.l.bf16 %v108
    %v118 = vunpack.c.l.bf16 %v109
    %119 = vst.msk [vmem:[#allocation2 + $0x90] sm:$0xff] %vm82, %v110
    %120 = vst.msk [vmem:[#allocation2 + $0x98] sm:$0xff] %vm82, %v111
    %121 = vst.msk [vmem:[#allocation2 + $0xa0] sm:$0xff] %vm82, %v112
    %122 = vst.msk [vmem:[#allocation2 + $0xa8] sm:$0xff] %vm82, %v113
    %123 = vst.msk [vmem:[#allocation2 + $0xb0] sm:$0xff] %vm82, %v114
    %124 = vst.msk [vmem:[#allocation2 + $0xb8] sm:$0xff] %vm82, %v115
    %125 = vst.msk [vmem:[#allocation2 + $0xc0] sm:$0xff] %vm82, %v116
    %126 = vst.msk [vmem:[#allocation2 + $0xc8] sm:$0xff] %vm82, %v117
    %127 = vst.msk [vmem:[#allocation2 + $0xd0] sm:$0xff] %vm82, %v118
    %v128 = vld [vmem:[#allocation2] sm:$0xff]
    %v129 = vld [vmem:[#allocation2 + $0x8] sm:$0xff]
    %v130 = vld [vmem:[#allocation2 + $0x10] sm:$0xff]
    %v131 = vld [vmem:[#allocation2 + $0x18] sm:$0xff]
    %v132 = vld [vmem:[#allocation2 + $0x20] sm:$0xff]
    %v133 = vld [vmem:[#allocation2 + $0x28] sm:$0xff]
    %v134 = vld [vmem:[#allocation2 + $0x30] sm:$0xff]
    %v135 = vld [vmem:[#allocation2 + $0x38] sm:$0xff]
    %v136 = vld [vmem:[#allocation2 + $0x40] sm:$0xff]
    %v137 = vld [vmem:[#allocation2 + $0x48] sm:$0xff]
    %v138 = vld [vmem:[#allocation2 + $0x50] sm:$0xff]
    %v139 = vld [vmem:[#allocation2 + $0x58] sm:$0xff]
    %v140 = vld [vmem:[#allocation2 + $0x60] sm:$0xff]
    %v141 = vld [vmem:[#allocation2 + $0x68] sm:$0xff]
    %v142 = vld [vmem:[#allocation2 + $0x70] sm:$0xff]
    %v143 = vld [vmem:[#allocation2 + $0x78] sm:$0xff]
    %v144 = vld [vmem:[#allocation2 + $0x80] sm:$0xff]
    %v145 = vld [vmem:[#allocation2 + $0x88] sm:$0xff]
    %v146 = vpack.c.bf16 %v129, %v128
    %v147 = vpack.c.bf16 %v131, %v130
    %v148 = vpack.c.bf16 %v133, %v132
    %v149 = vpack.c.bf16 %v135, %v134
    %v150 = vpack.c.bf16 %v137, %v136
    %v151 = vpack.c.bf16 %v139, %v138
    %v152 = vpack.c.bf16 %v141, %v140
    %v153 = vpack.c.bf16 %v143, %v142
    %v154 = vpack.c.bf16 %v145, %v144
    %v155 = vld [vmem:[%s2] sm:$0xff]
    %v156 = vld [vmem:[%s2 + $0x8] sm:$0xff]
    %v157 = vld [vmem:[#allocation2 + $0x1] sm:$0xff]
    %v158 = vld [vmem:[#allocation2 + $0x9] sm:$0xff]
    %v159 = vld [vmem:[#allocation2 + $0x11] sm:$0xff]
    %v160 = vld [vmem:[#allocation2 + $0x19] sm:$0xff]
    %v161 = vld [vmem:[#allocation2 + $0x21] sm:$0xff]
    %v162 = vld [vmem:[#allocation2 + $0x29] sm:$0xff]
    %v163 = vld [vmem:[#allocation2 + $0x31] sm:$0xff]
    %v164 = vld [vmem:[#allocation2 + $0x39] sm:$0xff]
    %v165 = vld [vmem:[#allocation2 + $0x41] sm:$0xff]
    %v166 = vld [vmem:[#allocation2 + $0x49] sm:$0xff]
    %v167 = vld [vmem:[#allocation2 + $0x51] sm:$0xff]
    %v168 = vld [vmem:[#allocation2 + $0x59] sm:$0xff]
    %v169 = vld [vmem:[#allocation2 + $0x61] sm:$0xff]
    %v170 = vld [vmem:[#allocation2 + $0x69] sm:$0xff]
    %v171 = vld [vmem:[#allocation2 + $0x71] sm:$0xff]
    %v172 = vld [vmem:[#allocation2 + $0x79] sm:$0xff]
    %v173 = vld [vmem:[#allocation2 + $0x81] sm:$0xff]
    %v174 = vld [vmem:[#allocation2 + $0x89] sm:$0xff]
    %v175 = vpack.c.bf16 %v158, %v157
    %v176 = vpack.c.bf16 %v160, %v159
    %v177 = vpack.c.bf16 %v162, %v161
    %v178 = vpack.c.bf16 %v164, %v163
    %v179 = vpack.c.bf16 %v166, %v165
    %v180 = vpack.c.bf16 %v168, %v167
    %v181 = vpack.c.bf16 %v170, %v169
    %v182 = vpack.c.bf16 %v172, %v171
    %v183 = vpack.c.bf16 %v174, %v173
    %v184 = vld [vmem:[%s2 + $0x10] sm:$0xff]
    %v185 = vld [vmem:[%s2 + $0x18] sm:$0xff]
    %v188 = vunpack.c.l.b16 %v184
    %v189 = vunpack.c.h.b16 %v184
    %v190 = vunpack.c.l.b16 %v185
    %v191 = vunpack.c.h.b16 %v185
    %v192 = vpack.c.b16 %v188, %v188
    %v193 = vpack.c.b16 %v189, %v189
    %v194 = vpack.c.b16 %v190, %v190
    %v195 = vpack.c.b16 %v191, %v191
    %v197 = vsel %vm82, %v175, 0
    %v200 = vsel %vm82, %v176, 0
    %v203 = vsel %vm82, %v177, 0
    %v206 = vsel %vm82, %v178, 0
    %v209 = vsel %vm82, %v179, 0
    %v212 = vsel %vm82, %v180, 0
    %v215 = vsel %vm82, %v181, 0
    %v218 = vsel %vm82, %v182, 0
    %v221 = vsel %vm82, %v183, 0
    %vm223 = vcmask 1043456
    %v225 = vsel %vm223, %v192, 0
    %v228 = vsel %vm223, %v193, 0
    %v231 = vsel %vm223, %v194, 0
    %v234 = vsel %vm223, %v195, 0
    %236 = vmatprep.subr.bf16.mxu0 %v228
    %237 = vmatpush1.bf16.msra.mxu0 %v225
    %238 = vmatprep.subr.bf16.mxu0 0
    %239 = vmatpush1.bf16.msra.mxu0 0
    %240 = vmatprep.subr.bf16.mxu0 0
    %241 = vmatpush1.bf16.msra.mxu0 0
    %242 = vmatprep.subr.bf16.mxu0 0
    %243 = vmatpush1.bf16.msra.mxu0 0
    %244 = vmatprep.subr.bf16.mxu0 0
    %245 = vmatpush1.bf16.msra.mxu0 0
    %246 = vmatprep.subr.bf16.mxu0 0
    %247 = vmatpush1.bf16.msra.mxu0 0
    %248 = vmatprep.subr.bf16.mxu0 0
    %249 = vmatpush1.bf16.msra.mxu0 0
    %250 = vmatprep.subr.bf16.mxu0 0
    %251 = vmatpush1.bf16.msra.mxu0 0
    %252 = vmatprep.subr.bf16.mxu0 0
    %253 = vmatpush1.bf16.msra.mxu0 0
    %254 = vmatprep.subr.bf16.mxu0 0
    %255 = vmatpush1.bf16.msra.mxu0 0
    %256 = vmatprep.subr.bf16.mxu0 0
    %257 = vmatpush1.bf16.msra.mxu0 0
    %258 = vmatprep.subr.bf16.mxu0 0
    %259 = vmatpush1.bf16.msra.mxu0 0
    %260 = vmatprep.subr.bf16.mxu0 0
    %261 = vmatpush1.bf16.msra.mxu0 0
    %262 = vmatprep.subr.bf16.mxu0 0
    %263 = vmatpush1.bf16.msra.mxu0 0
    %264 = vmatprep.subr.bf16.mxu0 0
    %265 = vmatpush1.bf16.msra.mxu0 0
    %266 = vmatprep.subr.bf16.mxu0 0
    %267 = vmatpush1.bf16.msra.mxu0 0
    %268 = vmatprep.mubr.bf16.mxu0 0
    %269 = vmatmul.mubr.bf16.gmra.mrb[0].mxu0 %v197
    %v270 = vpop.f32.mrb[0].mxu0
    %v271 = vadd.f32 0.0, %v270
    %v272 = vpop.f32.mrb[0].mxu0
    %v273 = vadd.f32 0.0, %v272
    %v274 = vpop.f32.mrb[0].mxu0
    %v275 = vadd.f32 0.0, %v274
    %v276 = vpop.f32.mrb[0].mxu0
    %v277 = vadd.f32 0.0, %v276
    %278 = vmatprep.mubr.bf16.mxu0 0
    %279 = vmatmul.mubr.bf16.gmra.mrb[0].mxu0 %v200
    %v280 = vpop.f32.mrb[0].mxu0
    %v281 = vadd.f32 0.0, %v280
    %v282 = vpop.f32.mrb[0].mxu0
    %v283 = vadd.f32 0.0, %v282
    %v284 = vpop.f32.mrb[0].mxu0
    %v285 = vadd.f32 0.0, %v284
    %v286 = vpop.f32.mrb[0].mxu0
    %v287 = vadd.f32 0.0, %v286
    %288 = vmatprep.mubr.bf16.mxu0 0
    %289 = vmatmul.mubr.bf16.gmra.mrb[0].mxu0 %v203
    %v290 = vpop.f32.mrb[0].mxu0
    %v291 = vadd.f32 0.0, %v290
    %v292 = vpop.f32.mrb[0].mxu0
    %v293 = vadd.f32 0.0, %v292
    %v294 = vpop.f32.mrb[0].mxu0
    %v295 = vadd.f32 0.0, %v294
    %v296 = vpop.f32.mrb[0].mxu0
    %v297 = vadd.f32 0.0, %v296
    %298 = vmatprep.mubr.bf16.mxu0 0
    %299 = vmatmul.mubr.bf16.gmra.mrb[0].mxu0 %v206
    %v300 = vpop.f32.mrb[0].mxu0
    %v301 = vadd.f32 0.0, %v300
    %v302 = vpop.f32.mrb[0].mxu0
    %v303 = vadd.f32 0.0, %v302
    %v304 = vpop.f32.mrb[0].mxu0
    %v305 = vadd.f32 0.0, %v304
    %v306 = vpop.f32.mrb[0].mxu0
    %v307 = vadd.f32 0.0, %v306
    %308 = vmatprep.mubr.bf16.mxu0 0
    %309 = vmatmul.mubr.bf16.gmra.mrb[0].mxu0 %v209
    %v310 = vpop.f32.mrb[0].mxu0
    %v311 = vadd.f32 0.0, %v310
    %v312 = vpop.f32.mrb[0].mxu0
    %v313 = vadd.f32 0.0, %v312
    %v314 = vpop.f32.mrb[0].mxu0
    %v315 = vadd.f32 0.0, %v314
    %v316 = vpop.f32.mrb[0].mxu0
    %v317 = vadd.f32 0.0, %v316
    %318 = vmatprep.mubr.bf16.mxu0 0
    %319 = vmatmul.mubr.bf16.gmra.mrb[0].mxu0 %v212
    %v320 = vpop.f32.mrb[0].mxu0
    %v321 = vadd.f32 0.0, %v320
    %v322 = vpop.f32.mrb[0].mxu0
    %v323 = vadd.f32 0.0, %v322
    %v324 = vpop.f32.mrb[0].mxu0
    %v325 = vadd.f32 0.0, %v324
    %v326 = vpop.f32.mrb[0].mxu0
    %v327 = vadd.f32 0.0, %v326
    %328 = vmatprep.mubr.bf16.mxu0 0
    %329 = vmatmul.mubr.bf16.gmra.mrb[0].mxu0 %v215
    %v330 = vpop.f32.mrb[0].mxu0
    %v331 = vadd.f32 0.0, %v330
    %v332 = vpop.f32.mrb[0].mxu0
    %v333 = vadd.f32 0.0, %v332
    %v334 = vpop.f32.mrb[0].mxu0
    %v335 = vadd.f32 0.0, %v334
    %v336 = vpop.f32.mrb[0].mxu0
    %v337 = vadd.f32 0.0, %v336
    %338 = vmatprep.mubr.bf16.mxu0 0
    %339 = vmatmul.mubr.bf16.gmra.mrb[0].mxu0 %v218
    %v340 = vpop.f32.mrb[0].mxu0
    %v341 = vadd.f32 0.0, %v340
    %v342 = vpop.f32.mrb[0].mxu0
    %v343 = vadd.f32 0.0, %v342
    %v344 = vpop.f32.mrb[0].mxu0
    %v345 = vadd.f32 0.0, %v344
    %v346 = vpop.f32.mrb[0].mxu0
    %v347 = vadd.f32 0.0, %v346
    %348 = vmatprep.mubr.bf16.mxu0 0
    %349 = vmatmul.mubr.bf16.gmra.mrb[0].mxu0 %v221
    %v350 = vpop.f32.mrb[0].mxu0
    %v351 = vadd.f32 0.0, %v350
    %v352 = vpop.f32.mrb[0].mxu0
    %v353 = vadd.f32 0.0, %v352
    %v354 = vpop.f32.mrb[0].mxu0
    %v355 = vadd.f32 0.0, %v354
    %v356 = vpop.f32.mrb[0].mxu0
    %v357 = vadd.f32 0.0, %v356
    %358 = vdwg.mxu0
    %359 = vmatprep.subr.bf16.mxu0 %v234
    %360 = vmatpush1.bf16.msra.mxu0 %v231
    %361 = vmatprep.subr.bf16.mxu0 0
    %362 = vmatpush1.bf16.msra.mxu0 0
    %363 = vmatprep.subr.bf16.mxu0 0
    %364 = vmatpush1.bf16.msra.mxu0 0
    %365 = vmatprep.subr.bf16.mxu0 0
    %366 = vmatpush1.bf16.msra.mxu0 0
    %367 = vmatprep.subr.bf16.mxu0 0
    %368 = vmatpush1.bf16.msra.mxu0 0
    %369 = vmatprep.subr.bf16.mxu0 0
    %370 = vmatpush1.bf16.msra.mxu0 0
    %371 = vmatprep.subr.bf16.mxu0 0
    %372 = vmatpush1.bf16.msra.mxu0 0
    %373 = vmatprep.subr.bf16.mxu0 0
    %374 = vmatpush1.bf16.msra.mxu0 0
    %375 = vmatprep.subr.bf16.mxu0 0
    %376 = vmatpush1.bf16.msra.mxu0 0
    %377 = vmatprep.subr.bf16.mxu0 0
    %378 = vmatpush1.bf16.msra.mxu0 0
    %379 = vmatprep.subr.bf16.mxu0 0
    %380 = vmatpush1.bf16.msra.mxu0 0
    %381 = vmatprep.subr.bf16.mxu0 0
    %382 = vmatpush1.bf16.msra.mxu0 0
    %383 = vmatprep.subr.bf16.mxu0 0
    %384 = vmatpush1.bf16.msra.mxu0 0
    %385 = vmatprep.subr.bf16.mxu0 0
    %386 = vmatpush1.bf16.msra.mxu0 0
    %387 = vmatprep.subr.bf16.mxu0 0
    %388 = vmatpush1.bf16.msra.mxu0 0
    %389 = vmatprep.subr.bf16.mxu0 0
    %390 = vmatpush1.bf16.msra.mxu0 0
    %391 = vmatprep.mubr.bf16.mxu0 0
    %392 = vmatmul.mubr.bf16.gmra.mrb[0].mxu0 %v197
    %v393 = vpop.f32.mrb[0].mxu0
    %v394 = vadd.f32 0.0, %v393
    %v395 = vpop.f32.mrb[0].mxu0
    %v396 = vadd.f32 0.0, %v395
    %v397 = vpop.f32.mrb[0].mxu0
    %v398 = vadd.f32 0.0, %v397
    %v399 = vpop.f32.mrb[0].mxu0
    %v400 = vadd.f32 0.0, %v399
    %401 = vmatprep.mubr.bf16.mxu0 0
    %402 = vmatmul.mubr.bf16.gmra.mrb[0].mxu0 %v200
    %v403 = vpop.f32.mrb[0].mxu0
    %v404 = vadd.f32 0.0, %v403
    %v405 = vpop.f32.mrb[0].mxu0
    %v406 = vadd.f32 0.0, %v405
    %v407 = vpop.f32.mrb[0].mxu0
    %v408 = vadd.f32 0.0, %v407
    %v409 = vpop.f32.mrb[0].mxu0
    %v410 = vadd.f32 0.0, %v409
    %411 = vmatprep.mubr.bf16.mxu0 0
    %412 = vmatmul.mubr.bf16.gmra.mrb[0].mxu0 %v203
    %v413 = vpop.f32.mrb[0].mxu0
    %v414 = vadd.f32 0.0, %v413
    %v415 = vpop.f32.mrb[0].mxu0
    %v416 = vadd.f32 0.0, %v415
    %v417 = vpop.f32.mrb[0].mxu0
    %v418 = vadd.f32 0.0, %v417
    %v419 = vpop.f32.mrb[0].mxu0
    %v420 = vadd.f32 0.0, %v419
    %421 = vmatprep.mubr.bf16.mxu0 0
    %422 = vmatmul.mubr.bf16.gmra.mrb[0].mxu0 %v206
    %v423 = vpop.f32.mrb[0].mxu0
    %v424 = vadd.f32 0.0, %v423
    %v425 = vpop.f32.mrb[0].mxu0
    %v426 = vadd.f32 0.0, %v425
    %v427 = vpop.f32.mrb[0].mxu0
    %v428 = vadd.f32 0.0, %v427
    %v429 = vpop.f32.mrb[0].mxu0
    %v430 = vadd.f32 0.0, %v429
    %431 = vmatprep.mubr.bf16.mxu0 0
    %432 = vmatmul.mubr.bf16.gmra.mrb[0].mxu0 %v209
    %v433 = vpop.f32.mrb[0].mxu0
    %v434 = vadd.f32 0.0, %v433
    %v435 = vpop.f32.mrb[0].mxu0
    %v436 = vadd.f32 0.0, %v435
    %v437 = vpop.f32.mrb[0].mxu0
    %v438 = vadd.f32 0.0, %v437
    %v439 = vpop.f32.mrb[0].mxu0
    %v440 = vadd.f32 0.0, %v439
    %441 = vmatprep.mubr.bf16.mxu0 0
    %442 = vmatmul.mubr.bf16.gmra.mrb[0].mxu0 %v212
    %v443 = vpop.f32.mrb[0].mxu0
    %v444 = vadd.f32 0.0, %v443
    %v445 = vpop.f32.mrb[0].mxu0
    %v446 = vadd.f32 0.0, %v445
    %v447 = vpop.f32.mrb[0].mxu0
    %v448 = vadd.f32 0.0, %v447
    %v449 = vpop.f32.mrb[0].mxu0
    %v450 = vadd.f32 0.0, %v449
    %451 = vmatprep.mubr.bf16.mxu0 0
    %452 = vmatmul.mubr.bf16.gmra.mrb[0].mxu0 %v215
    %v453 = vpop.f32.mrb[0].mxu0
    %v454 = vadd.f32 0.0, %v453
    %v455 = vpop.f32.mrb[0].mxu0
    %v456 = vadd.f32 0.0, %v455
    %v457 = vpop.f32.mrb[0].mxu0
    %v458 = vadd.f32 0.0, %v457
    %v459 = vpop.f32.mrb[0].mxu0
    %v460 = vadd.f32 0.0, %v459
    %461 = vmatprep.mubr.bf16.mxu0 0
    %462 = vmatmul.mubr.bf16.gmra.mrb[0].mxu0 %v218
    %v463 = vpop.f32.mrb[0].mxu0
    %v464 = vadd.f32 0.0, %v463
    %v465 = vpop.f32.mrb[0].mxu0
    %v466 = vadd.f32 0.0, %v465
    %v467 = vpop.f32.mrb[0].mxu0
    %v468 = vadd.f32 0.0, %v467
    %v469 = vpop.f32.mrb[0].mxu0
    %v470 = vadd.f32 0.0, %v469
    %471 = vmatprep.mubr.bf16.mxu0 0
    %472 = vmatmul.mubr.bf16.gmra.mrb[0].mxu0 %v221
    %v473 = vpop.f32.mrb[0].mxu0
    %v474 = vadd.f32 0.0, %v473
    %v475 = vpop.f32.mrb[0].mxu0
    %v476 = vadd.f32 0.0, %v475
    %v477 = vpop.f32.mrb[0].mxu0
    %v478 = vadd.f32 0.0, %v477
    %v479 = vpop.f32.mrb[0].mxu0
    %v480 = vadd.f32 0.0, %v479
    %481 = vdwg.mxu0
    %v484 = vunpack.c.l.b16 %v155
    %v485 = vunpack.c.h.b16 %v155
    %v486 = vunpack.c.l.b16 %v156
    %v487 = vunpack.c.h.b16 %v156
    %v488 = vpack.c.b16 %v484, %v484
    %v489 = vpack.c.b16 %v485, %v485
    %v490 = vpack.c.b16 %v486, %v486
    %v491 = vpack.c.b16 %v487, %v487
    %v493 = vsel %vm82, %v146, 0
    %v496 = vsel %vm82, %v147, 0
    %v499 = vsel %vm82, %v148, 0
    %v502 = vsel %vm82, %v149, 0
    %v505 = vsel %vm82, %v150, 0
    %v508 = vsel %vm82, %v151, 0
    %v511 = vsel %vm82, %v152, 0
    %v514 = vsel %vm82, %v153, 0
    %v517 = vsel %vm82, %v154, 0
    %v520 = vsel %vm223, %v488, 0
    %v523 = vsel %vm223, %v489, 0
    %v526 = vsel %vm223, %v490, 0
    %v529 = vsel %vm223, %v491, 0
    %531 = vmatprep.subr.bf16.mxu0 %v523
    %532 = vmatpush1.bf16.msra.mxu0 %v520
    %533 = vmatprep.subr.bf16.mxu0 0
    %534 = vmatpush1.bf16.msra.mxu0 0
    %535 = vmatprep.subr.bf16.mxu0 0
    %536 = vmatpush1.bf16.msra.mxu0 0
    %537 = vmatprep.subr.bf16.mxu0 0
    %538 = vmatpush1.bf16.msra.mxu0 0
    %539 = vmatprep.subr.bf16.mxu0 0
    %540 = vmatpush1.bf16.msra.mxu0 0
    %541 = vmatprep.subr.bf16.mxu0 0
    %542 = vmatpush1.bf16.msra.mxu0 0
    %543 = vmatprep.subr.bf16.mxu0 0
    %544 = vmatpush1.bf16.msra.mxu0 0
    %545 = vmatprep.subr.bf16.mxu0 0
    %546 = vmatpush1.bf16.msra.mxu0 0
    %547 = vmatprep.subr.bf16.mxu0 0
    %548 = vmatpush1.bf16.msra.mxu0 0
    %549 = vmatprep.subr.bf16.mxu0 0
    %550 = vmatpush1.bf16.msra.mxu0 0
    %551 = vmatprep.subr.bf16.mxu0 0
    %552 = vmatpush1.bf16.msra.mxu0 0
    %553 = vmatprep.subr.bf16.mxu0 0
    %554 = vmatpush1.bf16.msra.mxu0 0
    %555 = vmatprep.subr.bf16.mxu0 0
    %556 = vmatpush1.bf16.msra.mxu0 0
    %557 = vmatprep.subr.bf16.mxu0 0
    %558 = vmatpush1.bf16.msra.mxu0 0
    %559 = vmatprep.subr.bf16.mxu0 0
    %560 = vmatpush1.bf16.msra.mxu0 0
    %561 = vmatprep.subr.bf16.mxu0 0
    %562 = vmatpush1.bf16.msra.mxu0 0
    %563 = vmatprep.mubr.bf16.mxu0 0
    %564 = vmatmul.mubr.bf16.gmra.mrb[0].mxu0 %v493
    %v565 = vpop.f32.mrb[0].mxu0
    %v566 = vadd.f32 %v271, %v565
    %v567 = vpop.f32.mrb[0].mxu0
    %v568 = vadd.f32 %v273, %v567
    %v569 = vpop.f32.mrb[0].mxu0
    %v570 = vadd.f32 %v275, %v569
    %v571 = vpop.f32.mrb[0].mxu0
    %v572 = vadd.f32 %v277, %v571
    %573 = vmatprep.mubr.bf16.mxu0 0
    %574 = vmatmul.mubr.bf16.gmra.mrb[0].mxu0 %v496
    %v575 = vpop.f32.mrb[0].mxu0
    %v576 = vadd.f32 %v281, %v575
    %v577 = vpop.f32.mrb[0].mxu0
    %v578 = vadd.f32 %v283, %v577
    %v579 = vpop.f32.mrb[0].mxu0
    %v580 = vadd.f32 %v285, %v579
    %v581 = vpop.f32.mrb[0].mxu0
    %v582 = vadd.f32 %v287, %v581
    %583 = vmatprep.mubr.bf16.mxu0 0
    %584 = vmatmul.mubr.bf16.gmra.mrb[0].mxu0 %v499
    %v585 = vpop.f32.mrb[0].mxu0
    %v586 = vadd.f32 %v291, %v585
    %v587 = vpop.f32.mrb[0].mxu0
    %v588 = vadd.f32 %v293, %v587
    %v589 = vpop.f32.mrb[0].mxu0
    %v590 = vadd.f32 %v295, %v589
    %v591 = vpop.f32.mrb[0].mxu0
    %v592 = vadd.f32 %v297, %v591
    %593 = vmatprep.mubr.bf16.mxu0 0
    %594 = vmatmul.mubr.bf16.gmra.mrb[0].mxu0 %v502
    %v595 = vpop.f32.mrb[0].mxu0
    %v596 = vadd.f32 %v301, %v595
    %v597 = vpop.f32.mrb[0].mxu0
    %v598 = vadd.f32 %v303, %v597
    %v599 = vpop.f32.mrb[0].mxu0
    %v600 = vadd.f32 %v305, %v599
    %v601 = vpop.f32.mrb[0].mxu0
    %v602 = vadd.f32 %v307, %v601
    %603 = vmatprep.mubr.bf16.mxu0 0
    %604 = vmatmul.mubr.bf16.gmra.mrb[0].mxu0 %v505
    %v605 = vpop.f32.mrb[0].mxu0
    %v606 = vadd.f32 %v311, %v605
    %v607 = vpop.f32.mrb[0].mxu0
    %v608 = vadd.f32 %v313, %v607
    %v609 = vpop.f32.mrb[0].mxu0
    %v610 = vadd.f32 %v315, %v609
    %v611 = vpop.f32.mrb[0].mxu0
    %v612 = vadd.f32 %v317, %v611
    %613 = vmatprep.mubr.bf16.mxu0 0
    %614 = vmatmul.mubr.bf16.gmra.mrb[0].mxu0 %v508
    %v615 = vpop.f32.mrb[0].mxu0
    %v616 = vadd.f32 %v321, %v615
    %v617 = vpop.f32.mrb[0].mxu0
    %v618 = vadd.f32 %v323, %v617
    %v619 = vpop.f32.mrb[0].mxu0
    %v620 = vadd.f32 %v325, %v619
    %v621 = vpop.f32.mrb[0].mxu0
    %v622 = vadd.f32 %v327, %v621
    %623 = vmatprep.mubr.bf16.mxu0 0
    %624 = vmatmul.mubr.bf16.gmra.mrb[0].mxu0 %v511
    %v625 = vpop.f32.mrb[0].mxu0
    %v626 = vadd.f32 %v331, %v625
    %v627 = vpop.f32.mrb[0].mxu0
    %v628 = vadd.f32 %v333, %v627
    %v629 = vpop.f32.mrb[0].mxu0
    %v630 = vadd.f32 %v335, %v629
    %v631 = vpop.f32.mrb[0].mxu0
    %v632 = vadd.f32 %v337, %v631
    %633 = vmatprep.mubr.bf16.mxu0 0
    %634 = vmatmul.mubr.bf16.gmra.mrb[0].mxu0 %v514
    %v635 = vpop.f32.mrb[0].mxu0
    %v636 = vadd.f32 %v341, %v635
    %v637 = vpop.f32.mrb[0].mxu0
    %v638 = vadd.f32 %v343, %v637
    %v639 = vpop.f32.mrb[0].mxu0
    %v640 = vadd.f32 %v345, %v639
    %v641 = vpop.f32.mrb[0].mxu0
    %v642 = vadd.f32 %v347, %v641
    %643 = vmatprep.mubr.bf16.mxu0 0
    %644 = vmatmul.mubr.bf16.gmra.mrb[0].mxu0 %v517
    %v645 = vpop.f32.mrb[0].mxu0
    %v646 = vadd.f32 %v351, %v645
    %v647 = vpop.f32.mrb[0].mxu0
    %v648 = vadd.f32 %v353, %v647
    %v649 = vpop.f32.mrb[0].mxu0
    %v650 = vadd.f32 %v355, %v649
    %v651 = vpop.f32.mrb[0].mxu0
    %v652 = vadd.f32 %v357, %v651
    %653 = vdwg.mxu0
    %654 = vmatprep.subr.bf16.mxu0 %v529
    %655 = vmatpush1.bf16.msra.mxu0 %v526
    %656 = vmatprep.subr.bf16.mxu0 0
    %657 = vmatpush1.bf16.msra.mxu0 0
    %658 = vmatprep.subr.bf16.mxu0 0
    %659 = vmatpush1.bf16.msra.mxu0 0
    %660 = vmatprep.subr.bf16.mxu0 0
    %661 = vmatpush1.bf16.msra.mxu0 0
    %662 = vmatprep.subr.bf16.mxu0 0
    %663 = vmatpush1.bf16.msra.mxu0 0
    %664 = vmatprep.subr.bf16.mxu0 0
    %665 = vmatpush1.bf16.msra.mxu0 0
    %666 = vmatprep.subr.bf16.mxu0 0
    %667 = vmatpush1.bf16.msra.mxu0 0
    %668 = vmatprep.subr.bf16.mxu0 0
    %669 = vmatpush1.bf16.msra.mxu0 0
    %670 = vmatprep.subr.bf16.mxu0 0
    %671 = vmatpush1.bf16.msra.mxu0 0
    %672 = vmatprep.subr.bf16.mxu0 0
    %673 = vmatpush1.bf16.msra.mxu0 0
    %674 = vmatprep.subr.bf16.mxu0 0
    %675 = vmatpush1.bf16.msra.mxu0 0
    %676 = vmatprep.subr.bf16.mxu0 0
    %677 = vmatpush1.bf16.msra.mxu0 0
    %678 = vmatprep.subr.bf16.mxu0 0
    %679 = vmatpush1.bf16.msra.mxu0 0
    %680 = vmatprep.subr.bf16.mxu0 0
    %681 = vmatpush1.bf16.msra.mxu0 0
    %682 = vmatprep.subr.bf16.mxu0 0
    %683 = vmatpush1.bf16.msra.mxu0 0
    %684 = vmatprep.subr.bf16.mxu0 0
    %685 = vmatpush1.bf16.msra.mxu0 0
    %686 = vmatprep.mubr.bf16.mxu0 0
    %687 = vmatmul.mubr.bf16.gmra.mrb[0].mxu0 %v493
    %v688 = vpop.f32.mrb[0].mxu0
    %v689 = vadd.f32 %v394, %v688
    %v690 = vpop.f32.mrb[0].mxu0
    %v691 = vadd.f32 %v396, %v690
    %v692 = vpop.f32.mrb[0].mxu0
    %v693 = vadd.f32 %v398, %v692
    %v694 = vpop.f32.mrb[0].mxu0
    %v695 = vadd.f32 %v400, %v694
    %696 = vmatprep.mubr.bf16.mxu0 0
    %697 = vmatmul.mubr.bf16.gmra.mrb[0].mxu0 %v496
    %v698 = vpop.f32.mrb[0].mxu0
    %v699 = vadd.f32 %v404, %v698
    %v700 = vpop.f32.mrb[0].mxu0
    %v701 = vadd.f32 %v406, %v700
    %v702 = vpop.f32.mrb[0].mxu0
    %v703 = vadd.f32 %v408, %v702
    %v704 = vpop.f32.mrb[0].mxu0
    %v705 = vadd.f32 %v410, %v704
    %706 = vmatprep.mubr.bf16.mxu0 0
    %707 = vmatmul.mubr.bf16.gmra.mrb[0].mxu0 %v499
    %v708 = vpop.f32.mrb[0].mxu0
    %v709 = vadd.f32 %v414, %v708
    %v710 = vpop.f32.mrb[0].mxu0
    %v711 = vadd.f32 %v416, %v710
    %v712 = vpop.f32.mrb[0].mxu0
    %v713 = vadd.f32 %v418, %v712
    %v714 = vpop.f32.mrb[0].mxu0
    %v715 = vadd.f32 %v420, %v714
    %716 = vmatprep.mubr.bf16.mxu0 0
    %717 = vmatmul.mubr.bf16.gmra.mrb[0].mxu0 %v502
    %v718 = vpop.f32.mrb[0].mxu0
    %v719 = vadd.f32 %v424, %v718
    %v720 = vpop.f32.mrb[0].mxu0
    %v721 = vadd.f32 %v426, %v720
    %v722 = vpop.f32.mrb[0].mxu0
    %v723 = vadd.f32 %v428, %v722
    %v724 = vpop.f32.mrb[0].mxu0
    %v725 = vadd.f32 %v430, %v724
    %726 = vmatprep.mubr.bf16.mxu0 0
    %727 = vmatmul.mubr.bf16.gmra.mrb[0].mxu0 %v505
    %v728 = vpop.f32.mrb[0].mxu0
    %v729 = vadd.f32 %v434, %v728
    %v730 = vpop.f32.mrb[0].mxu0
    %v731 = vadd.f32 %v436, %v730
    %v732 = vpop.f32.mrb[0].mxu0
    %v733 = vadd.f32 %v438, %v732
    %v734 = vpop.f32.mrb[0].mxu0
    %v735 = vadd.f32 %v440, %v734
    %736 = vmatprep.mubr.bf16.mxu0 0
    %737 = vmatmul.mubr.bf16.gmra.mrb[0].mxu0 %v508
    %v738 = vpop.f32.mrb[0].mxu0
    %v739 = vadd.f32 %v444, %v738
    %v740 = vpop.f32.mrb[0].mxu0
    %v741 = vadd.f32 %v446, %v740
    %v742 = vpop.f32.mrb[0].mxu0
    %v743 = vadd.f32 %v448, %v742
    %v744 = vpop.f32.mrb[0].mxu0
    %v745 = vadd.f32 %v450, %v744
    %746 = vmatprep.mubr.bf16.mxu0 0
    %747 = vmatmul.mubr.bf16.gmra.mrb[0].mxu0 %v511
    %v748 = vpop.f32.mrb[0].mxu0
    %v749 = vadd.f32 %v454, %v748
    %v750 = vpop.f32.mrb[0].mxu0
    %v751 = vadd.f32 %v456, %v750
    %v752 = vpop.f32.mrb[0].mxu0
    %v753 = vadd.f32 %v458, %v752
    %v754 = vpop.f32.mrb[0].mxu0
    %v755 = vadd.f32 %v460, %v754
    %756 = vmatprep.mubr.bf16.mxu0 0
    %757 = vmatmul.mubr.bf16.gmra.mrb[0].mxu0 %v514
    %v758 = vpop.f32.mrb[0].mxu0
    %v759 = vadd.f32 %v464, %v758
    %v760 = vpop.f32.mrb[0].mxu0
    %v761 = vadd.f32 %v466, %v760
    %v762 = vpop.f32.mrb[0].mxu0
    %v763 = vadd.f32 %v468, %v762
    %v764 = vpop.f32.mrb[0].mxu0
    %v765 = vadd.f32 %v470, %v764
    %766 = vmatprep.mubr.bf16.mxu0 0
    %767 = vmatmul.mubr.bf16.gmra.mrb[0].mxu0 %v517
    %v768 = vpop.f32.mrb[0].mxu0
    %v769 = vadd.f32 %v474, %v768
    %v770 = vpop.f32.mrb[0].mxu0
    %v771 = vadd.f32 %v476, %v770
    %v772 = vpop.f32.mrb[0].mxu0
    %v773 = vadd.f32 %v478, %v772
    %v774 = vpop.f32.mrb[0].mxu0
    %v775 = vadd.f32 %v480, %v774
    %776 = vdwg.mxu0
    %v777 = vld [vmem:[#allocation2 + $0x2] sm:$0xff]
    %v778 = vld [vmem:[#allocation2 + $0xa] sm:$0xff]
    %v779 = vld [vmem:[#allocation2 + $0x12] sm:$0xff]
    %v780 = vld [vmem:[#allocation2 + $0x1a] sm:$0xff]
    %v781 = vld [vmem:[#allocation2 + $0x22] sm:$0xff]
    %v782 = vld [vmem:[#allocation2 + $0x2a] sm:$0xff]
    %v783 = vld [vmem:[#allocation2 + $0x32] sm:$0xff]
    %v784 = vld [vmem:[#allocation2 + $0x3a] sm:$0xff]
    %v785 = vld [vmem:[#allocation2 + $0x42] sm:$0xff]
    %v786 = vld [vmem:[#allocation2 + $0x4a] sm:$0xff]
    %v787 = vld [vmem:[#allocation2 + $0x52] sm:$0xff]
    %v788 = vld [vmem:[#allocation2 + $0x5a] sm:$0xff]
    %v789 = vld [vmem:[#allocation2 + $0x62] sm:$0xff]
    %v790 = vld [vmem:[#allocation2 + $0x6a] sm:$0xff]
    %v791 = vld [vmem:[#allocation2 + $0x72] sm:$0xff]
    %v792 = vld [vmem:[#allocation2 + $0x7a] sm:$0xff]
    %v793 = vld [vmem:[#allocation2 + $0x82] sm:$0xff]
    %v794 = vld [vmem:[#allocation2 + $0x8a] sm:$0xff]
    %v795 = vpack.c.bf16 %v778, %v777
    %v796 = vpack.c.bf16 %v780, %v779
    %v797 = vpack.c.bf16 %v782, %v781
    %v798 = vpack.c.bf16 %v784, %v783
    %v799 = vpack.c.bf16 %v786, %v785
    %v800 = vpack.c.bf16 %v788, %v787
    %v801 = vpack.c.bf16 %v790, %v789
    %v802 = vpack.c.bf16 %v792, %v791
    %v803 = vpack.c.bf16 %v794, %v793
    %v804 = vld [vmem:[%s2 + $0x20] sm:$0xff]
    %v805 = vld [vmem:[%s2 + $0x28] sm:$0xff]
    %v808 = vunpack.c.l.b16 %v804
    %v809 = vunpack.c.h.b16 %v804
    %v810 = vunpack.c.l.b16 %v805
    %v811 = vunpack.c.h.b16 %v805
    %v812 = vpack.c.b16 %v808, %v808
    %v813 = vpack.c.b16 %v809, %v809
    %v814 = vpack.c.b16 %v810, %v810
    %v815 = vpack.c.b16 %v811, %v811
    %v817 = vsel %vm82, %v795, 0
    %v820 = vsel %vm82, %v796, 0
    %v823 = vsel %vm82, %v797, 0
    %v826 = vsel %vm82, %v798, 0
    %v829 = vsel %vm82, %v799, 0
    %v832 = vsel %vm82, %v800, 0
    %v835 = vsel %vm82, %v801, 0
    %v838 = vsel %vm82, %v802, 0
    %v841 = vsel %vm82, %v803, 0
    %v844 = vsel %vm223, %v812, 0
    %v847 = vsel %vm223, %v813, 0
    %v850 = vsel %vm223, %v814, 0
    %v853 = vsel %vm223, %v815, 0
    %855 = vmatprep.subr.bf16.mxu0 %v847
    %856 = vmatpush1.bf16.msra.mxu0 %v844
    %857 = vmatprep.subr.bf16.mxu0 0
    %858 = vmatpush1.bf16.msra.mxu0 0
    %859 = vmatprep.subr.bf16.mxu0 0
    %860 = vmatpush1.bf16.msra.mxu0 0
    %861 = vmatprep.subr.bf16.mxu0 0
    %862 = vmatpush1.bf16.msra.mxu0 0
    %863 = vmatprep.subr.bf16.mxu0 0
    %864 = vmatpush1.bf16.msra.mxu0 0
    %865 = vmatprep.subr.bf16.mxu0 0
    %866 = vmatpush1.bf16.msra.mxu0 0
    %867 = vmatprep.subr.bf16.mxu0 0
    %868 = vmatpush1.bf16.msra.mxu0 0
    %869 = vmatprep.subr.bf16.mxu0 0
    %870 = vmatpush1.bf16.msra.mxu0 0
    %871 = vmatprep.subr.bf16.mxu0 0
    %872 = vmatpush1.bf16.msra.mxu0 0
    %873 = vmatprep.subr.bf16.mxu0 0
    %874 = vmatpush1.bf16.msra.mxu0 0
    %875 = vmatprep.subr.bf16.mxu0 0
    %876 = vmatpush1.bf16.msra.mxu0 0
    %877 = vmatprep.subr.bf16.mxu0 0
    %878 = vmatpush1.bf16.msra.mxu0 0
    %879 = vmatprep.subr.bf16.mxu0 0
    %880 = vmatpush1.bf16.msra.mxu0 0
    %881 = vmatprep.subr.bf16.mxu0 0
    %882 = vmatpush1.bf16.msra.mxu0 0
    %883 = vmatprep.subr.bf16.mxu0 0
    %884 = vmatpush1.bf16.msra.mxu0 0
    %885 = vmatprep.subr.bf16.mxu0 0
    %886 = vmatpush1.bf16.msra.mxu0 0
    %887 = vmatprep.mubr.bf16.mxu0 0
    %888 = vmatmul.mubr.bf16.gmra.mrb[0].mxu0 %v817
    %v889 = vpop.f32.mrb[0].mxu0
    %v890 = vadd.f32 0.0, %v889
    %v891 = vpop.f32.mrb[0].mxu0
    %v892 = vadd.f32 0.0, %v891
    %v893 = vpop.f32.mrb[0].mxu0
    %v894 = vadd.f32 0.0, %v893
    %v895 = vpop.f32.mrb[0].mxu0
    %v896 = vadd.f32 0.0, %v895
    %897 = vmatprep.mubr.bf16.mxu0 0
    %898 = vmatmul.mubr.bf16.gmra.mrb[0].mxu0 %v820
    %v899 = vpop.f32.mrb[0].mxu0
    %v900 = vadd.f32 0.0, %v899
    %v901 = vpop.f32.mrb[0].mxu0
    %v902 = vadd.f32 0.0, %v901
    %v903 = vpop.f32.mrb[0].mxu0
    %v904 = vadd.f32 0.0, %v903
    %v905 = vpop.f32.mrb[0].mxu0
    %v906 = vadd.f32 0.0, %v905
    %907 = vmatprep.mubr.bf16.mxu0 0
    %908 = vmatmul.mubr.bf16.gmra.mrb[0].mxu0 %v823
    %v909 = vpop.f32.mrb[0].mxu0
    %v910 = vadd.f32 0.0, %v909
    %v911 = vpop.f32.mrb[0].mxu0
    %v912 = vadd.f32 0.0, %v911
    %v913 = vpop.f32.mrb[0].mxu0
    %v914 = vadd.f32 0.0, %v913
    %v915 = vpop.f32.mrb[0].mxu0
    %v916 = vadd.f32 0.0, %v915
    %917 = vmatprep.mubr.bf16.mxu0 0
    %918 = vmatmul.mubr.bf16.gmra.mrb[0].mxu0 %v826
    %v919 = vpop.f32.mrb[0].mxu0
    %v920 = vadd.f32 0.0, %v919
    %v921 = vpop.f32.mrb[0].mxu0
    %v922 = vadd.f32 0.0, %v921
    %v923 = vpop.f32.mrb[0].mxu0
    %v924 = vadd.f32 0.0, %v923
    %v925 = vpop.f32.mrb[0].mxu0
    %v926 = vadd.f32 0.0, %v925
    %927 = vmatprep.mubr.bf16.mxu0 0
    %928 = vmatmul.mubr.bf16.gmra.mrb[0].mxu0 %v829
    %v929 = vpop.f32.mrb[0].mxu0
    %v930 = vadd.f32 0.0, %v929
    %v931 = vpop.f32.mrb[0].mxu0
    %v932 = vadd.f32 0.0, %v931
    %v933 = vpop.f32.mrb[0].mxu0
    %v934 = vadd.f32 0.0, %v933
    %v935 = vpop.f32.mrb[0].mxu0
    %v936 = vadd.f32 0.0, %v935
    %937 = vmatprep.mubr.bf16.mxu0 0
    %938 = vmatmul.mubr.bf16.gmra.mrb[0].mxu0 %v832
    %v939 = vpop.f32.mrb[0].mxu0
    %v940 = vadd.f32 0.0, %v939
    %v941 = vpop.f32.mrb[0].mxu0
    %v942 = vadd.f32 0.0, %v941
    %v943 = vpop.f32.mrb[0].mxu0
    %v944 = vadd.f32 0.0, %v943
    %v945 = vpop.f32.mrb[0].mxu0
    %v946 = vadd.f32 0.0, %v945
    %947 = vmatprep.mubr.bf16.mxu0 0
    %948 = vmatmul.mubr.bf16.gmra.mrb[0].mxu0 %v835
    %v949 = vpop.f32.mrb[0].mxu0
    %v950 = vadd.f32 0.0, %v949
    %v951 = vpop.f32.mrb[0].mxu0
    %v952 = vadd.f32 0.0, %v951
    %v953 = vpop.f32.mrb[0].mxu0
    %v954 = vadd.f32 0.0, %v953
    %v955 = vpop.f32.mrb[0].mxu0
    %v956 = vadd.f32 0.0, %v955
    %957 = vmatprep.mubr.bf16.mxu0 0
    %958 = vmatmul.mubr.bf16.gmra.mrb[0].mxu0 %v838
    %v959 = vpop.f32.mrb[0].mxu0
    %v960 = vadd.f32 0.0, %v959
    %v961 = vpop.f32.mrb[0].mxu0
    %v962 = vadd.f32 0.0, %v961
    %v963 = vpop.f32.mrb[0].mxu0
    %v964 = vadd.f32 0.0, %v963
    %v965 = vpop.f32.mrb[0].mxu0
    %v966 = vadd.f32 0.0, %v965
    %967 = vmatprep.mubr.bf16.mxu0 0
    %968 = vmatmul.mubr.bf16.gmra.mrb[0].mxu0 %v841
    %v969 = vpop.f32.mrb[0].mxu0
    %v970 = vadd.f32 0.0, %v969
    %v971 = vpop.f32.mrb[0].mxu0
    %v972 = vadd.f32 0.0, %v971
    %v973 = vpop.f32.mrb[0].mxu0
    %v974 = vadd.f32 0.0, %v973
    %v975 = vpop.f32.mrb[0].mxu0
    %v976 = vadd.f32 0.0, %v975
    %977 = vdwg.mxu0
    %978 = vmatprep.subr.bf16.mxu0 %v853
    %979 = vmatpush1.bf16.msra.mxu0 %v850
    %980 = vmatprep.subr.bf16.mxu0 0
    %981 = vmatpush1.bf16.msra.mxu0 0
    %982 = vmatprep.subr.bf16.mxu0 0
    %983 = vmatpush1.bf16.msra.mxu0 0
    %984 = vmatprep.subr.bf16.mxu0 0
    %985 = vmatpush1.bf16.msra.mxu0 0
    %986 = vmatprep.subr.bf16.mxu0 0
    %987 = vmatpush1.bf16.msra.mxu0 0
    %988 = vmatprep.subr.bf16.mxu0 0
    %989 = vmatpush1.bf16.msra.mxu0 0
    %990 = vmatprep.subr.bf16.mxu0 0
    %991 = vmatpush1.bf16.msra.mxu0 0
    %992 = vmatprep.subr.bf16.mxu0 0
    %993 = vmatpush1.bf16.msra.mxu0 0
    %994 = vmatprep.subr.bf16.mxu0 0
    %995 = vmatpush1.bf16.msra.mxu0 0
    %996 = vmatprep.subr.bf16.mxu0 0
    %997 = vmatpush1.bf16.msra.mxu0 0
    %998 = vmatprep.subr.bf16.mxu0 0
    %999 = vmatpush1.bf16.msra.mxu0 0
    %1000 = vmatprep.subr.bf16.mxu0 0
    %1001 = vmatpush1.bf16.msra.mxu0 0
    %1002 = vmatprep.subr.bf16.mxu0 0
    %1003 = vmatpush1.bf16.msra.mxu0 0
    %1004 = vmatprep.subr.bf16.mxu0 0
    %1005 = vmatpush1.bf16.msra.mxu0 0
    %1006 = vmatprep.subr.bf16.mxu0 0
    %1007 = vmatpush1.bf16.msra.mxu0 0
    %1008 = vmatprep.subr.bf16.mxu0 0
    %1009 = vmatpush1.bf16.msra.mxu0 0
    %1010 = vmatprep.mubr.bf16.mxu0 0
    %1011 = vmatmul.mubr.bf16.gmra.mrb[0].mxu0 %v817
    %v1012 = vpop.f32.mrb[0].mxu0
    %v1013 = vadd.f32 0.0, %v1012
    %v1014 = vpop.f32.mrb[0].mxu0
    %v1015 = vadd.f32 0.0, %v1014
    %v1016 = vpop.f32.mrb[0].mxu0
    %v1017 = vadd.f32 0.0, %v1016
    %v1018 = vpop.f32.mrb[0].mxu0
    %v1019 = vadd.f32 0.0, %v1018
    %1020 = vmatprep.mubr.bf16.mxu0 0
    %1021 = vmatmul.mubr.bf16.gmra.mrb[0].mxu0 %v820
    %v1022 = vpop.f32.mrb[0].mxu0
    %v1023 = vadd.f32 0.0, %v1022
    %v1024 = vpop.f32.mrb[0].mxu0
    %v1025 = vadd.f32 0.0, %v1024
    %v1026 = vpop.f32.mrb[0].mxu0
    %v1027 = vadd.f32 0.0, %v1026
    %v1028 = vpop.f32.mrb[0].mxu0
    %v1029 = vadd.f32 0.0, %v1028
    %1030 = vmatprep.mubr.bf16.mxu0 0
    %1031 = vmatmul.mubr.bf16.gmra.mrb[0].mxu0 %v823
    %v1032 = vpop.f32.mrb[0].mxu0
    %v1033 = vadd.f32 0.0, %v1032
    %v1034 = vpop.f32.mrb[0].mxu0
    %v1035 = vadd.f32 0.0, %v1034
    %v1036 = vpop.f32.mrb[0].mxu0
    %v1037 = vadd.f32 0.0, %v1036
    %v1038 = vpop.f32.mrb[0].mxu0
    %v1039 = vadd.f32 0.0, %v1038
    %1040 = vmatprep.mubr.bf16.mxu0 0
    %1041 = vmatmul.mubr.bf16.gmra.mrb[0].mxu0 %v826
    %v1042 = vpop.f32.mrb[0].mxu0
    %v1043 = vadd.f32 0.0, %v1042
    %v1044 = vpop.f32.mrb[0].mxu0
    %v1045 = vadd.f32 0.0, %v1044
    %v1046 = vpop.f32.mrb[0].mxu0
    %v1047 = vadd.f32 0.0, %v1046
    %v1048 = vpop.f32.mrb[0].mxu0
    %v1049 = vadd.f32 0.0, %v1048
    %1050 = vmatprep.mubr.bf16.mxu0 0
    %1051 = vmatmul.mubr.bf16.gmra.mrb[0].mxu0 %v829
    %v1052 = vpop.f32.mrb[0].mxu0
    %v1053 = vadd.f32 0.0, %v1052
    %v1054 = vpop.f32.mrb[0].mxu0
    %v1055 = vadd.f32 0.0, %v1054
    %v1056 = vpop.f32.mrb[0].mxu0
    %v1057 = vadd.f32 0.0, %v1056
    %v1058 = vpop.f32.mrb[0].mxu0
    %v1059 = vadd.f32 0.0, %v1058
    %1060 = vmatprep.mubr.bf16.mxu0 0
    %1061 = vmatmul.mubr.bf16.gmra.mrb[0].mxu0 %v832
    %v1062 = vpop.f32.mrb[0].mxu0
    %v1063 = vadd.f32 0.0, %v1062
    %v1064 = vpop.f32.mrb[0].mxu0
    %v1065 = vadd.f32 0.0, %v1064
    %v1066 = vpop.f32.mrb[0].mxu0
    %v1067 = vadd.f32 0.0, %v1066
    %v1068 = vpop.f32.mrb[0].mxu0
    %v1069 = vadd.f32 0.0, %v1068
    %1070 = vmatprep.mubr.bf16.mxu0 0
    %1071 = vmatmul.mubr.bf16.gmra.mrb[0].mxu0 %v835
    %v1072 = vpop.f32.mrb[0].mxu0
    %v1073 = vadd.f32 0.0, %v1072
    %v1074 = vpop.f32.mrb[0].mxu0
    %v1075 = vadd.f32 0.0, %v1074
    %v1076 = vpop.f32.mrb[0].mxu0
    %v1077 = vadd.f32 0.0, %v1076
    %v1078 = vpop.f32.mrb[0].mxu0
    %v1079 = vadd.f32 0.0, %v1078
    %1080 = vmatprep.mubr.bf16.mxu0 0
    %1081 = vmatmul.mubr.bf16.gmra.mrb[0].mxu0 %v838
    %v1082 = vpop.f32.mrb[0].mxu0
    %v1083 = vadd.f32 0.0, %v1082
    %v1084 = vpop.f32.mrb[0].mxu0
    %v1085 = vadd.f32 0.0, %v1084
    %v1086 = vpop.f32.mrb[0].mxu0
    %v1087 = vadd.f32 0.0, %v1086
    %v1088 = vpop.f32.mrb[0].mxu0
    %v1089 = vadd.f32 0.0, %v1088
    %1090 = vmatprep.mubr.bf16.mxu0 0
    %1091 = vmatmul.mubr.bf16.gmra.mrb[0].mxu0 %v841
    %v1092 = vpop.f32.mrb[0].mxu0
    %v1093 = vadd.f32 0.0, %v1092
    %v1094 = vpop.f32.mrb[0].mxu0
    %v1095 = vadd.f32 0.0, %v1094
    %v1096 = vpop.f32.mrb[0].mxu0
    %v1097 = vadd.f32 0.0, %v1096
    %v1098 = vpop.f32.mrb[0].mxu0
    %v1099 = vadd.f32 0.0, %v1098
    %1100 = vdwg.mxu0
    %v1101 = vadd.f32 %v566, %v890
    %v1102 = vadd.f32 %v568, %v892
    %v1103 = vadd.f32 %v689, %v1013
    %v1104 = vadd.f32 %v691, %v1015
    %v1105 = vadd.f32 %v570, %v894
    %v1106 = vadd.f32 %v572, %v896
    %v1107 = vadd.f32 %v693, %v1017
    %v1108 = vadd.f32 %v695, %v1019
    %v1109 = vadd.f32 %v576, %v900
    %v1110 = vadd.f32 %v578, %v902
    %v1111 = vadd.f32 %v699, %v1023
    %v1112 = vadd.f32 %v701, %v1025
    %v1113 = vadd.f32 %v580, %v904
    %v1114 = vadd.f32 %v582, %v906
    %v1115 = vadd.f32 %v703, %v1027
    %v1116 = vadd.f32 %v705, %v1029
    %v1117 = vadd.f32 %v586, %v910
    %v1118 = vadd.f32 %v588, %v912
    %v1119 = vadd.f32 %v709, %v1033
    %v1120 = vadd.f32 %v711, %v1035
    %v1121 = vadd.f32 %v590, %v914
    %v1122 = vadd.f32 %v592, %v916
    %v1123 = vadd.f32 %v713, %v1037
    %v1124 = vadd.f32 %v715, %v1039
    %v1125 = vadd.f32 %v596, %v920
    %v1126 = vadd.f32 %v598, %v922
    %v1127 = vadd.f32 %v719, %v1043
    %v1128 = vadd.f32 %v721, %v1045
    %v1129 = vadd.f32 %v600, %v924
    %v1130 = vadd.f32 %v602, %v926
    %v1131 = vadd.f32 %v723, %v1047
    %v1132 = vadd.f32 %v725, %v1049
    %v1133 = vadd.f32 %v606, %v930
    %v1134 = vadd.f32 %v608, %v932
    %v1135 = vadd.f32 %v729, %v1053
    %v1136 = vadd.f32 %v731, %v1055
    %v1137 = vadd.f32 %v610, %v934
    %v1138 = vadd.f32 %v612, %v936
    %v1139 = vadd.f32 %v733, %v1057
    %v1140 = vadd.f32 %v735, %v1059
    %v1141 = vadd.f32 %v616, %v940
    %v1142 = vadd.f32 %v618, %v942
    %v1143 = vadd.f32 %v739, %v1063
    %v1144 = vadd.f32 %v741, %v1065
    %v1145 = vadd.f32 %v620, %v944
    %v1146 = vadd.f32 %v622, %v946
    %v1147 = vadd.f32 %v743, %v1067
    %v1148 = vadd.f32 %v745, %v1069
    %v1149 = vadd.f32 %v626, %v950
    %v1150 = vadd.f32 %v628, %v952
    %v1151 = vadd.f32 %v749, %v1073
    %v1152 = vadd.f32 %v751, %v1075
    %v1153 = vadd.f32 %v630, %v954
    %v1154 = vadd.f32 %v632, %v956
    %v1155 = vadd.f32 %v753, %v1077
    %v1156 = vadd.f32 %v755, %v1079
    %v1157 = vadd.f32 %v636, %v960
    %v1158 = vadd.f32 %v638, %v962
    %v1159 = vadd.f32 %v759, %v1083
    %v1160 = vadd.f32 %v761, %v1085
    %v1161 = vadd.f32 %v640, %v964
    %v1162 = vadd.f32 %v642, %v966
    %v1163 = vadd.f32 %v763, %v1087
    %v1164 = vadd.f32 %v765, %v1089
    %v1165 = vadd.f32 %v646, %v970
    %v1166 = vadd.f32 %v648, %v972
    %v1167 = vadd.f32 %v769, %v1093
    %v1168 = vadd.f32 %v771, %v1095
    %v1169 = vadd.f32 %v650, %v974
    %v1170 = vadd.f32 %v652, %v976
    %v1171 = vadd.f32 %v773, %v1097
    %v1172 = vadd.f32 %v775, %v1099
    %v1173 = vld [vmem:[#allocation2 + $0x6] sm:$0xff]
    %v1174 = vld [vmem:[#allocation2 + $0xe] sm:$0xff]
    %v1175 = vld [vmem:[#allocation2 + $0x16] sm:$0xff]
    %v1176 = vld [vmem:[#allocation2 + $0x1e] sm:$0xff]
    %v1177 = vld [vmem:[#allocation2 + $0x26] sm:$0xff]
    %v1178 = vld [vmem:[#allocation2 + $0x2e] sm:$0xff]
    %v1179 = vld [vmem:[#allocation2 + $0x36] sm:$0xff]
    %v1180 = vld [vmem:[#allocation2 + $0x3e] sm:$0xff]
    %v1181 = vld [vmem:[#allocation2 + $0x46] sm:$0xff]
    %v1182 = vld [vmem:[#allocation2 + $0x4e] sm:$0xff]
    %v1183 = vld [vmem:[#allocation2 + $0x56] sm:$0xff]
    %v1184 = vld [vmem:[#allocation2 + $0x5e] sm:$0xff]
    %v1185 = vld [vmem:[#allocation2 + $0x66] sm:$0xff]
    %v1186 = vld [vmem:[#allocation2 + $0x6e] sm:$0xff]
    %v1187 = vld [vmem:[#allocation2 + $0x76] sm:$0xff]
    %v1188 = vld [vmem:[#allocation2 + $0x7e] sm:$0xff]
    %v1189 = vld [vmem:[#allocation2 + $0x86] sm:$0xff]
    %v1190 = vld [vmem:[#allocation2 + $0x8e] sm:$0xff]
    %v1191 = vpack.c.bf16 %v1174, %v1173
    %v1192 = vpack.c.bf16 %v1176, %v1175
    %v1193 = vpack.c.bf16 %v1178, %v1177
    %v1194 = vpack.c.bf16 %v1180, %v1179
    %v1195 = vpack.c.bf16 %v1182, %v1181
    %v1196 = vpack.c.bf16 %v1184, %v1183
    %v1197 = vpack.c.bf16 %v1186, %v1185
    %v1198 = vpack.c.bf16 %v1188, %v1187
    %v1199 = vpack.c.bf16 %v1190, %v1189
    %v1200 = vld [vmem:[%s2 + $0x30] sm:$0xff]
    %v1201 = vld [vmem:[%s2 + $0x38] sm:$0xff]
    %v1204 = vunpack.c.l.b16 %v1200
    %v1205 = vunpack.c.h.b16 %v1200
    %v1206 = vunpack.c.l.b16 %v1201
    %v1207 = vunpack.c.h.b16 %v1201
    %v1208 = vpack.c.b16 %v1204, %v1204
    %v1209 = vpack.c.b16 %v1205, %v1205
    %v1210 = vpack.c.b16 %v1206, %v1206
    %v1211 = vpack.c.b16 %v1207, %v1207
    %v1213 = vsel %vm82, %v1191, 0
    %v1216 = vsel %vm82, %v1192, 0
    %v1219 = vsel %vm82, %v1193, 0
    %v1222 = vsel %vm82, %v1194, 0
    %v1225 = vsel %vm82, %v1195, 0
    %v1228 = vsel %vm82, %v1196, 0
    %v1231 = vsel %vm82, %v1197, 0
    %v1234 = vsel %vm82, %v1198, 0
    %v1237 = vsel %vm82, %v1199, 0
    %v1240 = vsel %vm223, %v1208, 0
    %v1243 = vsel %vm223, %v1209, 0
    %v1246 = vsel %vm223, %v1210, 0
    %v1249 = vsel %vm223, %v1211, 0
    %1251 = vmatprep.subr.bf16.mxu0 %v1243
    %1252 = vmatpush1.bf16.msra.mxu0 %v1240
    %1253 = vmatprep.subr.bf16.mxu0 0
    %1254 = vmatpush1.bf16.msra.mxu0 0
    %1255 = vmatprep.subr.bf16.mxu0 0
    %1256 = vmatpush1.bf16.msra.mxu0 0
    %1257 = vmatprep.subr.bf16.mxu0 0
    %1258 = vmatpush1.bf16.msra.mxu0 0
    %1259 = vmatprep.subr.bf16.mxu0 0
    %1260 = vmatpush1.bf16.msra.mxu0 0
    %1261 = vmatprep.subr.bf16.mxu0 0
    %1262 = vmatpush1.bf16.msra.mxu0 0
    %1263 = vmatprep.subr.bf16.mxu0 0
    %1264 = vmatpush1.bf16.msra.mxu0 0
    %1265 = vmatprep.subr.bf16.mxu0 0
    %1266 = vmatpush1.bf16.msra.mxu0 0
    %1267 = vmatprep.subr.bf16.mxu0 0
    %1268 = vmatpush1.bf16.msra.mxu0 0
    %1269 = vmatprep.subr.bf16.mxu0 0
    %1270 = vmatpush1.bf16.msra.mxu0 0
    %1271 = vmatprep.subr.bf16.mxu0 0
    %1272 = vmatpush1.bf16.msra.mxu0 0
    %1273 = vmatprep.subr.bf16.mxu0 0
    %1274 = vmatpush1.bf16.msra.mxu0 0
    %1275 = vmatprep.subr.bf16.mxu0 0
    %1276 = vmatpush1.bf16.msra.mxu0 0
    %1277 = vmatprep.subr.bf16.mxu0 0
    %1278 = vmatpush1.bf16.msra.mxu0 0
    %1279 = vmatprep.subr.bf16.mxu0 0
    %1280 = vmatpush1.bf16.msra.mxu0 0
    %1281 = vmatprep.subr.bf16.mxu0 0
    %1282 = vmatpush1.bf16.msra.mxu0 0
    %1283 = vmatprep.mubr.bf16.mxu0 0
    %1284 = vmatmul.mubr.bf16.gmra.mrb[0].mxu0 %v1213
    %v1285 = vpop.f32.mrb[0].mxu0
    %v1286 = vadd.f32 0.0, %v1285
    %v1287 = vpop.f32.mrb[0].mxu0
    %v1288 = vadd.f32 0.0, %v1287
    %v1289 = vpop.f32.mrb[0].mxu0
    %v1290 = vadd.f32 0.0, %v1289
    %v1291 = vpop.f32.mrb[0].mxu0
    %v1292 = vadd.f32 0.0, %v1291
    %1293 = vmatprep.mubr.bf16.mxu0 0
    %1294 = vmatmul.mubr.bf16.gmra.mrb[0].mxu0 %v1216
    %v1295 = vpop.f32.mrb[0].mxu0
    %v1296 = vadd.f32 0.0, %v1295
    %v1297 = vpop.f32.mrb[0].mxu0
    %v1298 = vadd.f32 0.0, %v1297
    %v1299 = vpop.f32.mrb[0].mxu0
    %v1300 = vadd.f32 0.0, %v1299
    %v1301 = vpop.f32.mrb[0].mxu0
    %v1302 = vadd.f32 0.0, %v1301
    %1303 = vmatprep.mubr.bf16.mxu0 0
    %1304 = vmatmul.mubr.bf16.gmra.mrb[0].mxu0 %v1219
    %v1305 = vpop.f32.mrb[0].mxu0
    %v1306 = vadd.f32 0.0, %v1305
    %v1307 = vpop.f32.mrb[0].mxu0
    %v1308 = vadd.f32 0.0, %v1307
    %v1309 = vpop.f32.mrb[0].mxu0
    %v1310 = vadd.f32 0.0, %v1309
    %v1311 = vpop.f32.mrb[0].mxu0
    %v1312 = vadd.f32 0.0, %v1311
    %1313 = vmatprep.mubr.bf16.mxu0 0
    %1314 = vmatmul.mubr.bf16.gmra.mrb[0].mxu0 %v1222
    %v1315 = vpop.f32.mrb[0].mxu0
    %v1316 = vadd.f32 0.0, %v1315
    %v1317 = vpop.f32.mrb[0].mxu0
    %v1318 = vadd.f32 0.0, %v1317
    %v1319 = vpop.f32.mrb[0].mxu0
    %v1320 = vadd.f32 0.0, %v1319
    %v1321 = vpop.f32.mrb[0].mxu0
    %v1322 = vadd.f32 0.0, %v1321
    %1323 = vmatprep.mubr.bf16.mxu0 0
    %1324 = vmatmul.mubr.bf16.gmra.mrb[0].mxu0 %v1225
    %v1325 = vpop.f32.mrb[0].mxu0
    %v1326 = vadd.f32 0.0, %v1325
    %v1327 = vpop.f32.mrb[0].mxu0
    %v1328 = vadd.f32 0.0, %v1327
    %v1329 = vpop.f32.mrb[0].mxu0
    %v1330 = vadd.f32 0.0, %v1329
    %v1331 = vpop.f32.mrb[0].mxu0
    %v1332 = vadd.f32 0.0, %v1331
    %1333 = vmatprep.mubr.bf16.mxu0 0
    %1334 = vmatmul.mubr.bf16.gmra.mrb[0].mxu0 %v1228
    %v1335 = vpop.f32.mrb[0].mxu0
    %v1336 = vadd.f32 0.0, %v1335
    %v1337 = vpop.f32.mrb[0].mxu0
    %v1338 = vadd.f32 0.0, %v1337
    %v1339 = vpop.f32.mrb[0].mxu0
    %v1340 = vadd.f32 0.0, %v1339
    %v1341 = vpop.f32.mrb[0].mxu0
    %v1342 = vadd.f32 0.0, %v1341
    %1343 = vmatprep.mubr.bf16.mxu0 0
    %1344 = vmatmul.mubr.bf16.gmra.mrb[0].mxu0 %v1231
    %v1345 = vpop.f32.mrb[0].mxu0
    %v1346 = vadd.f32 0.0, %v1345
    %v1347 = vpop.f32.mrb[0].mxu0
    %v1348 = vadd.f32 0.0, %v1347
    %v1349 = vpop.f32.mrb[0].mxu0
    %v1350 = vadd.f32 0.0, %v1349
    %v1351 = vpop.f32.mrb[0].mxu0
    %v1352 = vadd.f32 0.0, %v1351
    %1353 = vmatprep.mubr.bf16.mxu0 0
    %1354 = vmatmul.mubr.bf16.gmra.mrb[0].mxu0 %v1234
    %v1355 = vpop.f32.mrb[0].mxu0
    %v1356 = vadd.f32 0.0, %v1355
    %v1357 = vpop.f32.mrb[0].mxu0
    %v1358 = vadd.f32 0.0, %v1357
    %v1359 = vpop.f32.mrb[0].mxu0
    %v1360 = vadd.f32 0.0, %v1359
    %v1361 = vpop.f32.mrb[0].mxu0
    %v1362 = vadd.f32 0.0, %v1361
    %1363 = vmatprep.mubr.bf16.mxu0 0
    %1364 = vmatmul.mubr.bf16.gmra.mrb[0].mxu0 %v1237
    %v1365 = vpop.f32.mrb[0].mxu0
    %v1366 = vadd.f32 0.0, %v1365
    %v1367 = vpop.f32.mrb[0].mxu0
    %v1368 = vadd.f32 0.0, %v1367
    %v1369 = vpop.f32.mrb[0].mxu0
    %v1370 = vadd.f32 0.0, %v1369
    %v1371 = vpop.f32.mrb[0].mxu0
    %v1372 = vadd.f32 0.0, %v1371
    %1373 = vdwg.mxu0
    %1374 = vmatprep.subr.bf16.mxu0 %v1249
    %1375 = vmatpush1.bf16.msra.mxu0 %v1246
    %1376 = vmatprep.subr.bf16.mxu0 0
    %1377 = vmatpush1.bf16.msra.mxu0 0
    %1378 = vmatprep.subr.bf16.mxu0 0
    %1379 = vmatpush1.bf16.msra.mxu0 0
    %1380 = vmatprep.subr.bf16.mxu0 0
    %1381 = vmatpush1.bf16.msra.mxu0 0
    %1382 = vmatprep.subr.bf16.mxu0 0
    %1383 = vmatpush1.bf16.msra.mxu0 0
    %1384 = vmatprep.subr.bf16.mxu0 0
    %1385 = vmatpush1.bf16.msra.mxu0 0
    %1386 = vmatprep.subr.bf16.mxu0 0
    %1387 = vmatpush1.bf16.msra.mxu0 0
    %1388 = vmatprep.subr.bf16.mxu0 0
    %1389 = vmatpush1.bf16.msra.mxu0 0
    %1390 = vmatprep.subr.bf16.mxu0 0
    %1391 = vmatpush1.bf16.msra.mxu0 0
    %1392 = vmatprep.subr.bf16.mxu0 0
    %1393 = vmatpush1.bf16.msra.mxu0 0
    %1394 = vmatprep.subr.bf16.mxu0 0
    %1395 = vmatpush1.bf16.msra.mxu0 0
    %1396 = vmatprep.subr.bf16.mxu0 0
    %1397 = vmatpush1.bf16.msra.mxu0 0
    %1398 = vmatprep.subr.bf16.mxu0 0
    %1399 = vmatpush1.bf16.msra.mxu0 0
    %1400 = vmatprep.subr.bf16.mxu0 0
    %1401 = vmatpush1.bf16.msra.mxu0 0
    %1402 = vmatprep.subr.bf16.mxu0 0
    %1403 = vmatpush1.bf16.msra.mxu0 0
    %1404 = vmatprep.subr.bf16.mxu0 0
    %1405 = vmatpush1.bf16.msra.mxu0 0
    %1406 = vmatprep.mubr.bf16.mxu0 0
    %1407 = vmatmul.mubr.bf16.gmra.mrb[0].mxu0 %v1213
    %v1408 = vpop.f32.mrb[0].mxu0
    %v1409 = vadd.f32 0.0, %v1408
    %v1410 = vpop.f32.mrb[0].mxu0
    %v1411 = vadd.f32 0.0, %v1410
    %v1412 = vpop.f32.mrb[0].mxu0
    %v1413 = vadd.f32 0.0, %v1412
    %v1414 = vpop.f32.mrb[0].mxu0
    %v1415 = vadd.f32 0.0, %v1414
    %1416 = vmatprep.mubr.bf16.mxu0 0
    %1417 = vmatmul.mubr.bf16.gmra.mrb[0].mxu0 %v1216
    %v1418 = vpop.f32.mrb[0].mxu0
    %v1419 = vadd.f32 0.0, %v1418
    %v1420 = vpop.f32.mrb[0].mxu0
    %v1421 = vadd.f32 0.0, %v1420
    %v1422 = vpop.f32.mrb[0].mxu0
    %v1423 = vadd.f32 0.0, %v1422
    %v1424 = vpop.f32.mrb[0].mxu0
    %v1425 = vadd.f32 0.0, %v1424
    %1426 = vmatprep.mubr.bf16.mxu0 0
    %1427 = vmatmul.mubr.bf16.gmra.mrb[0].mxu0 %v1219
    %v1428 = vpop.f32.mrb[0].mxu0
    %v1429 = vadd.f32 0.0, %v1428
    %v1430 = vpop.f32.mrb[0].mxu0
    %v1431 = vadd.f32 0.0, %v1430
    %v1432 = vpop.f32.mrb[0].mxu0
    %v1433 = vadd.f32 0.0, %v1432
    %v1434 = vpop.f32.mrb[0].mxu0
    %v1435 = vadd.f32 0.0, %v1434
    %1436 = vmatprep.mubr.bf16.mxu0 0
    %1437 = vmatmul.mubr.bf16.gmra.mrb[0].mxu0 %v1222
    %v1438 = vpop.f32.mrb[0].mxu0
    %v1439 = vadd.f32 0.0, %v1438
    %v1440 = vpop.f32.mrb[0].mxu0
    %v1441 = vadd.f32 0.0, %v1440
    %v1442 = vpop.f32.mrb[0].mxu0
    %v1443 = vadd.f32 0.0, %v1442
    %v1444 = vpop.f32.mrb[0].mxu0
    %v1445 = vadd.f32 0.0, %v1444
    %1446 = vmatprep.mubr.bf16.mxu0 0
    %1447 = vmatmul.mubr.bf16.gmra.mrb[0].mxu0 %v1225
    %v1448 = vpop.f32.mrb[0].mxu0
    %v1449 = vadd.f32 0.0, %v1448
    %v1450 = vpop.f32.mrb[0].mxu0
    %v1451 = vadd.f32 0.0, %v1450
    %v1452 = vpop.f32.mrb[0].mxu0
    %v1453 = vadd.f32 0.0, %v1452
    %v1454 = vpop.f32.mrb[0].mxu0
    %v1455 = vadd.f32 0.0, %v1454
    %1456 = vmatprep.mubr.bf16.mxu0 0
    %1457 = vmatmul.mubr.bf16.gmra.mrb[0].mxu0 %v1228
    %v1458 = vpop.f32.mrb[0].mxu0
    %v1459 = vadd.f32 0.0, %v1458
    %v1460 = vpop.f32.mrb[0].mxu0
    %v1461 = vadd.f32 0.0, %v1460
    %v1462 = vpop.f32.mrb[0].mxu0
    %v1463 = vadd.f32 0.0, %v1462
    %v1464 = vpop.f32.mrb[0].mxu0
    %v1465 = vadd.f32 0.0, %v1464
    %1466 = vmatprep.mubr.bf16.mxu0 0
    %1467 = vmatmul.mubr.bf16.gmra.mrb[0].mxu0 %v1231
    %v1468 = vpop.f32.mrb[0].mxu0
    %v1469 = vadd.f32 0.0, %v1468
    %v1470 = vpop.f32.mrb[0].mxu0
    %v1471 = vadd.f32 0.0, %v1470
    %v1472 = vpop.f32.mrb[0].mxu0
    %v1473 = vadd.f32 0.0, %v1472
    %v1474 = vpop.f32.mrb[0].mxu0
    %v1475 = vadd.f32 0.0, %v1474
    %1476 = vmatprep.mubr.bf16.mxu0 0
    %1477 = vmatmul.mubr.bf16.gmra.mrb[0].mxu0 %v1234
    %v1478 = vpop.f32.mrb[0].mxu0
    %v1479 = vadd.f32 0.0, %v1478
    %v1480 = vpop.f32.mrb[0].mxu0
    %v1481 = vadd.f32 0.0, %v1480
    %v1482 = vpop.f32.mrb[0].mxu0
    %v1483 = vadd.f32 0.0, %v1482
    %v1484 = vpop.f32.mrb[0].mxu0
    %v1485 = vadd.f32 0.0, %v1484
    %1486 = vmatprep.mubr.bf16.mxu0 0
    %1487 = vmatmul.mubr.bf16.gmra.mrb[0].mxu0 %v1237
    %v1488 = vpop.f32.mrb[0].mxu0
    %v1489 = vadd.f32 0.0, %v1488
    %v1490 = vpop.f32.mrb[0].mxu0
    %v1491 = vadd.f32 0.0, %v1490
    %v1492 = vpop.f32.mrb[0].mxu0
    %v1493 = vadd.f32 0.0, %v1492
    %v1494 = vpop.f32.mrb[0].mxu0
    %v1495 = vadd.f32 0.0, %v1494
    %1496 = vdwg.mxu0
    %v1497 = vadd.f32 %v1101, %v1286
    %v1498 = vadd.f32 %v1102, %v1288
    %v1499 = vadd.f32 %v1103, %v1409
    %v1500 = vadd.f32 %v1104, %v1411
    %v1501 = vadd.f32 %v1105, %v1290
    %v1502 = vadd.f32 %v1106, %v1292
    %v1503 = vadd.f32 %v1107, %v1413
    %v1504 = vadd.f32 %v1108, %v1415
    %v1505 = vadd.f32 %v1109, %v1296
    %v1506 = vadd.f32 %v1110, %v1298
    %v1507 = vadd.f32 %v1111, %v1419
    %v1508 = vadd.f32 %v1112, %v1421
    %v1509 = vadd.f32 %v1113, %v1300
    %v1510 = vadd.f32 %v1114, %v1302
    %v1511 = vadd.f32 %v1115, %v1423
    %v1512 = vadd.f32 %v1116, %v1425
    %v1513 = vadd.f32 %v1117, %v1306
    %v1514 = vadd.f32 %v1118, %v1308
    %v1515 = vadd.f32 %v1119, %v1429
    %v1516 = vadd.f32 %v1120, %v1431
    %v1517 = vadd.f32 %v1121, %v1310
    %v1518 = vadd.f32 %v1122, %v1312
    %v1519 = vadd.f32 %v1123, %v1433
    %v1520 = vadd.f32 %v1124, %v1435
    %v1521 = vadd.f32 %v1125, %v1316
    %v1522 = vadd.f32 %v1126, %v1318
    %v1523 = vadd.f32 %v1127, %v1439
    %v1524 = vadd.f32 %v1128, %v1441
    %v1525 = vadd.f32 %v1129, %v1320
    %v1526 = vadd.f32 %v1130, %v1322
    %v1527 = vadd.f32 %v1131, %v1443
    %v1528 = vadd.f32 %v1132, %v1445
    %v1529 = vadd.f32 %v1133, %v1326
    %v1530 = vadd.f32 %v1134, %v1328
    %v1531 = vadd.f32 %v1135, %v1449
    %v1532 = vadd.f32 %v1136, %v1451
    %v1533 = vadd.f32 %v1137, %v1330
    %v1534 = vadd.f32 %v1138, %v1332
    %v1535 = vadd.f32 %v1139, %v1453
    %v1536 = vadd.f32 %v1140, %v1455
    %v1537 = vadd.f32 %v1141, %v1336
    %v1538 = vadd.f32 %v1142, %v1338
    %v1539 = vadd.f32 %v1143, %v1459
    %v1540 = vadd.f32 %v1144, %v1461
    %v1541 = vadd.f32 %v1145, %v1340
    %v1542 = vadd.f32 %v1146, %v1342
    %v1543 = vadd.f32 %v1147, %v1463
    %v1544 = vadd.f32 %v1148, %v1465
    %v1545 = vadd.f32 %v1149, %v1346
    %v1546 = vadd.f32 %v1150, %v1348
    %v1547 = vadd.f32 %v1151, %v1469
    %v1548 = vadd.f32 %v1152, %v1471
    %v1549 = vadd.f32 %v1153, %v1350
    %v1550 = vadd.f32 %v1154, %v1352
    %v1551 = vadd.f32 %v1155, %v1473
    %v1552 = vadd.f32 %v1156, %v1475
    %v1553 = vadd.f32 %v1157, %v1356
    %v1554 = vadd.f32 %v1158, %v1358
    %v1555 = vadd.f32 %v1159, %v1479
    %v1556 = vadd.f32 %v1160, %v1481
    %v1557 = vadd.f32 %v1161, %v1360
    %v1558 = vadd.f32 %v1162, %v1362
    %v1559 = vadd.f32 %v1163, %v1483
    %v1560 = vadd.f32 %v1164, %v1485
    %v1561 = vadd.f32 %v1165, %v1366
    %v1562 = vadd.f32 %v1166, %v1368
    %v1563 = vadd.f32 %v1167, %v1489
    %v1564 = vadd.f32 %v1168, %v1491
    %v1565 = vadd.f32 %v1169, %v1370
    %v1566 = vadd.f32 %v1170, %v1372
    %v1567 = vadd.f32 %v1171, %v1493
    %v1568 = vadd.f32 %v1172, %v1495
    %v1569 = vld [vmem:[#allocation2 + $0x7] sm:$0xff]
    %v1570 = vld [vmem:[#allocation2 + $0xf] sm:$0xff]
    %v1571 = vld [vmem:[#allocation2 + $0x17] sm:$0xff]
    %v1572 = vld [vmem:[#allocation2 + $0x1f] sm:$0xff]
    %v1573 = vld [vmem:[#allocation2 + $0x27] sm:$0xff]
    %v1574 = vld [vmem:[#allocation2 + $0x2f] sm:$0xff]
    %v1575 = vld [vmem:[#allocation2 + $0x37] sm:$0xff]
    %v1576 = vld [vmem:[#allocation2 + $0x3f] sm:$0xff]
    %v1577 = vld [vmem:[#allocation2 + $0x47] sm:$0xff]
    %v1578 = vld [vmem:[#allocation2 + $0x4f] sm:$0xff]
    %v1579 = vld [vmem:[#allocation2 + $0x57] sm:$0xff]
    %v1580 = vld [vmem:[#allocation2 + $0x5f] sm:$0xff]
    %v1581 = vld [vmem:[#allocation2 + $0x67] sm:$0xff]
    %v1582 = vld [vmem:[#allocation2 + $0x6f] sm:$0xff]
    %v1583 = vld [vmem:[#allocation2 + $0x77] sm:$0xff]
    %v1584 = vld [vmem:[#allocation2 + $0x7f] sm:$0xff]
    %v1585 = vld [vmem:[#allocation2 + $0x87] sm:$0xff]
    %v1586 = vld [vmem:[#allocation2 + $0x8f] sm:$0xff]
    %v1587 = vpack.c.bf16 %v1570, %v1569
    %v1588 = vpack.c.bf16 %v1572, %v1571
    %v1589 = vpack.c.bf16 %v1574, %v1573
    %v1590 = vpack.c.bf16 %v1576, %v1575
    %v1591 = vpack.c.bf16 %v1578, %v1577
    %v1592 = vpack.c.bf16 %v1580, %v1579
    %v1593 = vpack.c.bf16 %v1582, %v1581
    %v1594 = vpack.c.bf16 %v1584, %v1583
    %v1595 = vpack.c.bf16 %v1586, %v1585
    %v1596 = vld [vmem:[%s2 + $0x40] sm:$0xff]
    %v1597 = vld [vmem:[%s2 + $0x48] sm:$0xff]
    %v1600 = vunpack.c.l.b16 %v1596
    %v1601 = vunpack.c.h.b16 %v1596
    %v1602 = vunpack.c.l.b16 %v1597
    %v1603 = vunpack.c.h.b16 %v1597
    %v1604 = vpack.c.b16 %v1600, %v1600
    %v1605 = vpack.c.b16 %v1601, %v1601
    %v1606 = vpack.c.b16 %v1602, %v1602
    %v1607 = vpack.c.b16 %v1603, %v1603
    %v1609 = vsel %vm82, %v1587, 0
    %v1612 = vsel %vm82, %v1588, 0
    %v1615 = vsel %vm82, %v1589, 0
    %v1618 = vsel %vm82, %v1590, 0
    %v1621 = vsel %vm82, %v1591, 0
    %v1624 = vsel %vm82, %v1592, 0
    %v1627 = vsel %vm82, %v1593, 0
    %v1630 = vsel %vm82, %v1594, 0
    %v1633 = vsel %vm82, %v1595, 0
    %v1636 = vsel %vm223, %v1604, 0
    %v1639 = vsel %vm223, %v1605, 0
    %v1642 = vsel %vm223, %v1606, 0
    %v1645 = vsel %vm223, %v1607, 0
    %1647 = vmatprep.subr.bf16.mxu0 %v1639
    %1648 = vmatpush1.bf16.msra.mxu0 %v1636
    %1649 = vmatprep.subr.bf16.mxu0 0
    %1650 = vmatpush1.bf16.msra.mxu0 0
    %1651 = vmatprep.subr.bf16.mxu0 0
    %1652 = vmatpush1.bf16.msra.mxu0 0
    %1653 = vmatprep.subr.bf16.mxu0 0
    %1654 = vmatpush1.bf16.msra.mxu0 0
    %1655 = vmatprep.subr.bf16.mxu0 0
    %1656 = vmatpush1.bf16.msra.mxu0 0
    %1657 = vmatprep.subr.bf16.mxu0 0
    %1658 = vmatpush1.bf16.msra.mxu0 0
    %1659 = vmatprep.subr.bf16.mxu0 0
    %1660 = vmatpush1.bf16.msra.mxu0 0
    %1661 = vmatprep.subr.bf16.mxu0 0
    %1662 = vmatpush1.bf16.msra.mxu0 0
    %1663 = vmatprep.subr.bf16.mxu0 0
    %1664 = vmatpush1.bf16.msra.mxu0 0
    %1665 = vmatprep.subr.bf16.mxu0 0
    %1666 = vmatpush1.bf16.msra.mxu0 0
    %1667 = vmatprep.subr.bf16.mxu0 0
    %1668 = vmatpush1.bf16.msra.mxu0 0
    %1669 = vmatprep.subr.bf16.mxu0 0
    %1670 = vmatpush1.bf16.msra.mxu0 0
    %1671 = vmatprep.subr.bf16.mxu0 0
    %1672 = vmatpush1.bf16.msra.mxu0 0
    %1673 = vmatprep.subr.bf16.mxu0 0
    %1674 = vmatpush1.bf16.msra.mxu0 0
    %1675 = vmatprep.subr.bf16.mxu0 0
    %1676 = vmatpush1.bf16.msra.mxu0 0
    %1677 = vmatprep.subr.bf16.mxu0 0
    %1678 = vmatpush1.bf16.msra.mxu0 0
    %1679 = vmatprep.mubr.bf16.mxu0 0
    %1680 = vmatmul.mubr.bf16.gmra.mrb[0].mxu0 %v1609
    %v1681 = vpop.f32.mrb[0].mxu0
    %v1682 = vadd.f32 0.0, %v1681
    %v1683 = vpop.f32.mrb[0].mxu0
    %v1684 = vadd.f32 0.0, %v1683
    %v1685 = vpop.f32.mrb[0].mxu0
    %v1686 = vadd.f32 0.0, %v1685
    %v1687 = vpop.f32.mrb[0].mxu0
    %v1688 = vadd.f32 0.0, %v1687
    %1689 = vmatprep.mubr.bf16.mxu0 0
    %1690 = vmatmul.mubr.bf16.gmra.mrb[0].mxu0 %v1612
    %v1691 = vpop.f32.mrb[0].mxu0
    %v1692 = vadd.f32 0.0, %v1691
    %v1693 = vpop.f32.mrb[0].mxu0
    %v1694 = vadd.f32 0.0, %v1693
    %v1695 = vpop.f32.mrb[0].mxu0
    %v1696 = vadd.f32 0.0, %v1695
    %v1697 = vpop.f32.mrb[0].mxu0
    %v1698 = vadd.f32 0.0, %v1697
    %1699 = vmatprep.mubr.bf16.mxu0 0
    %1700 = vmatmul.mubr.bf16.gmra.mrb[0].mxu0 %v1615
    %v1701 = vpop.f32.mrb[0].mxu0
    %v1702 = vadd.f32 0.0, %v1701
    %v1703 = vpop.f32.mrb[0].mxu0
    %v1704 = vadd.f32 0.0, %v1703
    %v1705 = vpop.f32.mrb[0].mxu0
    %v1706 = vadd.f32 0.0, %v1705
    %v1707 = vpop.f32.mrb[0].mxu0
    %v1708 = vadd.f32 0.0, %v1707
    %1709 = vmatprep.mubr.bf16.mxu0 0
    %1710 = vmatmul.mubr.bf16.gmra.mrb[0].mxu0 %v1618
    %v1711 = vpop.f32.mrb[0].mxu0
    %v1712 = vadd.f32 0.0, %v1711
    %v1713 = vpop.f32.mrb[0].mxu0
    %v1714 = vadd.f32 0.0, %v1713
    %v1715 = vpop.f32.mrb[0].mxu0
    %v1716 = vadd.f32 0.0, %v1715
    %v1717 = vpop.f32.mrb[0].mxu0
    %v1718 = vadd.f32 0.0, %v1717
    %1719 = vmatprep.mubr.bf16.mxu0 0
    %1720 = vmatmul.mubr.bf16.gmra.mrb[0].mxu0 %v1621
    %v1721 = vpop.f32.mrb[0].mxu0
    %v1722 = vadd.f32 0.0, %v1721
    %v1723 = vpop.f32.mrb[0].mxu0
    %v1724 = vadd.f32 0.0, %v1723
    %v1725 = vpop.f32.mrb[0].mxu0
    %v1726 = vadd.f32 0.0, %v1725
    %v1727 = vpop.f32.mrb[0].mxu0
    %v1728 = vadd.f32 0.0, %v1727
    %1729 = vmatprep.mubr.bf16.mxu0 0
    %1730 = vmatmul.mubr.bf16.gmra.mrb[0].mxu0 %v1624
    %v1731 = vpop.f32.mrb[0].mxu0
    %v1732 = vadd.f32 0.0, %v1731
    %v1733 = vpop.f32.mrb[0].mxu0
    %v1734 = vadd.f32 0.0, %v1733
    %v1735 = vpop.f32.mrb[0].mxu0
    %v1736 = vadd.f32 0.0, %v1735
    %v1737 = vpop.f32.mrb[0].mxu0
    %v1738 = vadd.f32 0.0, %v1737
    %1739 = vmatprep.mubr.bf16.mxu0 0
    %1740 = vmatmul.mubr.bf16.gmra.mrb[0].mxu0 %v1627
    %v1741 = vpop.f32.mrb[0].mxu0
    %v1742 = vadd.f32 0.0, %v1741
    %v1743 = vpop.f32.mrb[0].mxu0
    %v1744 = vadd.f32 0.0, %v1743
    %v1745 = vpop.f32.mrb[0].mxu0
    %v1746 = vadd.f32 0.0, %v1745
    %v1747 = vpop.f32.mrb[0].mxu0
    %v1748 = vadd.f32 0.0, %v1747
    %1749 = vmatprep.mubr.bf16.mxu0 0
    %1750 = vmatmul.mubr.bf16.gmra.mrb[0].mxu0 %v1630
    %v1751 = vpop.f32.mrb[0].mxu0
    %v1752 = vadd.f32 0.0, %v1751
    %v1753 = vpop.f32.mrb[0].mxu0
    %v1754 = vadd.f32 0.0, %v1753
    %v1755 = vpop.f32.mrb[0].mxu0
    %v1756 = vadd.f32 0.0, %v1755
    %v1757 = vpop.f32.mrb[0].mxu0
    %v1758 = vadd.f32 0.0, %v1757
    %1759 = vmatprep.mubr.bf16.mxu0 0
    %1760 = vmatmul.mubr.bf16.gmra.mrb[0].mxu0 %v1633
    %v1761 = vpop.f32.mrb[0].mxu0
    %v1762 = vadd.f32 0.0, %v1761
    %v1763 = vpop.f32.mrb[0].mxu0
    %v1764 = vadd.f32 0.0, %v1763
    %v1765 = vpop.f32.mrb[0].mxu0
    %v1766 = vadd.f32 0.0, %v1765
    %v1767 = vpop.f32.mrb[0].mxu0
    %v1768 = vadd.f32 0.0, %v1767
    %1769 = vdwg.mxu0
    %1770 = vmatprep.subr.bf16.mxu0 %v1645
    %1771 = vmatpush1.bf16.msra.mxu0 %v1642
    %1772 = vmatprep.subr.bf16.mxu0 0
    %1773 = vmatpush1.bf16.msra.mxu0 0
    %1774 = vmatprep.subr.bf16.mxu0 0
    %1775 = vmatpush1.bf16.msra.mxu0 0
    %1776 = vmatprep.subr.bf16.mxu0 0
    %1777 = vmatpush1.bf16.msra.mxu0 0
    %1778 = vmatprep.subr.bf16.mxu0 0
    %1779 = vmatpush1.bf16.msra.mxu0 0
    %1780 = vmatprep.subr.bf16.mxu0 0
    %1781 = vmatpush1.bf16.msra.mxu0 0
    %1782 = vmatprep.subr.bf16.mxu0 0
    %1783 = vmatpush1.bf16.msra.mxu0 0
    %1784 = vmatprep.subr.bf16.mxu0 0
    %1785 = vmatpush1.bf16.msra.mxu0 0
    %1786 = vmatprep.subr.bf16.mxu0 0
    %1787 = vmatpush1.bf16.msra.mxu0 0
    %1788 = vmatprep.subr.bf16.mxu0 0
    %1789 = vmatpush1.bf16.msra.mxu0 0
    %1790 = vmatprep.subr.bf16.mxu0 0
    %1791 = vmatpush1.bf16.msra.mxu0 0
    %1792 = vmatprep.subr.bf16.mxu0 0
    %1793 = vmatpush1.bf16.msra.mxu0 0
    %1794 = vmatprep.subr.bf16.mxu0 0
    %1795 = vmatpush1.bf16.msra.mxu0 0
    %1796 = vmatprep.subr.bf16.mxu0 0
    %1797 = vmatpush1.bf16.msra.mxu0 0
    %1798 = vmatprep.subr.bf16.mxu0 0
    %1799 = vmatpush1.bf16.msra.mxu0 0
    %1800 = vmatprep.subr.bf16.mxu0 0
    %1801 = vmatpush1.bf16.msra.mxu0 0
    %1802 = vmatprep.mubr.bf16.mxu0 0
    %1803 = vmatmul.mubr.bf16.gmra.mrb[0].mxu0 %v1609
    %v1804 = vpop.f32.mrb[0].mxu0
    %v1805 = vadd.f32 0.0, %v1804
    %v1806 = vpop.f32.mrb[0].mxu0
    %v1807 = vadd.f32 0.0, %v1806
    %v1808 = vpop.f32.mrb[0].mxu0
    %v1809 = vadd.f32 0.0, %v1808
    %v1810 = vpop.f32.mrb[0].mxu0
    %v1811 = vadd.f32 0.0, %v1810
    %1812 = vmatprep.mubr.bf16.mxu0 0
    %1813 = vmatmul.mubr.bf16.gmra.mrb[0].mxu0 %v1612
    %v1814 = vpop.f32.mrb[0].mxu0
    %v1815 = vadd.f32 0.0, %v1814
    %v1816 = vpop.f32.mrb[0].mxu0
    %v1817 = vadd.f32 0.0, %v1816
    %v1818 = vpop.f32.mrb[0].mxu0
    %v1819 = vadd.f32 0.0, %v1818
    %v1820 = vpop.f32.mrb[0].mxu0
    %v1821 = vadd.f32 0.0, %v1820
    %1822 = vmatprep.mubr.bf16.mxu0 0
    %1823 = vmatmul.mubr.bf16.gmra.mrb[0].mxu0 %v1615
    %v1824 = vpop.f32.mrb[0].mxu0
    %v1825 = vadd.f32 0.0, %v1824
    %v1826 = vpop.f32.mrb[0].mxu0
    %v1827 = vadd.f32 0.0, %v1826
    %v1828 = vpop.f32.mrb[0].mxu0
    %v1829 = vadd.f32 0.0, %v1828
    %v1830 = vpop.f32.mrb[0].mxu0
    %v1831 = vadd.f32 0.0, %v1830
    %1832 = vmatprep.mubr.bf16.mxu0 0
    %1833 = vmatmul.mubr.bf16.gmra.mrb[0].mxu0 %v1618
    %v1834 = vpop.f32.mrb[0].mxu0
    %v1835 = vadd.f32 0.0, %v1834
    %v1836 = vpop.f32.mrb[0].mxu0
    %v1837 = vadd.f32 0.0, %v1836
    %v1838 = vpop.f32.mrb[0].mxu0
    %v1839 = vadd.f32 0.0, %v1838
    %v1840 = vpop.f32.mrb[0].mxu0
    %v1841 = vadd.f32 0.0, %v1840
    %1842 = vmatprep.mubr.bf16.mxu0 0
    %1843 = vmatmul.mubr.bf16.gmra.mrb[0].mxu0 %v1621
    %v1844 = vpop.f32.mrb[0].mxu0
    %v1845 = vadd.f32 0.0, %v1844
    %v1846 = vpop.f32.mrb[0].mxu0
    %v1847 = vadd.f32 0.0, %v1846
    %v1848 = vpop.f32.mrb[0].mxu0
    %v1849 = vadd.f32 0.0, %v1848
    %v1850 = vpop.f32.mrb[0].mxu0
    %v1851 = vadd.f32 0.0, %v1850
    %1852 = vmatprep.mubr.bf16.mxu0 0
    %1853 = vmatmul.mubr.bf16.gmra.mrb[0].mxu0 %v1624
    %v1854 = vpop.f32.mrb[0].mxu0
    %v1855 = vadd.f32 0.0, %v1854
    %v1856 = vpop.f32.mrb[0].mxu0
    %v1857 = vadd.f32 0.0, %v1856
    %v1858 = vpop.f32.mrb[0].mxu0
    %v1859 = vadd.f32 0.0, %v1858
    %v1860 = vpop.f32.mrb[0].mxu0
    %v1861 = vadd.f32 0.0, %v1860
    %1862 = vmatprep.mubr.bf16.mxu0 0
    %1863 = vmatmul.mubr.bf16.gmra.mrb[0].mxu0 %v1627
    %v1864 = vpop.f32.mrb[0].mxu0
    %v1865 = vadd.f32 0.0, %v1864
    %v1866 = vpop.f32.mrb[0].mxu0
    %v1867 = vadd.f32 0.0, %v1866
    %v1868 = vpop.f32.mrb[0].mxu0
    %v1869 = vadd.f32 0.0, %v1868
    %v1870 = vpop.f32.mrb[0].mxu0
    %v1871 = vadd.f32 0.0, %v1870
    %1872 = vmatprep.mubr.bf16.mxu0 0
    %1873 = vmatmul.mubr.bf16.gmra.mrb[0].mxu0 %v1630
    %v1874 = vpop.f32.mrb[0].mxu0
    %v1875 = vadd.f32 0.0, %v1874
    %v1876 = vpop.f32.mrb[0].mxu0
    %v1877 = vadd.f32 0.0, %v1876
    %v1878 = vpop.f32.mrb[0].mxu0
    %v1879 = vadd.f32 0.0, %v1878
    %v1880 = vpop.f32.mrb[0].mxu0
    %v1881 = vadd.f32 0.0, %v1880
    %1882 = vmatprep.mubr.bf16.mxu0 0
    %1883 = vmatmul.mubr.bf16.gmra.mrb[0].mxu0 %v1633
    %v1884 = vpop.f32.mrb[0].mxu0
    %v1885 = vadd.f32 0.0, %v1884
    %v1886 = vpop.f32.mrb[0].mxu0
    %v1887 = vadd.f32 0.0, %v1886
    %v1888 = vpop.f32.mrb[0].mxu0
    %v1889 = vadd.f32 0.0, %v1888
    %v1890 = vpop.f32.mrb[0].mxu0
    %v1891 = vadd.f32 0.0, %v1890
    %1892 = vdwg.mxu0
    %v1893 = vadd.f32 %v1497, %v1682
    %v1894 = vadd.f32 %v1498, %v1684
    %v1895 = vadd.f32 %v1499, %v1805
    %v1896 = vadd.f32 %v1500, %v1807
    %v1897 = vadd.f32 %v1501, %v1686
    %v1898 = vadd.f32 %v1502, %v1688
    %v1899 = vadd.f32 %v1503, %v1809
    %v1900 = vadd.f32 %v1504, %v1811
    %v1901 = vadd.f32 %v1505, %v1692
    %v1902 = vadd.f32 %v1506, %v1694
    %v1903 = vadd.f32 %v1507, %v1815
    %v1904 = vadd.f32 %v1508, %v1817
    %v1905 = vadd.f32 %v1509, %v1696
    %v1906 = vadd.f32 %v1510, %v1698
    %v1907 = vadd.f32 %v1511, %v1819
    %v1908 = vadd.f32 %v1512, %v1821
    %v1909 = vadd.f32 %v1513, %v1702
    %v1910 = vadd.f32 %v1514, %v1704
    %v1911 = vadd.f32 %v1515, %v1825
    %v1912 = vadd.f32 %v1516, %v1827
    %v1913 = vadd.f32 %v1517, %v1706
    %v1914 = vadd.f32 %v1518, %v1708
    %v1915 = vadd.f32 %v1519, %v1829
    %v1916 = vadd.f32 %v1520, %v1831
    %v1917 = vadd.f32 %v1521, %v1712
    %v1918 = vadd.f32 %v1522, %v1714
    %v1919 = vadd.f32 %v1523, %v1835
    %v1920 = vadd.f32 %v1524, %v1837
    %v1921 = vadd.f32 %v1525, %v1716
    %v1922 = vadd.f32 %v1526, %v1718
    %v1923 = vadd.f32 %v1527, %v1839
    %v1924 = vadd.f32 %v1528, %v1841
    %v1925 = vadd.f32 %v1529, %v1722
    %v1926 = vadd.f32 %v1530, %v1724
    %v1927 = vadd.f32 %v1531, %v1845
    %v1928 = vadd.f32 %v1532, %v1847
    %v1929 = vadd.f32 %v1533, %v1726
    %v1930 = vadd.f32 %v1534, %v1728
    %v1931 = vadd.f32 %v1535, %v1849
    %v1932 = vadd.f32 %v1536, %v1851
    %v1933 = vadd.f32 %v1537, %v1732
    %v1934 = vadd.f32 %v1538, %v1734
    %v1935 = vadd.f32 %v1539, %v1855
    %v1936 = vadd.f32 %v1540, %v1857
    %v1937 = vadd.f32 %v1541, %v1736
    %v1938 = vadd.f32 %v1542, %v1738
    %v1939 = vadd.f32 %v1543, %v1859
    %v1940 = vadd.f32 %v1544, %v1861
    %v1941 = vadd.f32 %v1545, %v1742
    %v1942 = vadd.f32 %v1546, %v1744
    %v1943 = vadd.f32 %v1547, %v1865
    %v1944 = vadd.f32 %v1548, %v1867
    %v1945 = vadd.f32 %v1549, %v1746
    %v1946 = vadd.f32 %v1550, %v1748
    %v1947 = vadd.f32 %v1551, %v1869
    %v1948 = vadd.f32 %v1552, %v1871
    %v1949 = vadd.f32 %v1553, %v1752
    %v1950 = vadd.f32 %v1554, %v1754
    %v1951 = vadd.f32 %v1555, %v1875
    %v1952 = vadd.f32 %v1556, %v1877
    %v1953 = vadd.f32 %v1557, %v1756
    %v1954 = vadd.f32 %v1558, %v1758
    %v1955 = vadd.f32 %v1559, %v1879
    %v1956 = vadd.f32 %v1560, %v1881
    %v1957 = vadd.f32 %v1561, %v1762
    %v1958 = vadd.f32 %v1562, %v1764
    %v1959 = vadd.f32 %v1563, %v1885
    %v1960 = vadd.f32 %v1564, %v1887
    %v1961 = vadd.f32 %v1565, %v1766
    %v1962 = vadd.f32 %v1566, %v1768
    %v1963 = vadd.f32 %v1567, %v1889
    %v1964 = vadd.f32 %v1568, %v1891
    %v1965 = vld [vmem:[#allocation2 + $0x8] sm:$0xff]
    %v1966 = vld [vmem:[#allocation2 + $0x10] sm:$0xff]
    %v1967 = vld [vmem:[#allocation2 + $0x18] sm:$0xff]
    %v1968 = vld [vmem:[#allocation2 + $0x20] sm:$0xff]
    %v1969 = vld [vmem:[#allocation2 + $0x28] sm:$0xff]
    %v1970 = vld [vmem:[#allocation2 + $0x30] sm:$0xff]
    %v1971 = vld [vmem:[#allocation2 + $0x38] sm:$0xff]
    %v1972 = vld [vmem:[#allocation2 + $0x40] sm:$0xff]
    %v1973 = vld [vmem:[#allocation2 + $0x48] sm:$0xff]
    %v1974 = vld [vmem:[#allocation2 + $0x50] sm:$0xff]
    %v1975 = vld [vmem:[#allocation2 + $0x58] sm:$0xff]
    %v1976 = vld [vmem:[#allocation2 + $0x60] sm:$0xff]
    %v1977 = vld [vmem:[#allocation2 + $0x68] sm:$0xff]
    %v1978 = vld [vmem:[#allocation2 + $0x70] sm:$0xff]
    %v1979 = vld [vmem:[#allocation2 + $0x78] sm:$0xff]
    %v1980 = vld [vmem:[#allocation2 + $0x80] sm:$0xff]
    %v1981 = vld [vmem:[#allocation2 + $0x88] sm:$0xff]
    %v1982 = vld [vmem:[#allocation2 + $0x90] sm:$0xff]
    %v1983 = vpack.c.bf16 %v1966, %v1965
    %v1984 = vpack.c.bf16 %v1968, %v1967
    %v1985 = vpack.c.bf16 %v1970, %v1969
    %v1986 = vpack.c.bf16 %v1972, %v1971
    %v1987 = vpack.c.bf16 %v1974, %v1973
    %v1988 = vpack.c.bf16 %v1976, %v1975
    %v1989 = vpack.c.bf16 %v1978, %v1977
    %v1990 = vpack.c.bf16 %v1980, %v1979
    %v1991 = vpack.c.bf16 %v1982, %v1981
    %v1992 = vld [vmem:[%s2 + $0x50] sm:$0xff]
    %v1993 = vld [vmem:[%s2 + $0x58] sm:$0xff]
    %v1996 = vunpack.c.l.b16 %v1992
    %v1997 = vunpack.c.h.b16 %v1992
    %v1998 = vunpack.c.l.b16 %v1993
    %v1999 = vunpack.c.h.b16 %v1993
    %v2000 = vpack.c.b16 %v1996, %v1996
    %v2001 = vpack.c.b16 %v1997, %v1997
    %v2002 = vpack.c.b16 %v1998, %v1998
    %v2003 = vpack.c.b16 %v1999, %v1999
    %v2005 = vsel %vm82, %v1983, 0
    %v2008 = vsel %vm82, %v1984, 0
    %v2011 = vsel %vm82, %v1985, 0
    %v2014 = vsel %vm82, %v1986, 0
    %v2017 = vsel %vm82, %v1987, 0
    %v2020 = vsel %vm82, %v1988, 0
    %v2023 = vsel %vm82, %v1989, 0
    %v2026 = vsel %vm82, %v1990, 0
    %v2029 = vsel %vm82, %v1991, 0
    %v2032 = vsel %vm223, %v2000, 0
    %v2035 = vsel %vm223, %v2001, 0
    %v2038 = vsel %vm223, %v2002, 0
    %v2041 = vsel %vm223, %v2003, 0
    %2043 = vmatprep.subr.bf16.mxu0 %v2035
    %2044 = vmatpush1.bf16.msra.mxu0 %v2032
    %2045 = vmatprep.subr.bf16.mxu0 0
    %2046 = vmatpush1.bf16.msra.mxu0 0
    %2047 = vmatprep.subr.bf16.mxu0 0
    %2048 = vmatpush1.bf16.msra.mxu0 0
    %2049 = vmatprep.subr.bf16.mxu0 0
    %2050 = vmatpush1.bf16.msra.mxu0 0
    %2051 = vmatprep.subr.bf16.mxu0 0
    %2052 = vmatpush1.bf16.msra.mxu0 0
    %2053 = vmatprep.subr.bf16.mxu0 0
    %2054 = vmatpush1.bf16.msra.mxu0 0
    %2055 = vmatprep.subr.bf16.mxu0 0
    %2056 = vmatpush1.bf16.msra.mxu0 0
    %2057 = vmatprep.subr.bf16.mxu0 0
    %2058 = vmatpush1.bf16.msra.mxu0 0
    %2059 = vmatprep.subr.bf16.mxu0 0
    %2060 = vmatpush1.bf16.msra.mxu0 0
    %2061 = vmatprep.subr.bf16.mxu0 0
    %2062 = vmatpush1.bf16.msra.mxu0 0
    %2063 = vmatprep.subr.bf16.mxu0 0
    %2064 = vmatpush1.bf16.msra.mxu0 0
    %2065 = vmatprep.subr.bf16.mxu0 0
    %2066 = vmatpush1.bf16.msra.mxu0 0
    %2067 = vmatprep.subr.bf16.mxu0 0
    %2068 = vmatpush1.bf16.msra.mxu0 0
    %2069 = vmatprep.subr.bf16.mxu0 0
    %2070 = vmatpush1.bf16.msra.mxu0 0
    %2071 = vmatprep.subr.bf16.mxu0 0
    %2072 = vmatpush1.bf16.msra.mxu0 0
    %2073 = vmatprep.subr.bf16.mxu0 0
    %2074 = vmatpush1.bf16.msra.mxu0 0
    %2075 = vmatprep.mubr.bf16.mxu0 0
    %2076 = vmatmul.mubr.bf16.gmra.mrb[0].mxu0 %v2005
    %v2077 = vpop.f32.mrb[0].mxu0
    %v2078 = vadd.f32 0.0, %v2077
    %v2079 = vpop.f32.mrb[0].mxu0
    %v2080 = vadd.f32 0.0, %v2079
    %v2081 = vpop.f32.mrb[0].mxu0
    %v2082 = vadd.f32 0.0, %v2081
    %v2083 = vpop.f32.mrb[0].mxu0
    %v2084 = vadd.f32 0.0, %v2083
    %2085 = vmatprep.mubr.bf16.mxu0 0
    %2086 = vmatmul.mubr.bf16.gmra.mrb[0].mxu0 %v2008
    %v2087 = vpop.f32.mrb[0].mxu0
    %v2088 = vadd.f32 0.0, %v2087
    %v2089 = vpop.f32.mrb[0].mxu0
    %v2090 = vadd.f32 0.0, %v2089
    %v2091 = vpop.f32.mrb[0].mxu0
    %v2092 = vadd.f32 0.0, %v2091
    %v2093 = vpop.f32.mrb[0].mxu0
    %v2094 = vadd.f32 0.0, %v2093
    %2095 = vmatprep.mubr.bf16.mxu0 0
    %2096 = vmatmul.mubr.bf16.gmra.mrb[0].mxu0 %v2011
    %v2097 = vpop.f32.mrb[0].mxu0
    %v2098 = vadd.f32 0.0, %v2097
    %v2099 = vpop.f32.mrb[0].mxu0
    %v2100 = vadd.f32 0.0, %v2099
    %v2101 = vpop.f32.mrb[0].mxu0
    %v2102 = vadd.f32 0.0, %v2101
    %v2103 = vpop.f32.mrb[0].mxu0
    %v2104 = vadd.f32 0.0, %v2103
    %2105 = vmatprep.mubr.bf16.mxu0 0
    %2106 = vmatmul.mubr.bf16.gmra.mrb[0].mxu0 %v2014
    %v2107 = vpop.f32.mrb[0].mxu0
    %v2108 = vadd.f32 0.0, %v2107
    %v2109 = vpop.f32.mrb[0].mxu0
    %v2110 = vadd.f32 0.0, %v2109
    %v2111 = vpop.f32.mrb[0].mxu0
    %v2112 = vadd.f32 0.0, %v2111
    %v2113 = vpop.f32.mrb[0].mxu0
    %v2114 = vadd.f32 0.0, %v2113
    %2115 = vmatprep.mubr.bf16.mxu0 0
    %2116 = vmatmul.mubr.bf16.gmra.mrb[0].mxu0 %v2017
    %v2117 = vpop.f32.mrb[0].mxu0
    %v2118 = vadd.f32 0.0, %v2117
    %v2119 = vpop.f32.mrb[0].mxu0
    %v2120 = vadd.f32 0.0, %v2119
    %v2121 = vpop.f32.mrb[0].mxu0
    %v2122 = vadd.f32 0.0, %v2121
    %v2123 = vpop.f32.mrb[0].mxu0
    %v2124 = vadd.f32 0.0, %v2123
    %2125 = vmatprep.mubr.bf16.mxu0 0
    %2126 = vmatmul.mubr.bf16.gmra.mrb[0].mxu0 %v2020
    %v2127 = vpop.f32.mrb[0].mxu0
    %v2128 = vadd.f32 0.0, %v2127
    %v2129 = vpop.f32.mrb[0].mxu0
    %v2130 = vadd.f32 0.0, %v2129
    %v2131 = vpop.f32.mrb[0].mxu0
    %v2132 = vadd.f32 0.0, %v2131
    %v2133 = vpop.f32.mrb[0].mxu0
    %v2134 = vadd.f32 0.0, %v2133
    %2135 = vmatprep.mubr.bf16.mxu0 0
    %2136 = vmatmul.mubr.bf16.gmra.mrb[0].mxu0 %v2023
    %v2137 = vpop.f32.mrb[0].mxu0
    %v2138 = vadd.f32 0.0, %v2137
    %v2139 = vpop.f32.mrb[0].mxu0
    %v2140 = vadd.f32 0.0, %v2139
    %v2141 = vpop.f32.mrb[0].mxu0
    %v2142 = vadd.f32 0.0, %v2141
    %v2143 = vpop.f32.mrb[0].mxu0
    %v2144 = vadd.f32 0.0, %v2143
    %2145 = vmatprep.mubr.bf16.mxu0 0
    %2146 = vmatmul.mubr.bf16.gmra.mrb[0].mxu0 %v2026
    %v2147 = vpop.f32.mrb[0].mxu0
    %v2148 = vadd.f32 0.0, %v2147
    %v2149 = vpop.f32.mrb[0].mxu0
    %v2150 = vadd.f32 0.0, %v2149
    %v2151 = vpop.f32.mrb[0].mxu0
    %v2152 = vadd.f32 0.0, %v2151
    %v2153 = vpop.f32.mrb[0].mxu0
    %v2154 = vadd.f32 0.0, %v2153
    %2155 = vmatprep.mubr.bf16.mxu0 0
    %2156 = vmatmul.mubr.bf16.gmra.mrb[0].mxu0 %v2029
    %v2157 = vpop.f32.mrb[0].mxu0
    %v2158 = vadd.f32 0.0, %v2157
    %v2159 = vpop.f32.mrb[0].mxu0
    %v2160 = vadd.f32 0.0, %v2159
    %v2161 = vpop.f32.mrb[0].mxu0
    %v2162 = vadd.f32 0.0, %v2161
    %v2163 = vpop.f32.mrb[0].mxu0
    %v2164 = vadd.f32 0.0, %v2163
    %2165 = vdwg.mxu0
    %2166 = vmatprep.subr.bf16.mxu0 %v2041
    %2167 = vmatpush1.bf16.msra.mxu0 %v2038
    %2168 = vmatprep.subr.bf16.mxu0 0
    %2169 = vmatpush1.bf16.msra.mxu0 0
    %2170 = vmatprep.subr.bf16.mxu0 0
    %2171 = vmatpush1.bf16.msra.mxu0 0
    %2172 = vmatprep.subr.bf16.mxu0 0
    %2173 = vmatpush1.bf16.msra.mxu0 0
    %2174 = vmatprep.subr.bf16.mxu0 0
    %2175 = vmatpush1.bf16.msra.mxu0 0
    %2176 = vmatprep.subr.bf16.mxu0 0
    %2177 = vmatpush1.bf16.msra.mxu0 0
    %2178 = vmatprep.subr.bf16.mxu0 0
    %2179 = vmatpush1.bf16.msra.mxu0 0
    %2180 = vmatprep.subr.bf16.mxu0 0
    %2181 = vmatpush1.bf16.msra.mxu0 0
    %2182 = vmatprep.subr.bf16.mxu0 0
    %2183 = vmatpush1.bf16.msra.mxu0 0
    %2184 = vmatprep.subr.bf16.mxu0 0
    %2185 = vmatpush1.bf16.msra.mxu0 0
    %2186 = vmatprep.subr.bf16.mxu0 0
    %2187 = vmatpush1.bf16.msra.mxu0 0
    %2188 = vmatprep.subr.bf16.mxu0 0
    %2189 = vmatpush1.bf16.msra.mxu0 0
    %2190 = vmatprep.subr.bf16.mxu0 0
    %2191 = vmatpush1.bf16.msra.mxu0 0
    %2192 = vmatprep.subr.bf16.mxu0 0
    %2193 = vmatpush1.bf16.msra.mxu0 0
    %2194 = vmatprep.subr.bf16.mxu0 0
    %2195 = vmatpush1.bf16.msra.mxu0 0
    %2196 = vmatprep.subr.bf16.mxu0 0
    %2197 = vmatpush1.bf16.msra.mxu0 0
    %2198 = vmatprep.mubr.bf16.mxu0 0
    %2199 = vmatmul.mubr.bf16.gmra.mrb[0].mxu0 %v2005
    %v2200 = vpop.f32.mrb[0].mxu0
    %v2201 = vadd.f32 0.0, %v2200
    %v2202 = vpop.f32.mrb[0].mxu0
    %v2203 = vadd.f32 0.0, %v2202
    %v2204 = vpop.f32.mrb[0].mxu0
    %v2205 = vadd.f32 0.0, %v2204
    %v2206 = vpop.f32.mrb[0].mxu0
    %v2207 = vadd.f32 0.0, %v2206
    %2208 = vmatprep.mubr.bf16.mxu0 0
    %2209 = vmatmul.mubr.bf16.gmra.mrb[0].mxu0 %v2008
    %v2210 = vpop.f32.mrb[0].mxu0
    %v2211 = vadd.f32 0.0, %v2210
    %v2212 = vpop.f32.mrb[0].mxu0
    %v2213 = vadd.f32 0.0, %v2212
    %v2214 = vpop.f32.mrb[0].mxu0
    %v2215 = vadd.f32 0.0, %v2214
    %v2216 = vpop.f32.mrb[0].mxu0
    %v2217 = vadd.f32 0.0, %v2216
    %2218 = vmatprep.mubr.bf16.mxu0 0
    %2219 = vmatmul.mubr.bf16.gmra.mrb[0].mxu0 %v2011
    %v2220 = vpop.f32.mrb[0].mxu0
    %v2221 = vadd.f32 0.0, %v2220
    %v2222 = vpop.f32.mrb[0].mxu0
    %v2223 = vadd.f32 0.0, %v2222
    %v2224 = vpop.f32.mrb[0].mxu0
    %v2225 = vadd.f32 0.0, %v2224
    %v2226 = vpop.f32.mrb[0].mxu0
    %v2227 = vadd.f32 0.0, %v2226
    %2228 = vmatprep.mubr.bf16.mxu0 0
    %2229 = vmatmul.mubr.bf16.gmra.mrb[0].mxu0 %v2014
    %v2230 = vpop.f32.mrb[0].mxu0
    %v2231 = vadd.f32 0.0, %v2230
    %v2232 = vpop.f32.mrb[0].mxu0
    %v2233 = vadd.f32 0.0, %v2232
    %v2234 = vpop.f32.mrb[0].mxu0
    %v2235 = vadd.f32 0.0, %v2234
    %v2236 = vpop.f32.mrb[0].mxu0
    %v2237 = vadd.f32 0.0, %v2236
    %2238 = vmatprep.mubr.bf16.mxu0 0
    %2239 = vmatmul.mubr.bf16.gmra.mrb[0].mxu0 %v2017
    %v2240 = vpop.f32.mrb[0].mxu0
    %v2241 = vadd.f32 0.0, %v2240
    %v2242 = vpop.f32.mrb[0].mxu0
    %v2243 = vadd.f32 0.0, %v2242
    %v2244 = vpop.f32.mrb[0].mxu0
    %v2245 = vadd.f32 0.0, %v2244
    %v2246 = vpop.f32.mrb[0].mxu0
    %v2247 = vadd.f32 0.0, %v2246
    %2248 = vmatprep.mubr.bf16.mxu0 0
    %2249 = vmatmul.mubr.bf16.gmra.mrb[0].mxu0 %v2020
    %v2250 = vpop.f32.mrb[0].mxu0
    %v2251 = vadd.f32 0.0, %v2250
    %v2252 = vpop.f32.mrb[0].mxu0
    %v2253 = vadd.f32 0.0, %v2252
    %v2254 = vpop.f32.mrb[0].mxu0
    %v2255 = vadd.f32 0.0, %v2254
    %v2256 = vpop.f32.mrb[0].mxu0
    %v2257 = vadd.f32 0.0, %v2256
    %2258 = vmatprep.mubr.bf16.mxu0 0
    %2259 = vmatmul.mubr.bf16.gmra.mrb[0].mxu0 %v2023
    %v2260 = vpop.f32.mrb[0].mxu0
    %v2261 = vadd.f32 0.0, %v2260
    %v2262 = vpop.f32.mrb[0].mxu0
    %v2263 = vadd.f32 0.0, %v2262
    %v2264 = vpop.f32.mrb[0].mxu0
    %v2265 = vadd.f32 0.0, %v2264
    %v2266 = vpop.f32.mrb[0].mxu0
    %v2267 = vadd.f32 0.0, %v2266
    %2268 = vmatprep.mubr.bf16.mxu0 0
    %2269 = vmatmul.mubr.bf16.gmra.mrb[0].mxu0 %v2026
    %v2270 = vpop.f32.mrb[0].mxu0
    %v2271 = vadd.f32 0.0, %v2270
    %v2272 = vpop.f32.mrb[0].mxu0
    %v2273 = vadd.f32 0.0, %v2272
    %v2274 = vpop.f32.mrb[0].mxu0
    %v2275 = vadd.f32 0.0, %v2274
    %v2276 = vpop.f32.mrb[0].mxu0
    %v2277 = vadd.f32 0.0, %v2276
    %2278 = vmatprep.mubr.bf16.mxu0 0
    %2279 = vmatmul.mubr.bf16.gmra.mrb[0].mxu0 %v2029
    %v2280 = vpop.f32.mrb[0].mxu0
    %v2281 = vadd.f32 0.0, %v2280
    %v2282 = vpop.f32.mrb[0].mxu0
    %v2283 = vadd.f32 0.0, %v2282
    %v2284 = vpop.f32.mrb[0].mxu0
    %v2285 = vadd.f32 0.0, %v2284
    %v2286 = vpop.f32.mrb[0].mxu0
    %v2287 = vadd.f32 0.0, %v2286
    %2288 = vdwg.mxu0
    %v2289 = vadd.f32 %v1893, %v2078
    %v2290 = vadd.f32 %v1894, %v2080
    %v2291 = vadd.f32 %v1895, %v2201
    %v2292 = vadd.f32 %v1896, %v2203
    %v2293 = vadd.f32 %v1897, %v2082
    %v2294 = vadd.f32 %v1898, %v2084
    %v2295 = vadd.f32 %v1899, %v2205
    %v2296 = vadd.f32 %v1900, %v2207
    %v2297 = vadd.f32 %v1901, %v2088
    %v2298 = vadd.f32 %v1902, %v2090
    %v2299 = vadd.f32 %v1903, %v2211
    %v2300 = vadd.f32 %v1904, %v2213
    %v2301 = vadd.f32 %v1905, %v2092
    %v2302 = vadd.f32 %v1906, %v2094
    %v2303 = vadd.f32 %v1907, %v2215
    %v2304 = vadd.f32 %v1908, %v2217
    %v2305 = vadd.f32 %v1909, %v2098
    %v2306 = vadd.f32 %v1910, %v2100
    %v2307 = vadd.f32 %v1911, %v2221
    %v2308 = vadd.f32 %v1912, %v2223
    %v2309 = vadd.f32 %v1913, %v2102
    %v2310 = vadd.f32 %v1914, %v2104
    %v2311 = vadd.f32 %v1915, %v2225
    %v2312 = vadd.f32 %v1916, %v2227
    %v2313 = vadd.f32 %v1917, %v2108
    %v2314 = vadd.f32 %v1918, %v2110
    %v2315 = vadd.f32 %v1919, %v2231
    %v2316 = vadd.f32 %v1920, %v2233
    %v2317 = vadd.f32 %v1921, %v2112
    %v2318 = vadd.f32 %v1922, %v2114
    %v2319 = vadd.f32 %v1923, %v2235
    %v2320 = vadd.f32 %v1924, %v2237
    %v2321 = vadd.f32 %v1925, %v2118
    %v2322 = vadd.f32 %v1926, %v2120
    %v2323 = vadd.f32 %v1927, %v2241
    %v2324 = vadd.f32 %v1928, %v2243
    %v2325 = vadd.f32 %v1929, %v2122
    %v2326 = vadd.f32 %v1930, %v2124
    %v2327 = vadd.f32 %v1931, %v2245
    %v2328 = vadd.f32 %v1932, %v2247
    %v2329 = vadd.f32 %v1933, %v2128
    %v2330 = vadd.f32 %v1934, %v2130
    %v2331 = vadd.f32 %v1935, %v2251
    %v2332 = vadd.f32 %v1936, %v2253
    %v2333 = vadd.f32 %v1937, %v2132
    %v2334 = vadd.f32 %v1938, %v2134
    %v2335 = vadd.f32 %v1939, %v2255
    %v2336 = vadd.f32 %v1940, %v2257
    %v2337 = vadd.f32 %v1941, %v2138
    %v2338 = vadd.f32 %v1942, %v2140
    %v2339 = vadd.f32 %v1943, %v2261
    %v2340 = vadd.f32 %v1944, %v2263
    %v2341 = vadd.f32 %v1945, %v2142
    %v2342 = vadd.f32 %v1946, %v2144
    %v2343 = vadd.f32 %v1947, %v2265
    %v2344 = vadd.f32 %v1948, %v2267
    %v2345 = vadd.f32 %v1949, %v2148
    %v2346 = vadd.f32 %v1950, %v2150
    %v2347 = vadd.f32 %v1951, %v2271
    %v2348 = vadd.f32 %v1952, %v2273
    %v2349 = vadd.f32 %v1953, %v2152
    %v2350 = vadd.f32 %v1954, %v2154
    %v2351 = vadd.f32 %v1955, %v2275
    %v2352 = vadd.f32 %v1956, %v2277
    %v2353 = vadd.f32 %v1957, %v2158
    %v2354 = vadd.f32 %v1958, %v2160
    %v2355 = vadd.f32 %v1959, %v2281
    %v2356 = vadd.f32 %v1960, %v2283
    %v2357 = vadd.f32 %v1961, %v2162
    %v2358 = vadd.f32 %v1962, %v2164
    %v2359 = vadd.f32 %v1963, %v2285
    %v2360 = vadd.f32 %v1964, %v2287
    %v2361 = vld [vmem:[#allocation2 + $0xc] sm:$0xff]
    %v2362 = vld [vmem:[#allocation2 + $0x14] sm:$0xff]
    %v2363 = vld [vmem:[#allocation2 + $0x1c] sm:$0xff]
    %v2364 = vld [vmem:[#allocation2 + $0x24] sm:$0xff]
    %v2365 = vld [vmem:[#allocation2 + $0x2c] sm:$0xff]
    %v2366 = vld [vmem:[#allocation2 + $0x34] sm:$0xff]
    %v2367 = vld [vmem:[#allocation2 + $0x3c] sm:$0xff]
    %v2368 = vld [vmem:[#allocation2 + $0x44] sm:$0xff]
    %v2369 = vld [vmem:[#allocation2 + $0x4c] sm:$0xff]
    %v2370 = vld [vmem:[#allocation2 + $0x54] sm:$0xff]
    %v2371 = vld [vmem:[#allocation2 + $0x5c] sm:$0xff]
    %v2372 = vld [vmem:[#allocation2 + $0x64] sm:$0xff]
    %v2373 = vld [vmem:[#allocation2 + $0x6c] sm:$0xff]
    %v2374 = vld [vmem:[#allocation2 + $0x74] sm:$0xff]
    %v2375 = vld [vmem:[#allocation2 + $0x7c] sm:$0xff]
    %v2376 = vld [vmem:[#allocation2 + $0x84] sm:$0xff]
    %v2377 = vld [vmem:[#allocation2 + $0x8c] sm:$0xff]
    %v2378 = vld [vmem:[#allocation2 + $0x94] sm:$0xff]
    %v2379 = vpack.c.bf16 %v2362, %v2361
    %v2380 = vpack.c.bf16 %v2364, %v2363
    %v2381 = vpack.c.bf16 %v2366, %v2365
    %v2382 = vpack.c.bf16 %v2368, %v2367
    %v2383 = vpack.c.bf16 %v2370, %v2369
    %v2384 = vpack.c.bf16 %v2372, %v2371
    %v2385 = vpack.c.bf16 %v2374, %v2373
    %v2386 = vpack.c.bf16 %v2376, %v2375
    %v2387 = vpack.c.bf16 %v2378, %v2377
    %v2388 = vld [vmem:[%s2 + $0x60] sm:$0xff]
    %v2389 = vld [vmem:[%s2 + $0x68] sm:$0xff]
    %v2392 = vunpack.c.l.b16 %v2388
    %v2393 = vunpack.c.h.b16 %v2388
    %v2394 = vunpack.c.l.b16 %v2389
    %v2395 = vunpack.c.h.b16 %v2389
    %v2396 = vpack.c.b16 %v2392, %v2392
    %v2397 = vpack.c.b16 %v2393, %v2393
    %v2398 = vpack.c.b16 %v2394, %v2394
    %v2399 = vpack.c.b16 %v2395, %v2395
    %v2401 = vsel %vm82, %v2379, 0
    %v2404 = vsel %vm82, %v2380, 0
    %v2407 = vsel %vm82, %v2381, 0
    %v2410 = vsel %vm82, %v2382, 0
    %v2413 = vsel %vm82, %v2383, 0
    %v2416 = vsel %vm82, %v2384, 0
    %v2419 = vsel %vm82, %v2385, 0
    %v2422 = vsel %vm82, %v2386, 0
    %v2425 = vsel %vm82, %v2387, 0
    %v2428 = vsel %vm223, %v2396, 0
    %v2431 = vsel %vm223, %v2397, 0
    %v2434 = vsel %vm223, %v2398, 0
    %v2437 = vsel %vm223, %v2399, 0
    %2439 = vmatprep.subr.bf16.mxu0 %v2431
    %2440 = vmatpush1.bf16.msra.mxu0 %v2428
    %2441 = vmatprep.subr.bf16.mxu0 0
    %2442 = vmatpush1.bf16.msra.mxu0 0
    %2443 = vmatprep.subr.bf16.mxu0 0
    %2444 = vmatpush1.bf16.msra.mxu0 0
    %2445 = vmatprep.subr.bf16.mxu0 0
    %2446 = vmatpush1.bf16.msra.mxu0 0
    %2447 = vmatprep.subr.bf16.mxu0 0
    %2448 = vmatpush1.bf16.msra.mxu0 0
    %2449 = vmatprep.subr.bf16.mxu0 0
    %2450 = vmatpush1.bf16.msra.mxu0 0
    %2451 = vmatprep.subr.bf16.mxu0 0
    %2452 = vmatpush1.bf16.msra.mxu0 0
    %2453 = vmatprep.subr.bf16.mxu0 0
    %2454 = vmatpush1.bf16.msra.mxu0 0
    %2455 = vmatprep.subr.bf16.mxu0 0
    %2456 = vmatpush1.bf16.msra.mxu0 0
    %2457 = vmatprep.subr.bf16.mxu0 0
    %2458 = vmatpush1.bf16.msra.mxu0 0
    %2459 = vmatprep.subr.bf16.mxu0 0
    %2460 = vmatpush1.bf16.msra.mxu0 0
    %2461 = vmatprep.subr.bf16.mxu0 0
    %2462 = vmatpush1.bf16.msra.mxu0 0
    %2463 = vmatprep.subr.bf16.mxu0 0
    %2464 = vmatpush1.bf16.msra.mxu0 0
    %2465 = vmatprep.subr.bf16.mxu0 0
    %2466 = vmatpush1.bf16.msra.mxu0 0
    %2467 = vmatprep.subr.bf16.mxu0 0
    %2468 = vmatpush1.bf16.msra.mxu0 0
    %2469 = vmatprep.subr.bf16.mxu0 0
    %2470 = vmatpush1.bf16.msra.mxu0 0
    %2471 = vmatprep.mubr.bf16.mxu0 0
    %2472 = vmatmul.mubr.bf16.gmra.mrb[0].mxu0 %v2401
    %v2473 = vpop.f32.mrb[0].mxu0
    %v2474 = vadd.f32 0.0, %v2473
    %v2475 = vpop.f32.mrb[0].mxu0
    %v2476 = vadd.f32 0.0, %v2475
    %v2477 = vpop.f32.mrb[0].mxu0
    %v2478 = vadd.f32 0.0, %v2477
    %v2479 = vpop.f32.mrb[0].mxu0
    %v2480 = vadd.f32 0.0, %v2479
    %2481 = vmatprep.mubr.bf16.mxu0 0
    %2482 = vmatmul.mubr.bf16.gmra.mrb[0].mxu0 %v2404
    %v2483 = vpop.f32.mrb[0].mxu0
    %v2484 = vadd.f32 0.0, %v2483
    %v2485 = vpop.f32.mrb[0].mxu0
    %v2486 = vadd.f32 0.0, %v2485
    %v2487 = vpop.f32.mrb[0].mxu0
    %v2488 = vadd.f32 0.0, %v2487
    %v2489 = vpop.f32.mrb[0].mxu0
    %v2490 = vadd.f32 0.0, %v2489
    %2491 = vmatprep.mubr.bf16.mxu0 0
    %2492 = vmatmul.mubr.bf16.gmra.mrb[0].mxu0 %v2407
    %v2493 = vpop.f32.mrb[0].mxu0
    %v2494 = vadd.f32 0.0, %v2493
    %v2495 = vpop.f32.mrb[0].mxu0
    %v2496 = vadd.f32 0.0, %v2495
    %v2497 = vpop.f32.mrb[0].mxu0
    %v2498 = vadd.f32 0.0, %v2497
    %v2499 = vpop.f32.mrb[0].mxu0
    %v2500 = vadd.f32 0.0, %v2499
    %2501 = vmatprep.mubr.bf16.mxu0 0
    %2502 = vmatmul.mubr.bf16.gmra.mrb[0].mxu0 %v2410
    %v2503 = vpop.f32.mrb[0].mxu0
    %v2504 = vadd.f32 0.0, %v2503
    %v2505 = vpop.f32.mrb[0].mxu0
    %v2506 = vadd.f32 0.0, %v2505
    %v2507 = vpop.f32.mrb[0].mxu0
    %v2508 = vadd.f32 0.0, %v2507
    %v2509 = vpop.f32.mrb[0].mxu0
    %v2510 = vadd.f32 0.0, %v2509
    %2511 = vmatprep.mubr.bf16.mxu0 0
    %2512 = vmatmul.mubr.bf16.gmra.mrb[0].mxu0 %v2413
    %v2513 = vpop.f32.mrb[0].mxu0
    %v2514 = vadd.f32 0.0, %v2513
    %v2515 = vpop.f32.mrb[0].mxu0
    %v2516 = vadd.f32 0.0, %v2515
    %v2517 = vpop.f32.mrb[0].mxu0
    %v2518 = vadd.f32 0.0, %v2517
    %v2519 = vpop.f32.mrb[0].mxu0
    %v2520 = vadd.f32 0.0, %v2519
    %2521 = vmatprep.mubr.bf16.mxu0 0
    %2522 = vmatmul.mubr.bf16.gmra.mrb[0].mxu0 %v2416
    %v2523 = vpop.f32.mrb[0].mxu0
    %v2524 = vadd.f32 0.0, %v2523
    %v2525 = vpop.f32.mrb[0].mxu0
    %v2526 = vadd.f32 0.0, %v2525
    %v2527 = vpop.f32.mrb[0].mxu0
    %v2528 = vadd.f32 0.0, %v2527
    %v2529 = vpop.f32.mrb[0].mxu0
    %v2530 = vadd.f32 0.0, %v2529
    %2531 = vmatprep.mubr.bf16.mxu0 0
    %2532 = vmatmul.mubr.bf16.gmra.mrb[0].mxu0 %v2419
    %v2533 = vpop.f32.mrb[0].mxu0
    %v2534 = vadd.f32 0.0, %v2533
    %v2535 = vpop.f32.mrb[0].mxu0
    %v2536 = vadd.f32 0.0, %v2535
    %v2537 = vpop.f32.mrb[0].mxu0
    %v2538 = vadd.f32 0.0, %v2537
    %v2539 = vpop.f32.mrb[0].mxu0
    %v2540 = vadd.f32 0.0, %v2539
    %2541 = vmatprep.mubr.bf16.mxu0 0
    %2542 = vmatmul.mubr.bf16.gmra.mrb[0].mxu0 %v2422
    %v2543 = vpop.f32.mrb[0].mxu0
    %v2544 = vadd.f32 0.0, %v2543
    %v2545 = vpop.f32.mrb[0].mxu0
    %v2546 = vadd.f32 0.0, %v2545
    %v2547 = vpop.f32.mrb[0].mxu0
    %v2548 = vadd.f32 0.0, %v2547
    %v2549 = vpop.f32.mrb[0].mxu0
    %v2550 = vadd.f32 0.0, %v2549
    %2551 = vmatprep.mubr.bf16.mxu0 0
    %2552 = vmatmul.mubr.bf16.gmra.mrb[0].mxu0 %v2425
    %v2553 = vpop.f32.mrb[0].mxu0
    %v2554 = vadd.f32 0.0, %v2553
    %v2555 = vpop.f32.mrb[0].mxu0
    %v2556 = vadd.f32 0.0, %v2555
    %v2557 = vpop.f32.mrb[0].mxu0
    %v2558 = vadd.f32 0.0, %v2557
    %v2559 = vpop.f32.mrb[0].mxu0
    %v2560 = vadd.f32 0.0, %v2559
    %2561 = vdwg.mxu0
    %2562 = vmatprep.subr.bf16.mxu0 %v2437
    %2563 = vmatpush1.bf16.msra.mxu0 %v2434
    %2564 = vmatprep.subr.bf16.mxu0 0
    %2565 = vmatpush1.bf16.msra.mxu0 0
    %2566 = vmatprep.subr.bf16.mxu0 0
    %2567 = vmatpush1.bf16.msra.mxu0 0
    %2568 = vmatprep.subr.bf16.mxu0 0
    %2569 = vmatpush1.bf16.msra.mxu0 0
    %2570 = vmatprep.subr.bf16.mxu0 0
    %2571 = vmatpush1.bf16.msra.mxu0 0
    %2572 = vmatprep.subr.bf16.mxu0 0
    %2573 = vmatpush1.bf16.msra.mxu0 0
    %2574 = vmatprep.subr.bf16.mxu0 0
    %2575 = vmatpush1.bf16.msra.mxu0 0
    %2576 = vmatprep.subr.bf16.mxu0 0
    %2577 = vmatpush1.bf16.msra.mxu0 0
    %2578 = vmatprep.subr.bf16.mxu0 0
    %2579 = vmatpush1.bf16.msra.mxu0 0
    %2580 = vmatprep.subr.bf16.mxu0 0
    %2581 = vmatpush1.bf16.msra.mxu0 0
    %2582 = vmatprep.subr.bf16.mxu0 0
    %2583 = vmatpush1.bf16.msra.mxu0 0
    %2584 = vmatprep.subr.bf16.mxu0 0
    %2585 = vmatpush1.bf16.msra.mxu0 0
    %2586 = vmatprep.subr.bf16.mxu0 0
    %2587 = vmatpush1.bf16.msra.mxu0 0
    %2588 = vmatprep.subr.bf16.mxu0 0
    %2589 = vmatpush1.bf16.msra.mxu0 0
    %2590 = vmatprep.subr.bf16.mxu0 0
    %2591 = vmatpush1.bf16.msra.mxu0 0
    %2592 = vmatprep.subr.bf16.mxu0 0
    %2593 = vmatpush1.bf16.msra.mxu0 0
    %2594 = vmatprep.mubr.bf16.mxu0 0
    %2595 = vmatmul.mubr.bf16.gmra.mrb[0].mxu0 %v2401
    %v2596 = vpop.f32.mrb[0].mxu0
    %v2597 = vadd.f32 0.0, %v2596
    %v2598 = vpop.f32.mrb[0].mxu0
    %v2599 = vadd.f32 0.0, %v2598
    %v2600 = vpop.f32.mrb[0].mxu0
    %v2601 = vadd.f32 0.0, %v2600
    %v2602 = vpop.f32.mrb[0].mxu0
    %v2603 = vadd.f32 0.0, %v2602
    %2604 = vmatprep.mubr.bf16.mxu0 0
    %2605 = vmatmul.mubr.bf16.gmra.mrb[0].mxu0 %v2404
    %v2606 = vpop.f32.mrb[0].mxu0
    %v2607 = vadd.f32 0.0, %v2606
    %v2608 = vpop.f32.mrb[0].mxu0
    %v2609 = vadd.f32 0.0, %v2608
    %v2610 = vpop.f32.mrb[0].mxu0
    %v2611 = vadd.f32 0.0, %v2610
    %v2612 = vpop.f32.mrb[0].mxu0
    %v2613 = vadd.f32 0.0, %v2612
    %2614 = vmatprep.mubr.bf16.mxu0 0
    %2615 = vmatmul.mubr.bf16.gmra.mrb[0].mxu0 %v2407
    %v2616 = vpop.f32.mrb[0].mxu0
    %v2617 = vadd.f32 0.0, %v2616
    %v2618 = vpop.f32.mrb[0].mxu0
    %v2619 = vadd.f32 0.0, %v2618
    %v2620 = vpop.f32.mrb[0].mxu0
    %v2621 = vadd.f32 0.0, %v2620
    %v2622 = vpop.f32.mrb[0].mxu0
    %v2623 = vadd.f32 0.0, %v2622
    %2624 = vmatprep.mubr.bf16.mxu0 0
    %2625 = vmatmul.mubr.bf16.gmra.mrb[0].mxu0 %v2410
    %v2626 = vpop.f32.mrb[0].mxu0
    %v2627 = vadd.f32 0.0, %v2626
    %v2628 = vpop.f32.mrb[0].mxu0
    %v2629 = vadd.f32 0.0, %v2628
    %v2630 = vpop.f32.mrb[0].mxu0
    %v2631 = vadd.f32 0.0, %v2630
    %v2632 = vpop.f32.mrb[0].mxu0
    %v2633 = vadd.f32 0.0, %v2632
    %2634 = vmatprep.mubr.bf16.mxu0 0
    %2635 = vmatmul.mubr.bf16.gmra.mrb[0].mxu0 %v2413
    %v2636 = vpop.f32.mrb[0].mxu0
    %v2637 = vadd.f32 0.0, %v2636
    %v2638 = vpop.f32.mrb[0].mxu0
    %v2639 = vadd.f32 0.0, %v2638
    %v2640 = vpop.f32.mrb[0].mxu0
    %v2641 = vadd.f32 0.0, %v2640
    %v2642 = vpop.f32.mrb[0].mxu0
    %v2643 = vadd.f32 0.0, %v2642
    %2644 = vmatprep.mubr.bf16.mxu0 0
    %2645 = vmatmul.mubr.bf16.gmra.mrb[0].mxu0 %v2416
    %v2646 = vpop.f32.mrb[0].mxu0
    %v2647 = vadd.f32 0.0, %v2646
    %v2648 = vpop.f32.mrb[0].mxu0
    %v2649 = vadd.f32 0.0, %v2648
    %v2650 = vpop.f32.mrb[0].mxu0
    %v2651 = vadd.f32 0.0, %v2650
    %v2652 = vpop.f32.mrb[0].mxu0
    %v2653 = vadd.f32 0.0, %v2652
    %2654 = vmatprep.mubr.bf16.mxu0 0
    %2655 = vmatmul.mubr.bf16.gmra.mrb[0].mxu0 %v2419
    %v2656 = vpop.f32.mrb[0].mxu0
    %v2657 = vadd.f32 0.0, %v2656
    %v2658 = vpop.f32.mrb[0].mxu0
    %v2659 = vadd.f32 0.0, %v2658
    %v2660 = vpop.f32.mrb[0].mxu0
    %v2661 = vadd.f32 0.0, %v2660
    %v2662 = vpop.f32.mrb[0].mxu0
    %v2663 = vadd.f32 0.0, %v2662
    %2664 = vmatprep.mubr.bf16.mxu0 0
    %2665 = vmatmul.mubr.bf16.gmra.mrb[0].mxu0 %v2422
    %v2666 = vpop.f32.mrb[0].mxu0
    %v2667 = vadd.f32 0.0, %v2666
    %v2668 = vpop.f32.mrb[0].mxu0
    %v2669 = vadd.f32 0.0, %v2668
    %v2670 = vpop.f32.mrb[0].mxu0
    %v2671 = vadd.f32 0.0, %v2670
    %v2672 = vpop.f32.mrb[0].mxu0
    %v2673 = vadd.f32 0.0, %v2672
    %2674 = vmatprep.mubr.bf16.mxu0 0
    %2675 = vmatmul.mubr.bf16.gmra.mrb[0].mxu0 %v2425
    %v2676 = vpop.f32.mrb[0].mxu0
    %v2677 = vadd.f32 0.0, %v2676
    %v2678 = vpop.f32.mrb[0].mxu0
    %v2679 = vadd.f32 0.0, %v2678
    %v2680 = vpop.f32.mrb[0].mxu0
    %v2681 = vadd.f32 0.0, %v2680
    %v2682 = vpop.f32.mrb[0].mxu0
    %v2683 = vadd.f32 0.0, %v2682
    %2684 = vdwg.mxu0
    %v2685 = vadd.f32 %v2289, %v2474
    %v2686 = vadd.f32 %v2290, %v2476
    %v2687 = vadd.f32 %v2291, %v2597
    %v2688 = vadd.f32 %v2292, %v2599
    %v2689 = vadd.f32 %v2293, %v2478
    %v2690 = vadd.f32 %v2294, %v2480
    %v2691 = vadd.f32 %v2295, %v2601
    %v2692 = vadd.f32 %v2296, %v2603
    %v2693 = vadd.f32 %v2297, %v2484
    %v2694 = vadd.f32 %v2298, %v2486
    %v2695 = vadd.f32 %v2299, %v2607
    %v2696 = vadd.f32 %v2300, %v2609
    %v2697 = vadd.f32 %v2301, %v2488
    %v2698 = vadd.f32 %v2302, %v2490
    %v2699 = vadd.f32 %v2303, %v2611
    %v2700 = vadd.f32 %v2304, %v2613
    %v2701 = vadd.f32 %v2305, %v2494
    %v2702 = vadd.f32 %v2306, %v2496
    %v2703 = vadd.f32 %v2307, %v2617
    %v2704 = vadd.f32 %v2308, %v2619
    %v2705 = vadd.f32 %v2309, %v2498
    %v2706 = vadd.f32 %v2310, %v2500
    %v2707 = vadd.f32 %v2311, %v2621
    %v2708 = vadd.f32 %v2312, %v2623
    %v2709 = vadd.f32 %v2313, %v2504
    %v2710 = vadd.f32 %v2314, %v2506
    %v2711 = vadd.f32 %v2315, %v2627
    %v2712 = vadd.f32 %v2316, %v2629
    %v2713 = vadd.f32 %v2317, %v2508
    %v2714 = vadd.f32 %v2318, %v2510
    %v2715 = vadd.f32 %v2319, %v2631
    %v2716 = vadd.f32 %v2320, %v2633
    %v2717 = vadd.f32 %v2321, %v2514
    %v2718 = vadd.f32 %v2322, %v2516
    %v2719 = vadd.f32 %v2323, %v2637
    %v2720 = vadd.f32 %v2324, %v2639
    %v2721 = vadd.f32 %v2325, %v2518
    %v2722 = vadd.f32 %v2326, %v2520
    %v2723 = vadd.f32 %v2327, %v2641
    %v2724 = vadd.f32 %v2328, %v2643
    %v2725 = vadd.f32 %v2329, %v2524
    %v2726 = vadd.f32 %v2330, %v2526
    %v2727 = vadd.f32 %v2331, %v2647
    %v2728 = vadd.f32 %v2332, %v2649
    %v2729 = vadd.f32 %v2333, %v2528
    %v2730 = vadd.f32 %v2334, %v2530
    %v2731 = vadd.f32 %v2335, %v2651
    %v2732 = vadd.f32 %v2336, %v2653
    %v2733 = vadd.f32 %v2337, %v2534
    %v2734 = vadd.f32 %v2338, %v2536
    %v2735 = vadd.f32 %v2339, %v2657
    %v2736 = vadd.f32 %v2340, %v2659
    %v2737 = vadd.f32 %v2341, %v2538
    %v2738 = vadd.f32 %v2342, %v2540
    %v2739 = vadd.f32 %v2343, %v2661
    %v2740 = vadd.f32 %v2344, %v2663
    %v2741 = vadd.f32 %v2345, %v2544
    %v2742 = vadd.f32 %v2346, %v2546
    %v2743 = vadd.f32 %v2347, %v2667
    %v2744 = vadd.f32 %v2348, %v2669
    %v2745 = vadd.f32 %v2349, %v2548
    %v2746 = vadd.f32 %v2350, %v2550
    %v2747 = vadd.f32 %v2351, %v2671
    %v2748 = vadd.f32 %v2352, %v2673
    %v2749 = vadd.f32 %v2353, %v2554
    %v2750 = vadd.f32 %v2354, %v2556
    %v2751 = vadd.f32 %v2355, %v2677
    %v2752 = vadd.f32 %v2356, %v2679
    %v2753 = vadd.f32 %v2357, %v2558
    %v2754 = vadd.f32 %v2358, %v2560
    %v2755 = vadd.f32 %v2359, %v2681
    %v2756 = vadd.f32 %v2360, %v2683
    %v2757 = vld [vmem:[#allocation2 + $0xd] sm:$0xff]
    %v2758 = vld [vmem:[#allocation2 + $0x15] sm:$0xff]
    %v2759 = vld [vmem:[#allocation2 + $0x1d] sm:$0xff]
    %v2760 = vld [vmem:[#allocation2 + $0x25] sm:$0xff]
    %v2761 = vld [vmem:[#allocation2 + $0x2d] sm:$0xff]
    %v2762 = vld [vmem:[#allocation2 + $0x35] sm:$0xff]
    %v2763 = vld [vmem:[#allocation2 + $0x3d] sm:$0xff]
    %v2764 = vld [vmem:[#allocation2 + $0x45] sm:$0xff]
    %v2765 = vld [vmem:[#allocation2 + $0x4d] sm:$0xff]
    %v2766 = vld [vmem:[#allocation2 + $0x55] sm:$0xff]
    %v2767 = vld [vmem:[#allocation2 + $0x5d] sm:$0xff]
    %v2768 = vld [vmem:[#allocation2 + $0x65] sm:$0xff]
    %v2769 = vld [vmem:[#allocation2 + $0x6d] sm:$0xff]
    %v2770 = vld [vmem:[#allocation2 + $0x75] sm:$0xff]
    %v2771 = vld [vmem:[#allocation2 + $0x7d] sm:$0xff]
    %v2772 = vld [vmem:[#allocation2 + $0x85] sm:$0xff]
    %v2773 = vld [vmem:[#allocation2 + $0x8d] sm:$0xff]
    %v2774 = vld [vmem:[#allocation2 + $0x95] sm:$0xff]
    %v2775 = vpack.c.bf16 %v2758, %v2757
    %v2776 = vpack.c.bf16 %v2760, %v2759
    %v2777 = vpack.c.bf16 %v2762, %v2761
    %v2778 = vpack.c.bf16 %v2764, %v2763
    %v2779 = vpack.c.bf16 %v2766, %v2765
    %v2780 = vpack.c.bf16 %v2768, %v2767
    %v2781 = vpack.c.bf16 %v2770, %v2769
    %v2782 = vpack.c.bf16 %v2772, %v2771
    %v2783 = vpack.c.bf16 %v2774, %v2773
    %v2784 = vld [vmem:[%s2 + $0x70] sm:$0xff]
    %v2785 = vld [vmem:[%s2 + $0x78] sm:$0xff]
    %v2788 = vunpack.c.l.b16 %v2784
    %v2789 = vunpack.c.h.b16 %v2784
    %v2790 = vunpack.c.l.b16 %v2785
    %v2791 = vunpack.c.h.b16 %v2785
    %v2792 = vpack.c.b16 %v2788, %v2788
    %v2793 = vpack.c.b16 %v2789, %v2789
    %v2794 = vpack.c.b16 %v2790, %v2790
    %v2795 = vpack.c.b16 %v2791, %v2791
    %v2797 = vsel %vm82, %v2775, 0
    %v2800 = vsel %vm82, %v2776, 0
    %v2803 = vsel %vm82, %v2777, 0
    %v2806 = vsel %vm82, %v2778, 0
    %v2809 = vsel %vm82, %v2779, 0
    %v2812 = vsel %vm82, %v2780, 0
    %v2815 = vsel %vm82, %v2781, 0
    %v2818 = vsel %vm82, %v2782, 0
    %v2821 = vsel %vm82, %v2783, 0
    %v2824 = vsel %vm223, %v2792, 0
    %v2827 = vsel %vm223, %v2793, 0
    %v2830 = vsel %vm223, %v2794, 0
    %v2833 = vsel %vm223, %v2795, 0
    %2835 = vmatprep.subr.bf16.mxu0 %v2827
    %2836 = vmatpush1.bf16.msra.mxu0 %v2824
    %2837 = vmatprep.subr.bf16.mxu0 0
    %2838 = vmatpush1.bf16.msra.mxu0 0
    %2839 = vmatprep.subr.bf16.mxu0 0
    %2840 = vmatpush1.bf16.msra.mxu0 0
    %2841 = vmatprep.subr.bf16.mxu0 0
    %2842 = vmatpush1.bf16.msra.mxu0 0
    %2843 = vmatprep.subr.bf16.mxu0 0
    %2844 = vmatpush1.bf16.msra.mxu0 0
    %2845 = vmatprep.subr.bf16.mxu0 0
    %2846 = vmatpush1.bf16.msra.mxu0 0
    %2847 = vmatprep.subr.bf16.mxu0 0
    %2848 = vmatpush1.bf16.msra.mxu0 0
    %2849 = vmatprep.subr.bf16.mxu0 0
    %2850 = vmatpush1.bf16.msra.mxu0 0
    %2851 = vmatprep.subr.bf16.mxu0 0
    %2852 = vmatpush1.bf16.msra.mxu0 0
    %2853 = vmatprep.subr.bf16.mxu0 0
    %2854 = vmatpush1.bf16.msra.mxu0 0
    %2855 = vmatprep.subr.bf16.mxu0 0
    %2856 = vmatpush1.bf16.msra.mxu0 0
    %2857 = vmatprep.subr.bf16.mxu0 0
    %2858 = vmatpush1.bf16.msra.mxu0 0
    %2859 = vmatprep.subr.bf16.mxu0 0
    %2860 = vmatpush1.bf16.msra.mxu0 0
    %2861 = vmatprep.subr.bf16.mxu0 0
    %2862 = vmatpush1.bf16.msra.mxu0 0
    %2863 = vmatprep.subr.bf16.mxu0 0
    %2864 = vmatpush1.bf16.msra.mxu0 0
    %2865 = vmatprep.subr.bf16.mxu0 0
    %2866 = vmatpush1.bf16.msra.mxu0 0
    %2867 = vmatprep.mubr.bf16.mxu0 0
    %2868 = vmatmul.mubr.bf16.gmra.mrb[0].mxu0 %v2797
    %v2869 = vpop.f32.mrb[0].mxu0
    %v2870 = vadd.f32 0.0, %v2869
    %v2871 = vpop.f32.mrb[0].mxu0
    %v2872 = vadd.f32 0.0, %v2871
    %v2873 = vpop.f32.mrb[0].mxu0
    %v2874 = vadd.f32 0.0, %v2873
    %v2875 = vpop.f32.mrb[0].mxu0
    %v2876 = vadd.f32 0.0, %v2875
    %2877 = vmatprep.mubr.bf16.mxu0 0
    %2878 = vmatmul.mubr.bf16.gmra.mrb[0].mxu0 %v2800
    %v2879 = vpop.f32.mrb[0].mxu0
    %v2880 = vadd.f32 0.0, %v2879
    %v2881 = vpop.f32.mrb[0].mxu0
    %v2882 = vadd.f32 0.0, %v2881
    %v2883 = vpop.f32.mrb[0].mxu0
    %v2884 = vadd.f32 0.0, %v2883
    %v2885 = vpop.f32.mrb[0].mxu0
    %v2886 = vadd.f32 0.0, %v2885
    %2887 = vmatprep.mubr.bf16.mxu0 0
    %2888 = vmatmul.mubr.bf16.gmra.mrb[0].mxu0 %v2803
    %v2889 = vpop.f32.mrb[0].mxu0
    %v2890 = vadd.f32 0.0, %v2889
    %v2891 = vpop.f32.mrb[0].mxu0
    %v2892 = vadd.f32 0.0, %v2891
    %v2893 = vpop.f32.mrb[0].mxu0
    %v2894 = vadd.f32 0.0, %v2893
    %v2895 = vpop.f32.mrb[0].mxu0
    %v2896 = vadd.f32 0.0, %v2895
    %2897 = vmatprep.mubr.bf16.mxu0 0
    %2898 = vmatmul.mubr.bf16.gmra.mrb[0].mxu0 %v2806
    %v2899 = vpop.f32.mrb[0].mxu0
    %v2900 = vadd.f32 0.0, %v2899
    %v2901 = vpop.f32.mrb[0].mxu0
    %v2902 = vadd.f32 0.0, %v2901
    %v2903 = vpop.f32.mrb[0].mxu0
    %v2904 = vadd.f32 0.0, %v2903
    %v2905 = vpop.f32.mrb[0].mxu0
    %v2906 = vadd.f32 0.0, %v2905
    %2907 = vmatprep.mubr.bf16.mxu0 0
    %2908 = vmatmul.mubr.bf16.gmra.mrb[0].mxu0 %v2809
    %v2909 = vpop.f32.mrb[0].mxu0
    %v2910 = vadd.f32 0.0, %v2909
    %v2911 = vpop.f32.mrb[0].mxu0
    %v2912 = vadd.f32 0.0, %v2911
    %v2913 = vpop.f32.mrb[0].mxu0
    %v2914 = vadd.f32 0.0, %v2913
    %v2915 = vpop.f32.mrb[0].mxu0
    %v2916 = vadd.f32 0.0, %v2915
    %2917 = vmatprep.mubr.bf16.mxu0 0
    %2918 = vmatmul.mubr.bf16.gmra.mrb[0].mxu0 %v2812
    %v2919 = vpop.f32.mrb[0].mxu0
    %v2920 = vadd.f32 0.0, %v2919
    %v2921 = vpop.f32.mrb[0].mxu0
    %v2922 = vadd.f32 0.0, %v2921
    %v2923 = vpop.f32.mrb[0].mxu0
    %v2924 = vadd.f32 0.0, %v2923
    %v2925 = vpop.f32.mrb[0].mxu0
    %v2926 = vadd.f32 0.0, %v2925
    %2927 = vmatprep.mubr.bf16.mxu0 0
    %2928 = vmatmul.mubr.bf16.gmra.mrb[0].mxu0 %v2815
    %v2929 = vpop.f32.mrb[0].mxu0
    %v2930 = vadd.f32 0.0, %v2929
    %v2931 = vpop.f32.mrb[0].mxu0
    %v2932 = vadd.f32 0.0, %v2931
    %v2933 = vpop.f32.mrb[0].mxu0
    %v2934 = vadd.f32 0.0, %v2933
    %v2935 = vpop.f32.mrb[0].mxu0
    %v2936 = vadd.f32 0.0, %v2935
    %2937 = vmatprep.mubr.bf16.mxu0 0
    %2938 = vmatmul.mubr.bf16.gmra.mrb[0].mxu0 %v2818
    %v2939 = vpop.f32.mrb[0].mxu0
    %v2940 = vadd.f32 0.0, %v2939
    %v2941 = vpop.f32.mrb[0].mxu0
    %v2942 = vadd.f32 0.0, %v2941
    %v2943 = vpop.f32.mrb[0].mxu0
    %v2944 = vadd.f32 0.0, %v2943
    %v2945 = vpop.f32.mrb[0].mxu0
    %v2946 = vadd.f32 0.0, %v2945
    %2947 = vmatprep.mubr.bf16.mxu0 0
    %2948 = vmatmul.mubr.bf16.gmra.mrb[0].mxu0 %v2821
    %v2949 = vpop.f32.mrb[0].mxu0
    %v2950 = vadd.f32 0.0, %v2949
    %v2951 = vpop.f32.mrb[0].mxu0
    %v2952 = vadd.f32 0.0, %v2951
    %v2953 = vpop.f32.mrb[0].mxu0
    %v2954 = vadd.f32 0.0, %v2953
    %v2955 = vpop.f32.mrb[0].mxu0
    %v2956 = vadd.f32 0.0, %v2955
    %2957 = vdwg.mxu0
    %2958 = vmatprep.subr.bf16.mxu0 %v2833
    %2959 = vmatpush1.bf16.msra.mxu0 %v2830
    %2960 = vmatprep.subr.bf16.mxu0 0
    %2961 = vmatpush1.bf16.msra.mxu0 0
    %2962 = vmatprep.subr.bf16.mxu0 0
    %2963 = vmatpush1.bf16.msra.mxu0 0
    %2964 = vmatprep.subr.bf16.mxu0 0
    %2965 = vmatpush1.bf16.msra.mxu0 0
    %2966 = vmatprep.subr.bf16.mxu0 0
    %2967 = vmatpush1.bf16.msra.mxu0 0
    %2968 = vmatprep.subr.bf16.mxu0 0
    %2969 = vmatpush1.bf16.msra.mxu0 0
    %2970 = vmatprep.subr.bf16.mxu0 0
    %2971 = vmatpush1.bf16.msra.mxu0 0
    %2972 = vmatprep.subr.bf16.mxu0 0
    %2973 = vmatpush1.bf16.msra.mxu0 0
    %2974 = vmatprep.subr.bf16.mxu0 0
    %2975 = vmatpush1.bf16.msra.mxu0 0
    %2976 = vmatprep.subr.bf16.mxu0 0
    %2977 = vmatpush1.bf16.msra.mxu0 0
    %2978 = vmatprep.subr.bf16.mxu0 0
    %2979 = vmatpush1.bf16.msra.mxu0 0
    %2980 = vmatprep.subr.bf16.mxu0 0
    %2981 = vmatpush1.bf16.msra.mxu0 0
    %2982 = vmatprep.subr.bf16.mxu0 0
    %2983 = vmatpush1.bf16.msra.mxu0 0
    %2984 = vmatprep.subr.bf16.mxu0 0
    %2985 = vmatpush1.bf16.msra.mxu0 0
    %2986 = vmatprep.subr.bf16.mxu0 0
    %2987 = vmatpush1.bf16.msra.mxu0 0
    %2988 = vmatprep.subr.bf16.mxu0 0
    %2989 = vmatpush1.bf16.msra.mxu0 0
    %2990 = vmatprep.mubr.bf16.mxu0 0
    %2991 = vmatmul.mubr.bf16.gmra.mrb[0].mxu0 %v2797
    %v2992 = vpop.f32.mrb[0].mxu0
    %v2993 = vadd.f32 0.0, %v2992
    %v2994 = vpop.f32.mrb[0].mxu0
    %v2995 = vadd.f32 0.0, %v2994
    %v2996 = vpop.f32.mrb[0].mxu0
    %v2997 = vadd.f32 0.0, %v2996
    %v2998 = vpop.f32.mrb[0].mxu0
    %v2999 = vadd.f32 0.0, %v2998
    %3000 = vmatprep.mubr.bf16.mxu0 0
    %3001 = vmatmul.mubr.bf16.gmra.mrb[0].mxu0 %v2800
    %v3002 = vpop.f32.mrb[0].mxu0
    %v3003 = vadd.f32 0.0, %v3002
    %v3004 = vpop.f32.mrb[0].mxu0
    %v3005 = vadd.f32 0.0, %v3004
    %v3006 = vpop.f32.mrb[0].mxu0
    %v3007 = vadd.f32 0.0, %v3006
    %v3008 = vpop.f32.mrb[0].mxu0
    %v3009 = vadd.f32 0.0, %v3008
    %3010 = vmatprep.mubr.bf16.mxu0 0
    %3011 = vmatmul.mubr.bf16.gmra.mrb[0].mxu0 %v2803
    %v3012 = vpop.f32.mrb[0].mxu0
    %v3013 = vadd.f32 0.0, %v3012
    %v3014 = vpop.f32.mrb[0].mxu0
    %v3015 = vadd.f32 0.0, %v3014
    %v3016 = vpop.f32.mrb[0].mxu0
    %v3017 = vadd.f32 0.0, %v3016
    %v3018 = vpop.f32.mrb[0].mxu0
    %v3019 = vadd.f32 0.0, %v3018
    %3020 = vmatprep.mubr.bf16.mxu0 0
    %3021 = vmatmul.mubr.bf16.gmra.mrb[0].mxu0 %v2806
    %v3022 = vpop.f32.mrb[0].mxu0
    %v3023 = vadd.f32 0.0, %v3022
    %v3024 = vpop.f32.mrb[0].mxu0
    %v3025 = vadd.f32 0.0, %v3024
    %v3026 = vpop.f32.mrb[0].mxu0
    %v3027 = vadd.f32 0.0, %v3026
    %v3028 = vpop.f32.mrb[0].mxu0
    %v3029 = vadd.f32 0.0, %v3028
    %3030 = vmatprep.mubr.bf16.mxu0 0
    %3031 = vmatmul.mubr.bf16.gmra.mrb[0].mxu0 %v2809
    %v3032 = vpop.f32.mrb[0].mxu0
    %v3033 = vadd.f32 0.0, %v3032
    %v3034 = vpop.f32.mrb[0].mxu0
    %v3035 = vadd.f32 0.0, %v3034
    %v3036 = vpop.f32.mrb[0].mxu0
    %v3037 = vadd.f32 0.0, %v3036
    %v3038 = vpop.f32.mrb[0].mxu0
    %v3039 = vadd.f32 0.0, %v3038
    %3040 = vmatprep.mubr.bf16.mxu0 0
    %3041 = vmatmul.mubr.bf16.gmra.mrb[0].mxu0 %v2812
    %v3042 = vpop.f32.mrb[0].mxu0
    %v3043 = vadd.f32 0.0, %v3042
    %v3044 = vpop.f32.mrb[0].mxu0
    %v3045 = vadd.f32 0.0, %v3044
    %v3046 = vpop.f32.mrb[0].mxu0
    %v3047 = vadd.f32 0.0, %v3046
    %v3048 = vpop.f32.mrb[0].mxu0
    %v3049 = vadd.f32 0.0, %v3048
    %3050 = vmatprep.mubr.bf16.mxu0 0
    %3051 = vmatmul.mubr.bf16.gmra.mrb[0].mxu0 %v2815
    %v3052 = vpop.f32.mrb[0].mxu0
    %v3053 = vadd.f32 0.0, %v3052
    %v3054 = vpop.f32.mrb[0].mxu0
    %v3055 = vadd.f32 0.0, %v3054
    %v3056 = vpop.f32.mrb[0].mxu0
    %v3057 = vadd.f32 0.0, %v3056
    %v3058 = vpop.f32.mrb[0].mxu0
    %v3059 = vadd.f32 0.0, %v3058
    %3060 = vmatprep.mubr.bf16.mxu0 0
    %3061 = vmatmul.mubr.bf16.gmra.mrb[0].mxu0 %v2818
    %v3062 = vpop.f32.mrb[0].mxu0
    %v3063 = vadd.f32 0.0, %v3062
    %v3064 = vpop.f32.mrb[0].mxu0
    %v3065 = vadd.f32 0.0, %v3064
    %v3066 = vpop.f32.mrb[0].mxu0
    %v3067 = vadd.f32 0.0, %v3066
    %v3068 = vpop.f32.mrb[0].mxu0
    %v3069 = vadd.f32 0.0, %v3068
    %3070 = vmatprep.mubr.bf16.mxu0 0
    %3071 = vmatmul.mubr.bf16.gmra.mrb[0].mxu0 %v2821
    %v3072 = vpop.f32.mrb[0].mxu0
    %v3073 = vadd.f32 0.0, %v3072
    %v3074 = vpop.f32.mrb[0].mxu0
    %v3075 = vadd.f32 0.0, %v3074
    %v3076 = vpop.f32.mrb[0].mxu0
    %v3077 = vadd.f32 0.0, %v3076
    %v3078 = vpop.f32.mrb[0].mxu0
    %v3079 = vadd.f32 0.0, %v3078
    %3080 = vdwg.mxu0
    %v3081 = vadd.f32 %v2685, %v2870
    %v3082 = vadd.f32 %v2686, %v2872
    %v3083 = vadd.f32 %v2687, %v2993
    %v3084 = vadd.f32 %v2688, %v2995
    %v3085 = vadd.f32 %v2689, %v2874
    %v3086 = vadd.f32 %v2690, %v2876
    %v3087 = vadd.f32 %v2691, %v2997
    %v3088 = vadd.f32 %v2692, %v2999
    %v3089 = vadd.f32 %v2693, %v2880
    %v3090 = vadd.f32 %v2694, %v2882
    %v3091 = vadd.f32 %v2695, %v3003
    %v3092 = vadd.f32 %v2696, %v3005
    %v3093 = vadd.f32 %v2697, %v2884
    %v3094 = vadd.f32 %v2698, %v2886
    %v3095 = vadd.f32 %v2699, %v3007
    %v3096 = vadd.f32 %v2700, %v3009
    %v3097 = vadd.f32 %v2701, %v2890
    %v3098 = vadd.f32 %v2702, %v2892
    %v3099 = vadd.f32 %v2703, %v3013
    %v3100 = vadd.f32 %v2704, %v3015
    %v3101 = vadd.f32 %v2705, %v2894
    %v3102 = vadd.f32 %v2706, %v2896
    %v3103 = vadd.f32 %v2707, %v3017
    %v3104 = vadd.f32 %v2708, %v3019
    %v3105 = vadd.f32 %v2709, %v2900
    %v3106 = vadd.f32 %v2710, %v2902
    %v3107 = vadd.f32 %v2711, %v3023
    %v3108 = vadd.f32 %v2712, %v3025
    %v3109 = vadd.f32 %v2713, %v2904
    %v3110 = vadd.f32 %v2714, %v2906
    %v3111 = vadd.f32 %v2715, %v3027
    %v3112 = vadd.f32 %v2716, %v3029
    %v3113 = vadd.f32 %v2717, %v2910
    %v3114 = vadd.f32 %v2718, %v2912
    %v3115 = vadd.f32 %v2719, %v3033
    %v3116 = vadd.f32 %v2720, %v3035
    %v3117 = vadd.f32 %v2721, %v2914
    %v3118 = vadd.f32 %v2722, %v2916
    %v3119 = vadd.f32 %v2723, %v3037
    %v3120 = vadd.f32 %v2724, %v3039
    %v3121 = vadd.f32 %v2725, %v2920
    %v3122 = vadd.f32 %v2726, %v2922
    %v3123 = vadd.f32 %v2727, %v3043
    %v3124 = vadd.f32 %v2728, %v3045
    %v3125 = vadd.f32 %v2729, %v2924
    %v3126 = vadd.f32 %v2730, %v2926
    %v3127 = vadd.f32 %v2731, %v3047
    %v3128 = vadd.f32 %v2732, %v3049
    %v3129 = vadd.f32 %v2733, %v2930
    %v3130 = vadd.f32 %v2734, %v2932
    %v3131 = vadd.f32 %v2735, %v3053
    %v3132 = vadd.f32 %v2736, %v3055
    %v3133 = vadd.f32 %v2737, %v2934
    %v3134 = vadd.f32 %v2738, %v2936
    %v3135 = vadd.f32 %v2739, %v3057
    %v3136 = vadd.f32 %v2740, %v3059
    %v3137 = vadd.f32 %v2741, %v2940
    %v3138 = vadd.f32 %v2742, %v2942
    %v3139 = vadd.f32 %v2743, %v3063
    %v3140 = vadd.f32 %v2744, %v3065
    %v3141 = vadd.f32 %v2745, %v2944
    %v3142 = vadd.f32 %v2746, %v2946
    %v3143 = vadd.f32 %v2747, %v3067
    %v3144 = vadd.f32 %v2748, %v3069
    %v3145 = vadd.f32 %v2749, %v2950
    %v3146 = vadd.f32 %v2750, %v2952
    %v3147 = vadd.f32 %v2751, %v3073
    %v3148 = vadd.f32 %v2752, %v3075
    %v3149 = vadd.f32 %v2753, %v2954
    %v3150 = vadd.f32 %v2754, %v2956
    %v3151 = vadd.f32 %v2755, %v3077
    %v3152 = vadd.f32 %v2756, %v3079
    %v3153 = vld [vmem:[#allocation2 + $0xe] sm:$0xff]
    %v3154 = vld [vmem:[#allocation2 + $0x16] sm:$0xff]
    %v3155 = vld [vmem:[#allocation2 + $0x1e] sm:$0xff]
    %v3156 = vld [vmem:[#allocation2 + $0x26] sm:$0xff]
    %v3157 = vld [vmem:[#allocation2 + $0x2e] sm:$0xff]
    %v3158 = vld [vmem:[#allocation2 + $0x36] sm:$0xff]
    %v3159 = vld [vmem:[#allocation2 + $0x3e] sm:$0xff]
    %v3160 = vld [vmem:[#allocation2 + $0x46] sm:$0xff]
    %v3161 = vld [vmem:[#allocation2 + $0x4e] sm:$0xff]
    %v3162 = vld [vmem:[#allocation2 + $0x56] sm:$0xff]
    %v3163 = vld [vmem:[#allocation2 + $0x5e] sm:$0xff]
    %v3164 = vld [vmem:[#allocation2 + $0x66] sm:$0xff]
    %v3165 = vld [vmem:[#allocation2 + $0x6e] sm:$0xff]
    %v3166 = vld [vmem:[#allocation2 + $0x76] sm:$0xff]
    %v3167 = vld [vmem:[#allocation2 + $0x7e] sm:$0xff]
    %v3168 = vld [vmem:[#allocation2 + $0x86] sm:$0xff]
    %v3169 = vld [vmem:[#allocation2 + $0x8e] sm:$0xff]
    %v3170 = vld [vmem:[#allocation2 + $0x96] sm:$0xff]
    %v3171 = vpack.c.bf16 %v3154, %v3153
    %v3172 = vpack.c.bf16 %v3156, %v3155
    %v3173 = vpack.c.bf16 %v3158, %v3157
    %v3174 = vpack.c.bf16 %v3160, %v3159
    %v3175 = vpack.c.bf16 %v3162, %v3161
    %v3176 = vpack.c.bf16 %v3164, %v3163
    %v3177 = vpack.c.bf16 %v3166, %v3165
    %v3178 = vpack.c.bf16 %v3168, %v3167
    %v3179 = vpack.c.bf16 %v3170, %v3169
    %v3180 = vld [vmem:[%s2 + $0x80] sm:$0xff]
    %v3181 = vld [vmem:[%s2 + $0x88] sm:$0xff]
    %v3184 = vunpack.c.l.b16 %v3180
    %v3185 = vunpack.c.h.b16 %v3180
    %v3186 = vunpack.c.l.b16 %v3181
    %v3187 = vunpack.c.h.b16 %v3181
    %v3188 = vpack.c.b16 %v3184, %v3184
    %v3189 = vpack.c.b16 %v3185, %v3185
    %v3190 = vpack.c.b16 %v3186, %v3186
    %v3191 = vpack.c.b16 %v3187, %v3187
    %v3193 = vsel %vm82, %v3171, 0
    %v3196 = vsel %vm82, %v3172, 0
    %v3199 = vsel %vm82, %v3173, 0
    %v3202 = vsel %vm82, %v3174, 0
    %v3205 = vsel %vm82, %v3175, 0
    %v3208 = vsel %vm82, %v3176, 0
    %v3211 = vsel %vm82, %v3177, 0
    %v3214 = vsel %vm82, %v3178, 0
    %v3217 = vsel %vm82, %v3179, 0
    %v3220 = vsel %vm223, %v3188, 0
    %v3223 = vsel %vm223, %v3189, 0
    %v3226 = vsel %vm223, %v3190, 0
    %v3229 = vsel %vm223, %v3191, 0
    %3231 = vmatprep.subr.bf16.mxu0 %v3223
    %3232 = vmatpush1.bf16.msra.mxu0 %v3220
    %3233 = vmatprep.subr.bf16.mxu0 0
    %3234 = vmatpush1.bf16.msra.mxu0 0
    %3235 = vmatprep.subr.bf16.mxu0 0
    %3236 = vmatpush1.bf16.msra.mxu0 0
    %3237 = vmatprep.subr.bf16.mxu0 0
    %3238 = vmatpush1.bf16.msra.mxu0 0
    %3239 = vmatprep.subr.bf16.mxu0 0
    %3240 = vmatpush1.bf16.msra.mxu0 0
    %3241 = vmatprep.subr.bf16.mxu0 0
    %3242 = vmatpush1.bf16.msra.mxu0 0
    %3243 = vmatprep.subr.bf16.mxu0 0
    %3244 = vmatpush1.bf16.msra.mxu0 0
    %3245 = vmatprep.subr.bf16.mxu0 0
    %3246 = vmatpush1.bf16.msra.mxu0 0
    %3247 = vmatprep.subr.bf16.mxu0 0
    %3248 = vmatpush1.bf16.msra.mxu0 0
    %3249 = vmatprep.subr.bf16.mxu0 0
    %3250 = vmatpush1.bf16.msra.mxu0 0
    %3251 = vmatprep.subr.bf16.mxu0 0
    %3252 = vmatpush1.bf16.msra.mxu0 0
    %3253 = vmatprep.subr.bf16.mxu0 0
    %3254 = vmatpush1.bf16.msra.mxu0 0
    %3255 = vmatprep.subr.bf16.mxu0 0
    %3256 = vmatpush1.bf16.msra.mxu0 0
    %3257 = vmatprep.subr.bf16.mxu0 0
    %3258 = vmatpush1.bf16.msra.mxu0 0
    %3259 = vmatprep.subr.bf16.mxu0 0
    %3260 = vmatpush1.bf16.msra.mxu0 0
    %3261 = vmatprep.subr.bf16.mxu0 0
    %3262 = vmatpush1.bf16.msra.mxu0 0
    %3263 = vmatprep.mubr.bf16.mxu0 0
    %3264 = vmatmul.mubr.bf16.gmra.mrb[0].mxu0 %v3193
    %v3265 = vpop.f32.mrb[0].mxu0
    %v3266 = vadd.f32 0.0, %v3265
    %v3267 = vpop.f32.mrb[0].mxu0
    %v3268 = vadd.f32 0.0, %v3267
    %v3269 = vpop.f32.mrb[0].mxu0
    %v3270 = vadd.f32 0.0, %v3269
    %v3271 = vpop.f32.mrb[0].mxu0
    %v3272 = vadd.f32 0.0, %v3271
    %3273 = vmatprep.mubr.bf16.mxu0 0
    %3274 = vmatmul.mubr.bf16.gmra.mrb[0].mxu0 %v3196
    %v3275 = vpop.f32.mrb[0].mxu0
    %v3276 = vadd.f32 0.0, %v3275
    %v3277 = vpop.f32.mrb[0].mxu0
    %v3278 = vadd.f32 0.0, %v3277
    %v3279 = vpop.f32.mrb[0].mxu0
    %v3280 = vadd.f32 0.0, %v3279
    %v3281 = vpop.f32.mrb[0].mxu0
    %v3282 = vadd.f32 0.0, %v3281
    %3283 = vmatprep.mubr.bf16.mxu0 0
    %3284 = vmatmul.mubr.bf16.gmra.mrb[0].mxu0 %v3199
    %v3285 = vpop.f32.mrb[0].mxu0
    %v3286 = vadd.f32 0.0, %v3285
    %v3287 = vpop.f32.mrb[0].mxu0
    %v3288 = vadd.f32 0.0, %v3287
    %v3289 = vpop.f32.mrb[0].mxu0
    %v3290 = vadd.f32 0.0, %v3289
    %v3291 = vpop.f32.mrb[0].mxu0
    %v3292 = vadd.f32 0.0, %v3291
    %3293 = vmatprep.mubr.bf16.mxu0 0
    %3294 = vmatmul.mubr.bf16.gmra.mrb[0].mxu0 %v3202
    %v3295 = vpop.f32.mrb[0].mxu0
    %v3296 = vadd.f32 0.0, %v3295
    %v3297 = vpop.f32.mrb[0].mxu0
    %v3298 = vadd.f32 0.0, %v3297
    %v3299 = vpop.f32.mrb[0].mxu0
    %v3300 = vadd.f32 0.0, %v3299
    %v3301 = vpop.f32.mrb[0].mxu0
    %v3302 = vadd.f32 0.0, %v3301
    %3303 = vmatprep.mubr.bf16.mxu0 0
    %3304 = vmatmul.mubr.bf16.gmra.mrb[0].mxu0 %v3205
    %v3305 = vpop.f32.mrb[0].mxu0
    %v3306 = vadd.f32 0.0, %v3305
    %v3307 = vpop.f32.mrb[0].mxu0
    %v3308 = vadd.f32 0.0, %v3307
    %v3309 = vpop.f32.mrb[0].mxu0
    %v3310 = vadd.f32 0.0, %v3309
    %v3311 = vpop.f32.mrb[0].mxu0
    %v3312 = vadd.f32 0.0, %v3311
    %3313 = vmatprep.mubr.bf16.mxu0 0
    %3314 = vmatmul.mubr.bf16.gmra.mrb[0].mxu0 %v3208
    %v3315 = vpop.f32.mrb[0].mxu0
    %v3316 = vadd.f32 0.0, %v3315
    %v3317 = vpop.f32.mrb[0].mxu0
    %v3318 = vadd.f32 0.0, %v3317
    %v3319 = vpop.f32.mrb[0].mxu0
    %v3320 = vadd.f32 0.0, %v3319
    %v3321 = vpop.f32.mrb[0].mxu0
    %v3322 = vadd.f32 0.0, %v3321
    %3323 = vmatprep.mubr.bf16.mxu0 0
    %3324 = vmatmul.mubr.bf16.gmra.mrb[0].mxu0 %v3211
    %v3325 = vpop.f32.mrb[0].mxu0
    %v3326 = vadd.f32 0.0, %v3325
    %v3327 = vpop.f32.mrb[0].mxu0
    %v3328 = vadd.f32 0.0, %v3327
    %v3329 = vpop.f32.mrb[0].mxu0
    %v3330 = vadd.f32 0.0, %v3329
    %v3331 = vpop.f32.mrb[0].mxu0
    %v3332 = vadd.f32 0.0, %v3331
    %3333 = vmatprep.mubr.bf16.mxu0 0
    %3334 = vmatmul.mubr.bf16.gmra.mrb[0].mxu0 %v3214
    %v3335 = vpop.f32.mrb[0].mxu0
    %v3336 = vadd.f32 0.0, %v3335
    %v3337 = vpop.f32.mrb[0].mxu0
    %v3338 = vadd.f32 0.0, %v3337
    %v3339 = vpop.f32.mrb[0].mxu0
    %v3340 = vadd.f32 0.0, %v3339
    %v3341 = vpop.f32.mrb[0].mxu0
    %v3342 = vadd.f32 0.0, %v3341
    %3343 = vmatprep.mubr.bf16.mxu0 0
    %3344 = vmatmul.mubr.bf16.gmra.mrb[0].mxu0 %v3217
    %v3345 = vpop.f32.mrb[0].mxu0
    %v3346 = vadd.f32 0.0, %v3345
    %v3347 = vpop.f32.mrb[0].mxu0
    %v3348 = vadd.f32 0.0, %v3347
    %v3349 = vpop.f32.mrb[0].mxu0
    %v3350 = vadd.f32 0.0, %v3349
    %v3351 = vpop.f32.mrb[0].mxu0
    %v3352 = vadd.f32 0.0, %v3351
    %3353 = vdwg.mxu0
    %3354 = vmatprep.subr.bf16.mxu0 %v3229
    %3355 = vmatpush1.bf16.msra.mxu0 %v3226
    %3356 = vmatprep.subr.bf16.mxu0 0
    %3357 = vmatpush1.bf16.msra.mxu0 0
    %3358 = vmatprep.subr.bf16.mxu0 0
    %3359 = vmatpush1.bf16.msra.mxu0 0
    %3360 = vmatprep.subr.bf16.mxu0 0
    %3361 = vmatpush1.bf16.msra.mxu0 0
    %3362 = vmatprep.subr.bf16.mxu0 0
    %3363 = vmatpush1.bf16.msra.mxu0 0
    %3364 = vmatprep.subr.bf16.mxu0 0
    %3365 = vmatpush1.bf16.msra.mxu0 0
    %3366 = vmatprep.subr.bf16.mxu0 0
    %3367 = vmatpush1.bf16.msra.mxu0 0
    %3368 = vmatprep.subr.bf16.mxu0 0
    %3369 = vmatpush1.bf16.msra.mxu0 0
    %3370 = vmatprep.subr.bf16.mxu0 0
    %3371 = vmatpush1.bf16.msra.mxu0 0
    %3372 = vmatprep.subr.bf16.mxu0 0
    %3373 = vmatpush1.bf16.msra.mxu0 0
    %3374 = vmatprep.subr.bf16.mxu0 0
    %3375 = vmatpush1.bf16.msra.mxu0 0
    %3376 = vmatprep.subr.bf16.mxu0 0
    %3377 = vmatpush1.bf16.msra.mxu0 0
    %3378 = vmatprep.subr.bf16.mxu0 0
    %3379 = vmatpush1.bf16.msra.mxu0 0
    %3380 = vmatprep.subr.bf16.mxu0 0
    %3381 = vmatpush1.bf16.msra.mxu0 0
    %3382 = vmatprep.subr.bf16.mxu0 0
    %3383 = vmatpush1.bf16.msra.mxu0 0
    %3384 = vmatprep.subr.bf16.mxu0 0
    %3385 = vmatpush1.bf16.msra.mxu0 0
    %3386 = vmatprep.mubr.bf16.mxu0 0
    %3387 = vmatmul.mubr.bf16.gmra.mrb[0].mxu0 %v3193
    %v3388 = vpop.f32.mrb[0].mxu0
    %v3389 = vadd.f32 0.0, %v3388
    %v3390 = vpop.f32.mrb[0].mxu0
    %v3391 = vadd.f32 0.0, %v3390
    %v3392 = vpop.f32.mrb[0].mxu0
    %v3393 = vadd.f32 0.0, %v3392
    %v3394 = vpop.f32.mrb[0].mxu0
    %v3395 = vadd.f32 0.0, %v3394
    %3396 = vmatprep.mubr.bf16.mxu0 0
    %3397 = vmatmul.mubr.bf16.gmra.mrb[0].mxu0 %v3196
    %v3398 = vpop.f32.mrb[0].mxu0
    %v3399 = vadd.f32 0.0, %v3398
    %v3400 = vpop.f32.mrb[0].mxu0
    %v3401 = vadd.f32 0.0, %v3400
    %v3402 = vpop.f32.mrb[0].mxu0
    %v3403 = vadd.f32 0.0, %v3402
    %v3404 = vpop.f32.mrb[0].mxu0
    %v3405 = vadd.f32 0.0, %v3404
    %3406 = vmatprep.mubr.bf16.mxu0 0
    %3407 = vmatmul.mubr.bf16.gmra.mrb[0].mxu0 %v3199
    %v3408 = vpop.f32.mrb[0].mxu0
    %v3409 = vadd.f32 0.0, %v3408
    %v3410 = vpop.f32.mrb[0].mxu0
    %v3411 = vadd.f32 0.0, %v3410
    %v3412 = vpop.f32.mrb[0].mxu0
    %v3413 = vadd.f32 0.0, %v3412
    %v3414 = vpop.f32.mrb[0].mxu0
    %v3415 = vadd.f32 0.0, %v3414
    %3416 = vmatprep.mubr.bf16.mxu0 0
    %3417 = vmatmul.mubr.bf16.gmra.mrb[0].mxu0 %v3202
    %v3418 = vpop.f32.mrb[0].mxu0
    %v3419 = vadd.f32 0.0, %v3418
    %v3420 = vpop.f32.mrb[0].mxu0
    %v3421 = vadd.f32 0.0, %v3420
    %v3422 = vpop.f32.mrb[0].mxu0
    %v3423 = vadd.f32 0.0, %v3422
    %v3424 = vpop.f32.mrb[0].mxu0
    %v3425 = vadd.f32 0.0, %v3424
    %3426 = vmatprep.mubr.bf16.mxu0 0
    %3427 = vmatmul.mubr.bf16.gmra.mrb[0].mxu0 %v3205
    %v3428 = vpop.f32.mrb[0].mxu0
    %v3429 = vadd.f32 0.0, %v3428
    %v3430 = vpop.f32.mrb[0].mxu0
    %v3431 = vadd.f32 0.0, %v3430
    %v3432 = vpop.f32.mrb[0].mxu0
    %v3433 = vadd.f32 0.0, %v3432
    %v3434 = vpop.f32.mrb[0].mxu0
    %v3435 = vadd.f32 0.0, %v3434
    %3436 = vmatprep.mubr.bf16.mxu0 0
    %3437 = vmatmul.mubr.bf16.gmra.mrb[0].mxu0 %v3208
    %v3438 = vpop.f32.mrb[0].mxu0
    %v3439 = vadd.f32 0.0, %v3438
    %v3440 = vpop.f32.mrb[0].mxu0
    %v3441 = vadd.f32 0.0, %v3440
    %v3442 = vpop.f32.mrb[0].mxu0
    %v3443 = vadd.f32 0.0, %v3442
    %v3444 = vpop.f32.mrb[0].mxu0
    %v3445 = vadd.f32 0.0, %v3444
    %3446 = vmatprep.mubr.bf16.mxu0 0
    %3447 = vmatmul.mubr.bf16.gmra.mrb[0].mxu0 %v3211
    %v3448 = vpop.f32.mrb[0].mxu0
    %v3449 = vadd.f32 0.0, %v3448
    %v3450 = vpop.f32.mrb[0].mxu0
    %v3451 = vadd.f32 0.0, %v3450
    %v3452 = vpop.f32.mrb[0].mxu0
    %v3453 = vadd.f32 0.0, %v3452
    %v3454 = vpop.f32.mrb[0].mxu0
    %v3455 = vadd.f32 0.0, %v3454
    %3456 = vmatprep.mubr.bf16.mxu0 0
    %3457 = vmatmul.mubr.bf16.gmra.mrb[0].mxu0 %v3214
    %v3458 = vpop.f32.mrb[0].mxu0
    %v3459 = vadd.f32 0.0, %v3458
    %v3460 = vpop.f32.mrb[0].mxu0
    %v3461 = vadd.f32 0.0, %v3460
    %v3462 = vpop.f32.mrb[0].mxu0
    %v3463 = vadd.f32 0.0, %v3462
    %v3464 = vpop.f32.mrb[0].mxu0
    %v3465 = vadd.f32 0.0, %v3464
    %3466 = vmatprep.mubr.bf16.mxu0 0
    %3467 = vmatmul.mubr.bf16.gmra.mrb[0].mxu0 %v3217
    %v3468 = vpop.f32.mrb[0].mxu0
    %v3469 = vadd.f32 0.0, %v3468
    %v3470 = vpop.f32.mrb[0].mxu0
    %v3471 = vadd.f32 0.0, %v3470
    %v3472 = vpop.f32.mrb[0].mxu0
    %v3473 = vadd.f32 0.0, %v3472
    %v3474 = vpop.f32.mrb[0].mxu0
    %v3475 = vadd.f32 0.0, %v3474
    %3476 = vdwg.mxu0
    %v3477 = vadd.f32 %v3081, %v3266
    %v3478 = vadd.f32 %v3082, %v3268
    %v3479 = vadd.f32 %v3083, %v3389
    %v3480 = vadd.f32 %v3084, %v3391
    %v3481 = vadd.f32 %v3085, %v3270
    %v3482 = vadd.f32 %v3086, %v3272
    %v3483 = vadd.f32 %v3087, %v3393
    %v3484 = vadd.f32 %v3088, %v3395
    %v3485 = vadd.f32 %v3089, %v3276
    %v3486 = vadd.f32 %v3090, %v3278
    %v3487 = vadd.f32 %v3091, %v3399
    %v3488 = vadd.f32 %v3092, %v3401
    %v3489 = vadd.f32 %v3093, %v3280
    %v3490 = vadd.f32 %v3094, %v3282
    %v3491 = vadd.f32 %v3095, %v3403
    %v3492 = vadd.f32 %v3096, %v3405
    %v3493 = vadd.f32 %v3097, %v3286
    %v3494 = vadd.f32 %v3098, %v3288
    %v3495 = vadd.f32 %v3099, %v3409
    %v3496 = vadd.f32 %v3100, %v3411
    %v3497 = vadd.f32 %v3101, %v3290
    %v3498 = vadd.f32 %v3102, %v3292
    %v3499 = vadd.f32 %v3103, %v3413
    %v3500 = vadd.f32 %v3104, %v3415
    %v3501 = vadd.f32 %v3105, %v3296
    %v3502 = vadd.f32 %v3106, %v3298
    %v3503 = vadd.f32 %v3107, %v3419
    %v3504 = vadd.f32 %v3108, %v3421
    %v3505 = vadd.f32 %v3109, %v3300
    %v3506 = vadd.f32 %v3110, %v3302
    %v3507 = vadd.f32 %v3111, %v3423
    %v3508 = vadd.f32 %v3112, %v3425
    %v3509 = vadd.f32 %v3113, %v3306
    %v3510 = vadd.f32 %v3114, %v3308
    %v3511 = vadd.f32 %v3115, %v3429
    %v3512 = vadd.f32 %v3116, %v3431
    %v3513 = vadd.f32 %v3117, %v3310
    %v3514 = vadd.f32 %v3118, %v3312
    %v3515 = vadd.f32 %v3119, %v3433
    %v3516 = vadd.f32 %v3120, %v3435
    %v3517 = vadd.f32 %v3121, %v3316
    %v3518 = vadd.f32 %v3122, %v3318
    %v3519 = vadd.f32 %v3123, %v3439
    %v3520 = vadd.f32 %v3124, %v3441
    %v3521 = vadd.f32 %v3125, %v3320
    %v3522 = vadd.f32 %v3126, %v3322
    %v3523 = vadd.f32 %v3127, %v3443
    %v3524 = vadd.f32 %v3128, %v3445
    %v3525 = vadd.f32 %v3129, %v3326
    %v3526 = vadd.f32 %v3130, %v3328
    %v3527 = vadd.f32 %v3131, %v3449
    %v3528 = vadd.f32 %v3132, %v3451
    %v3529 = vadd.f32 %v3133, %v3330
    %v3530 = vadd.f32 %v3134, %v3332
    %v3531 = vadd.f32 %v3135, %v3453
    %v3532 = vadd.f32 %v3136, %v3455
    %v3533 = vadd.f32 %v3137, %v3336
    %v3534 = vadd.f32 %v3138, %v3338
    %v3535 = vadd.f32 %v3139, %v3459
    %v3536 = vadd.f32 %v3140, %v3461
    %v3537 = vadd.f32 %v3141, %v3340
    %v3538 = vadd.f32 %v3142, %v3342
    %v3539 = vadd.f32 %v3143, %v3463
    %v3540 = vadd.f32 %v3144, %v3465
    %v3541 = vadd.f32 %v3145, %v3346
    %v3542 = vadd.f32 %v3146, %v3348
    %v3543 = vadd.f32 %v3147, %v3469
    %v3544 = vadd.f32 %v3148, %v3471
    %v3545 = vadd.f32 %v3149, %v3350
    %v3546 = vadd.f32 %v3150, %v3352
    %v3547 = vadd.f32 %v3151, %v3473
    %v3548 = vadd.f32 %v3152, %v3475
    %v3549 = vld [vmem:[#allocation2 + $0x12] sm:$0xff]
    %v3550 = vld [vmem:[#allocation2 + $0x1a] sm:$0xff]
    %v3551 = vld [vmem:[#allocation2 + $0x22] sm:$0xff]
    %v3552 = vld [vmem:[#allocation2 + $0x2a] sm:$0xff]
    %v3553 = vld [vmem:[#allocation2 + $0x32] sm:$0xff]
    %v3554 = vld [vmem:[#allocation2 + $0x3a] sm:$0xff]
    %v3555 = vld [vmem:[#allocation2 + $0x42] sm:$0xff]
    %v3556 = vld [vmem:[#allocation2 + $0x4a] sm:$0xff]
    %v3557 = vld [vmem:[#allocation2 + $0x52] sm:$0xff]
    %v3558 = vld [vmem:[#allocation2 + $0x5a] sm:$0xff]
    %v3559 = vld [vmem:[#allocation2 + $0x62] sm:$0xff]
    %v3560 = vld [vmem:[#allocation2 + $0x6a] sm:$0xff]
    %v3561 = vld [vmem:[#allocation2 + $0x72] sm:$0xff]
    %v3562 = vld [vmem:[#allocation2 + $0x7a] sm:$0xff]
    %v3563 = vld [vmem:[#allocation2 + $0x82] sm:$0xff]
    %v3564 = vld [vmem:[#allocation2 + $0x8a] sm:$0xff]
    %v3565 = vld [vmem:[#allocation2 + $0x92] sm:$0xff]
    %v3566 = vld [vmem:[#allocation2 + $0x9a] sm:$0xff]
    %v3567 = vpack.c.bf16 %v3550, %v3549
    %v3568 = vpack.c.bf16 %v3552, %v3551
    %v3569 = vpack.c.bf16 %v3554, %v3553
    %v3570 = vpack.c.bf16 %v3556, %v3555
    %v3571 = vpack.c.bf16 %v3558, %v3557
    %v3572 = vpack.c.bf16 %v3560, %v3559
    %v3573 = vpack.c.bf16 %v3562, %v3561
    %v3574 = vpack.c.bf16 %v3564, %v3563
    %v3575 = vpack.c.bf16 %v3566, %v3565
    %v3576 = vld [vmem:[%s2 + $0x90] sm:$0xff]
    %v3577 = vld [vmem:[%s2 + $0x98] sm:$0xff]
    %v3580 = vunpack.c.l.b16 %v3576
    %v3581 = vunpack.c.h.b16 %v3576
    %v3582 = vunpack.c.l.b16 %v3577
    %v3583 = vunpack.c.h.b16 %v3577
    %v3584 = vpack.c.b16 %v3580, %v3580
    %v3585 = vpack.c.b16 %v3581, %v3581
    %v3586 = vpack.c.b16 %v3582, %v3582
    %v3587 = vpack.c.b16 %v3583, %v3583
    %v3589 = vsel %vm82, %v3567, 0
    %v3592 = vsel %vm82, %v3568, 0
    %v3595 = vsel %vm82, %v3569, 0
    %v3598 = vsel %vm82, %v3570, 0
    %v3601 = vsel %vm82, %v3571, 0
    %v3604 = vsel %vm82, %v3572, 0
    %v3607 = vsel %vm82, %v3573, 0
    %v3610 = vsel %vm82, %v3574, 0
    %v3613 = vsel %vm82, %v3575, 0
    %v3616 = vsel %vm223, %v3584, 0
    %v3619 = vsel %vm223, %v3585, 0
    %v3622 = vsel %vm223, %v3586, 0
    %v3625 = vsel %vm223, %v3587, 0
    %3627 = vmatprep.subr.bf16.mxu0 %v3619
    %3628 = vmatpush1.bf16.msra.mxu0 %v3616
    %3629 = vmatprep.subr.bf16.mxu0 0
    %3630 = vmatpush1.bf16.msra.mxu0 0
    %3631 = vmatprep.subr.bf16.mxu0 0
    %3632 = vmatpush1.bf16.msra.mxu0 0
    %3633 = vmatprep.subr.bf16.mxu0 0
    %3634 = vmatpush1.bf16.msra.mxu0 0
    %3635 = vmatprep.subr.bf16.mxu0 0
    %3636 = vmatpush1.bf16.msra.mxu0 0
    %3637 = vmatprep.subr.bf16.mxu0 0
    %3638 = vmatpush1.bf16.msra.mxu0 0
    %3639 = vmatprep.subr.bf16.mxu0 0
    %3640 = vmatpush1.bf16.msra.mxu0 0
    %3641 = vmatprep.subr.bf16.mxu0 0
    %3642 = vmatpush1.bf16.msra.mxu0 0
    %3643 = vmatprep.subr.bf16.mxu0 0
    %3644 = vmatpush1.bf16.msra.mxu0 0
    %3645 = vmatprep.subr.bf16.mxu0 0
    %3646 = vmatpush1.bf16.msra.mxu0 0
    %3647 = vmatprep.subr.bf16.mxu0 0
    %3648 = vmatpush1.bf16.msra.mxu0 0
    %3649 = vmatprep.subr.bf16.mxu0 0
    %3650 = vmatpush1.bf16.msra.mxu0 0
    %3651 = vmatprep.subr.bf16.mxu0 0
    %3652 = vmatpush1.bf16.msra.mxu0 0
    %3653 = vmatprep.subr.bf16.mxu0 0
    %3654 = vmatpush1.bf16.msra.mxu0 0
    %3655 = vmatprep.subr.bf16.mxu0 0
    %3656 = vmatpush1.bf16.msra.mxu0 0
    %3657 = vmatprep.subr.bf16.mxu0 0
    %3658 = vmatpush1.bf16.msra.mxu0 0
    %3659 = vmatprep.mubr.bf16.mxu0 0
    %3660 = vmatmul.mubr.bf16.gmra.mrb[0].mxu0 %v3589
    %v3661 = vpop.f32.mrb[0].mxu0
    %v3662 = vadd.f32 0.0, %v3661
    %v3663 = vpop.f32.mrb[0].mxu0
    %v3664 = vadd.f32 0.0, %v3663
    %v3665 = vpop.f32.mrb[0].mxu0
    %v3666 = vadd.f32 0.0, %v3665
    %v3667 = vpop.f32.mrb[0].mxu0
    %v3668 = vadd.f32 0.0, %v3667
    %3669 = vmatprep.mubr.bf16.mxu0 0
    %3670 = vmatmul.mubr.bf16.gmra.mrb[0].mxu0 %v3592
    %v3671 = vpop.f32.mrb[0].mxu0
    %v3672 = vadd.f32 0.0, %v3671
    %v3673 = vpop.f32.mrb[0].mxu0
    %v3674 = vadd.f32 0.0, %v3673
    %v3675 = vpop.f32.mrb[0].mxu0
    %v3676 = vadd.f32 0.0, %v3675
    %v3677 = vpop.f32.mrb[0].mxu0
    %v3678 = vadd.f32 0.0, %v3677
    %3679 = vmatprep.mubr.bf16.mxu0 0
    %3680 = vmatmul.mubr.bf16.gmra.mrb[0].mxu0 %v3595
    %v3681 = vpop.f32.mrb[0].mxu0
    %v3682 = vadd.f32 0.0, %v3681
    %v3683 = vpop.f32.mrb[0].mxu0
    %v3684 = vadd.f32 0.0, %v3683
    %v3685 = vpop.f32.mrb[0].mxu0
    %v3686 = vadd.f32 0.0, %v3685
    %v3687 = vpop.f32.mrb[0].mxu0
    %v3688 = vadd.f32 0.0, %v3687
    %3689 = vmatprep.mubr.bf16.mxu0 0
    %3690 = vmatmul.mubr.bf16.gmra.mrb[0].mxu0 %v3598
    %v3691 = vpop.f32.mrb[0].mxu0
    %v3692 = vadd.f32 0.0, %v3691
    %v3693 = vpop.f32.mrb[0].mxu0
    %v3694 = vadd.f32 0.0, %v3693
    %v3695 = vpop.f32.mrb[0].mxu0
    %v3696 = vadd.f32 0.0, %v3695
    %v3697 = vpop.f32.mrb[0].mxu0
    %v3698 = vadd.f32 0.0, %v3697
    %3699 = vmatprep.mubr.bf16.mxu0 0
    %3700 = vmatmul.mubr.bf16.gmra.mrb[0].mxu0 %v3601
    %v3701 = vpop.f32.mrb[0].mxu0
    %v3702 = vadd.f32 0.0, %v3701
    %v3703 = vpop.f32.mrb[0].mxu0
    %v3704 = vadd.f32 0.0, %v3703
    %v3705 = vpop.f32.mrb[0].mxu0
    %v3706 = vadd.f32 0.0, %v3705
    %v3707 = vpop.f32.mrb[0].mxu0
    %v3708 = vadd.f32 0.0, %v3707
    %3709 = vmatprep.mubr.bf16.mxu0 0
    %3710 = vmatmul.mubr.bf16.gmra.mrb[0].mxu0 %v3604
    %v3711 = vpop.f32.mrb[0].mxu0
    %v3712 = vadd.f32 0.0, %v3711
    %v3713 = vpop.f32.mrb[0].mxu0
    %v3714 = vadd.f32 0.0, %v3713
    %v3715 = vpop.f32.mrb[0].mxu0
    %v3716 = vadd.f32 0.0, %v3715
    %v3717 = vpop.f32.mrb[0].mxu0
    %v3718 = vadd.f32 0.0, %v3717
    %3719 = vmatprep.mubr.bf16.mxu0 0
    %3720 = vmatmul.mubr.bf16.gmra.mrb[0].mxu0 %v3607
    %v3721 = vpop.f32.mrb[0].mxu0
    %v3722 = vadd.f32 0.0, %v3721
    %v3723 = vpop.f32.mrb[0].mxu0
    %v3724 = vadd.f32 0.0, %v3723
    %v3725 = vpop.f32.mrb[0].mxu0
    %v3726 = vadd.f32 0.0, %v3725
    %v3727 = vpop.f32.mrb[0].mxu0
    %v3728 = vadd.f32 0.0, %v3727
    %3729 = vmatprep.mubr.bf16.mxu0 0
    %3730 = vmatmul.mubr.bf16.gmra.mrb[0].mxu0 %v3610
    %v3731 = vpop.f32.mrb[0].mxu0
    %v3732 = vadd.f32 0.0, %v3731
    %v3733 = vpop.f32.mrb[0].mxu0
    %v3734 = vadd.f32 0.0, %v3733
    %v3735 = vpop.f32.mrb[0].mxu0
    %v3736 = vadd.f32 0.0, %v3735
    %v3737 = vpop.f32.mrb[0].mxu0
    %v3738 = vadd.f32 0.0, %v3737
    %3739 = vmatprep.mubr.bf16.mxu0 0
    %3740 = vmatmul.mubr.bf16.gmra.mrb[0].mxu0 %v3613
    %v3741 = vpop.f32.mrb[0].mxu0
    %v3742 = vadd.f32 0.0, %v3741
    %v3743 = vpop.f32.mrb[0].mxu0
    %v3744 = vadd.f32 0.0, %v3743
    %v3745 = vpop.f32.mrb[0].mxu0
    %v3746 = vadd.f32 0.0, %v3745
    %v3747 = vpop.f32.mrb[0].mxu0
    %v3748 = vadd.f32 0.0, %v3747
    %3749 = vdwg.mxu0
    %3750 = vmatprep.subr.bf16.mxu0 %v3625
    %3751 = vmatpush1.bf16.msra.mxu0 %v3622
    %3752 = vmatprep.subr.bf16.mxu0 0
    %3753 = vmatpush1.bf16.msra.mxu0 0
    %3754 = vmatprep.subr.bf16.mxu0 0
    %3755 = vmatpush1.bf16.msra.mxu0 0
    %3756 = vmatprep.subr.bf16.mxu0 0
    %3757 = vmatpush1.bf16.msra.mxu0 0
    %3758 = vmatprep.subr.bf16.mxu0 0
    %3759 = vmatpush1.bf16.msra.mxu0 0
    %3760 = vmatprep.subr.bf16.mxu0 0
    %3761 = vmatpush1.bf16.msra.mxu0 0
    %3762 = vmatprep.subr.bf16.mxu0 0
    %3763 = vmatpush1.bf16.msra.mxu0 0
    %3764 = vmatprep.subr.bf16.mxu0 0
    %3765 = vmatpush1.bf16.msra.mxu0 0
    %3766 = vmatprep.subr.bf16.mxu0 0
    %3767 = vmatpush1.bf16.msra.mxu0 0
    %3768 = vmatprep.subr.bf16.mxu0 0
    %3769 = vmatpush1.bf16.msra.mxu0 0
    %3770 = vmatprep.subr.bf16.mxu0 0
    %3771 = vmatpush1.bf16.msra.mxu0 0
    %3772 = vmatprep.subr.bf16.mxu0 0
    %3773 = vmatpush1.bf16.msra.mxu0 0
    %3774 = vmatprep.subr.bf16.mxu0 0
    %3775 = vmatpush1.bf16.msra.mxu0 0
    %3776 = vmatprep.subr.bf16.mxu0 0
    %3777 = vmatpush1.bf16.msra.mxu0 0
    %3778 = vmatprep.subr.bf16.mxu0 0
    %3779 = vmatpush1.bf16.msra.mxu0 0
    %3780 = vmatprep.subr.bf16.mxu0 0
    %3781 = vmatpush1.bf16.msra.mxu0 0
    %3782 = vmatprep.mubr.bf16.mxu0 0
    %3783 = vmatmul.mubr.bf16.gmra.mrb[0].mxu0 %v3589
    %v3784 = vpop.f32.mrb[0].mxu0
    %v3785 = vadd.f32 0.0, %v3784
    %v3786 = vpop.f32.mrb[0].mxu0
    %v3787 = vadd.f32 0.0, %v3786
    %v3788 = vpop.f32.mrb[0].mxu0
    %v3789 = vadd.f32 0.0, %v3788
    %v3790 = vpop.f32.mrb[0].mxu0
    %v3791 = vadd.f32 0.0, %v3790
    %3792 = vmatprep.mubr.bf16.mxu0 0
    %3793 = vmatmul.mubr.bf16.gmra.mrb[0].mxu0 %v3592
    %v3794 = vpop.f32.mrb[0].mxu0
    %v3795 = vadd.f32 0.0, %v3794
    %v3796 = vpop.f32.mrb[0].mxu0
    %v3797 = vadd.f32 0.0, %v3796
    %v3798 = vpop.f32.mrb[0].mxu0
    %v3799 = vadd.f32 0.0, %v3798
    %v3800 = vpop.f32.mrb[0].mxu0
    %v3801 = vadd.f32 0.0, %v3800
    %3802 = vmatprep.mubr.bf16.mxu0 0
    %3803 = vmatmul.mubr.bf16.gmra.mrb[0].mxu0 %v3595
    %v3804 = vpop.f32.mrb[0].mxu0
    %v3805 = vadd.f32 0.0, %v3804
    %v3806 = vpop.f32.mrb[0].mxu0
    %v3807 = vadd.f32 0.0, %v3806
    %v3808 = vpop.f32.mrb[0].mxu0
    %v3809 = vadd.f32 0.0, %v3808
    %v3810 = vpop.f32.mrb[0].mxu0
    %v3811 = vadd.f32 0.0, %v3810
    %3812 = vmatprep.mubr.bf16.mxu0 0
    %3813 = vmatmul.mubr.bf16.gmra.mrb[0].mxu0 %v3598
    %v3814 = vpop.f32.mrb[0].mxu0
    %v3815 = vadd.f32 0.0, %v3814
    %v3816 = vpop.f32.mrb[0].mxu0
    %v3817 = vadd.f32 0.0, %v3816
    %v3818 = vpop.f32.mrb[0].mxu0
    %v3819 = vadd.f32 0.0, %v3818
    %v3820 = vpop.f32.mrb[0].mxu0
    %v3821 = vadd.f32 0.0, %v3820
    %3822 = vmatprep.mubr.bf16.mxu0 0
    %3823 = vmatmul.mubr.bf16.gmra.mrb[0].mxu0 %v3601
    %v3824 = vpop.f32.mrb[0].mxu0
    %v3825 = vadd.f32 0.0, %v3824
    %v3826 = vpop.f32.mrb[0].mxu0
    %v3827 = vadd.f32 0.0, %v3826
    %v3828 = vpop.f32.mrb[0].mxu0
    %v3829 = vadd.f32 0.0, %v3828
    %v3830 = vpop.f32.mrb[0].mxu0
    %v3831 = vadd.f32 0.0, %v3830
    %3832 = vmatprep.mubr.bf16.mxu0 0
    %3833 = vmatmul.mubr.bf16.gmra.mrb[0].mxu0 %v3604
    %v3834 = vpop.f32.mrb[0].mxu0
    %v3835 = vadd.f32 0.0, %v3834
    %v3836 = vpop.f32.mrb[0].mxu0
    %v3837 = vadd.f32 0.0, %v3836
    %v3838 = vpop.f32.mrb[0].mxu0
    %v3839 = vadd.f32 0.0, %v3838
    %v3840 = vpop.f32.mrb[0].mxu0
    %v3841 = vadd.f32 0.0, %v3840
    %3842 = vmatprep.mubr.bf16.mxu0 0
    %3843 = vmatmul.mubr.bf16.gmra.mrb[0].mxu0 %v3607
    %v3844 = vpop.f32.mrb[0].mxu0
    %v3845 = vadd.f32 0.0, %v3844
    %v3846 = vpop.f32.mrb[0].mxu0
    %v3847 = vadd.f32 0.0, %v3846
    %v3848 = vpop.f32.mrb[0].mxu0
    %v3849 = vadd.f32 0.0, %v3848
    %v3850 = vpop.f32.mrb[0].mxu0
    %v3851 = vadd.f32 0.0, %v3850
    %3852 = vmatprep.mubr.bf16.mxu0 0
    %3853 = vmatmul.mubr.bf16.gmra.mrb[0].mxu0 %v3610
    %v3854 = vpop.f32.mrb[0].mxu0
    %v3855 = vadd.f32 0.0, %v3854
    %v3856 = vpop.f32.mrb[0].mxu0
    %v3857 = vadd.f32 0.0, %v3856
    %v3858 = vpop.f32.mrb[0].mxu0
    %v3859 = vadd.f32 0.0, %v3858
    %v3860 = vpop.f32.mrb[0].mxu0
    %v3861 = vadd.f32 0.0, %v3860
    %3862 = vmatprep.mubr.bf16.mxu0 0
    %3863 = vmatmul.mubr.bf16.gmra.mrb[0].mxu0 %v3613
    %v3864 = vpop.f32.mrb[0].mxu0
    %v3865 = vadd.f32 0.0, %v3864
    %v3866 = vpop.f32.mrb[0].mxu0
    %v3867 = vadd.f32 0.0, %v3866
    %v3868 = vpop.f32.mrb[0].mxu0
    %v3869 = vadd.f32 0.0, %v3868
    %v3870 = vpop.f32.mrb[0].mxu0
    %v3871 = vadd.f32 0.0, %v3870
    %3872 = vdwg.mxu0
    %v3873 = vadd.f32 %v3477, %v3662
    %v3874 = vadd.f32 %v3478, %v3664
    %v3875 = vadd.f32 %v3479, %v3785
    %v3876 = vadd.f32 %v3480, %v3787
    %v3877 = vadd.f32 %v3481, %v3666
    %v3878 = vadd.f32 %v3482, %v3668
    %v3879 = vadd.f32 %v3483, %v3789
    %v3880 = vadd.f32 %v3484, %v3791
    %v3881 = vadd.f32 %v3485, %v3672
    %v3882 = vadd.f32 %v3486, %v3674
    %v3883 = vadd.f32 %v3487, %v3795
    %v3884 = vadd.f32 %v3488, %v3797
    %v3885 = vadd.f32 %v3489, %v3676
    %v3886 = vadd.f32 %v3490, %v3678
    %v3887 = vadd.f32 %v3491, %v3799
    %v3888 = vadd.f32 %v3492, %v3801
    %v3889 = vadd.f32 %v3493, %v3682
    %v3890 = vadd.f32 %v3494, %v3684
    %v3891 = vadd.f32 %v3495, %v3805
    %v3892 = vadd.f32 %v3496, %v3807
    %v3893 = vadd.f32 %v3497, %v3686
    %v3894 = vadd.f32 %v3498, %v3688
    %v3895 = vadd.f32 %v3499, %v3809
    %v3896 = vadd.f32 %v3500, %v3811
    %v3897 = vadd.f32 %v3501, %v3692
    %v3898 = vadd.f32 %v3502, %v3694
    %v3899 = vadd.f32 %v3503, %v3815
    %v3900 = vadd.f32 %v3504, %v3817
    %v3901 = vadd.f32 %v3505, %v3696
    %v3902 = vadd.f32 %v3506, %v3698
    %v3903 = vadd.f32 %v3507, %v3819
    %v3904 = vadd.f32 %v3508, %v3821
    %v3905 = vadd.f32 %v3509, %v3702
    %v3906 = vadd.f32 %v3510, %v3704
    %v3907 = vadd.f32 %v3511, %v3825
    %v3908 = vadd.f32 %v3512, %v3827
    %v3909 = vadd.f32 %v3513, %v3706
    %v3910 = vadd.f32 %v3514, %v3708
    %v3911 = vadd.f32 %v3515, %v3829
    %v3912 = vadd.f32 %v3516, %v3831
    %v3913 = vadd.f32 %v3517, %v3712
    %v3914 = vadd.f32 %v3518, %v3714
    %v3915 = vadd.f32 %v3519, %v3835
    %v3916 = vadd.f32 %v3520, %v3837
    %v3917 = vadd.f32 %v3521, %v3716
    %v3918 = vadd.f32 %v3522, %v3718
    %v3919 = vadd.f32 %v3523, %v3839
    %v3920 = vadd.f32 %v3524, %v3841
    %v3921 = vadd.f32 %v3525, %v3722
    %v3922 = vadd.f32 %v3526, %v3724
    %v3923 = vadd.f32 %v3527, %v3845
    %v3924 = vadd.f32 %v3528, %v3847
    %v3925 = vadd.f32 %v3529, %v3726
    %v3926 = vadd.f32 %v3530, %v3728
    %v3927 = vadd.f32 %v3531, %v3849
    %v3928 = vadd.f32 %v3532, %v3851
    %v3929 = vadd.f32 %v3533, %v3732
    %v3930 = vadd.f32 %v3534, %v3734
    %v3931 = vadd.f32 %v3535, %v3855
    %v3932 = vadd.f32 %v3536, %v3857
    %v3933 = vadd.f32 %v3537, %v3736
    %v3934 = vadd.f32 %v3538, %v3738
    %v3935 = vadd.f32 %v3539, %v3859
    %v3936 = vadd.f32 %v3540, %v3861
    %v3937 = vadd.f32 %v3541, %v3742
    %v3938 = vadd.f32 %v3542, %v3744
    %v3939 = vadd.f32 %v3543, %v3865
    %v3940 = vadd.f32 %v3544, %v3867
    %v3941 = vadd.f32 %v3545, %v3746
    %v3942 = vadd.f32 %v3546, %v3748
    %v3943 = vadd.f32 %v3547, %v3869
    %v3944 = vadd.f32 %v3548, %v3871
    %v3945 = vld [vmem:[#allocation2 + $0x13] sm:$0xff]
    %v3946 = vld [vmem:[#allocation2 + $0x1b] sm:$0xff]
    %v3947 = vld [vmem:[#allocation2 + $0x23] sm:$0xff]
    %v3948 = vld [vmem:[#allocation2 + $0x2b] sm:$0xff]
    %v3949 = vld [vmem:[#allocation2 + $0x33] sm:$0xff]
    %v3950 = vld [vmem:[#allocation2 + $0x3b] sm:$0xff]
    %v3951 = vld [vmem:[#allocation2 + $0x43] sm:$0xff]
    %v3952 = vld [vmem:[#allocation2 + $0x4b] sm:$0xff]
    %v3953 = vld [vmem:[#allocation2 + $0x53] sm:$0xff]
    %v3954 = vld [vmem:[#allocation2 + $0x5b] sm:$0xff]
    %v3955 = vld [vmem:[#allocation2 + $0x63] sm:$0xff]
    %v3956 = vld [vmem:[#allocation2 + $0x6b] sm:$0xff]
    %v3957 = vld [vmem:[#allocation2 + $0x73] sm:$0xff]
    %v3958 = vld [vmem:[#allocation2 + $0x7b] sm:$0xff]
    %v3959 = vld [vmem:[#allocation2 + $0x83] sm:$0xff]
    %v3960 = vld [vmem:[#allocation2 + $0x8b] sm:$0xff]
    %v3961 = vld [vmem:[#allocation2 + $0x93] sm:$0xff]
    %v3962 = vld [vmem:[#allocation2 + $0x9b] sm:$0xff]
    %v3963 = vpack.c.bf16 %v3946, %v3945
    %v3964 = vpack.c.bf16 %v3948, %v3947
    %v3965 = vpack.c.bf16 %v3950, %v3949
    %v3966 = vpack.c.bf16 %v3952, %v3951
    %v3967 = vpack.c.bf16 %v3954, %v3953
    %v3968 = vpack.c.bf16 %v3956, %v3955
    %v3969 = vpack.c.bf16 %v3958, %v3957
    %v3970 = vpack.c.bf16 %v3960, %v3959
    %v3971 = vpack.c.bf16 %v3962, %v3961
    %v3972 = vld [vmem:[%s2 + $0xa0] sm:$0xff]
    %v3973 = vld [vmem:[%s2 + $0xa8] sm:$0xff]
    %v3976 = vunpack.c.l.b16 %v3972
    %v3977 = vunpack.c.h.b16 %v3972
    %v3978 = vunpack.c.l.b16 %v3973
    %v3979 = vunpack.c.h.b16 %v3973
    %v3980 = vpack.c.b16 %v3976, %v3976
    %v3981 = vpack.c.b16 %v3977, %v3977
    %v3982 = vpack.c.b16 %v3978, %v3978
    %v3983 = vpack.c.b16 %v3979, %v3979
    %v3985 = vsel %vm82, %v3963, 0
    %v3988 = vsel %vm82, %v3964, 0
    %v3991 = vsel %vm82, %v3965, 0
    %v3994 = vsel %vm82, %v3966, 0
    %v3997 = vsel %vm82, %v3967, 0
    %v4000 = vsel %vm82, %v3968, 0
    %v4003 = vsel %vm82, %v3969, 0
    %v4006 = vsel %vm82, %v3970, 0
    %v4009 = vsel %vm82, %v3971, 0
    %v4012 = vsel %vm223, %v3980, 0
    %v4015 = vsel %vm223, %v3981, 0
    %v4018 = vsel %vm223, %v3982, 0
    %v4021 = vsel %vm223, %v3983, 0
    %4023 = vmatprep.subr.bf16.mxu0 %v4015
    %4024 = vmatpush1.bf16.msra.mxu0 %v4012
    %4025 = vmatprep.subr.bf16.mxu0 0
    %4026 = vmatpush1.bf16.msra.mxu0 0
    %4027 = vmatprep.subr.bf16.mxu0 0
    %4028 = vmatpush1.bf16.msra.mxu0 0
    %4029 = vmatprep.subr.bf16.mxu0 0
    %4030 = vmatpush1.bf16.msra.mxu0 0
    %4031 = vmatprep.subr.bf16.mxu0 0
    %4032 = vmatpush1.bf16.msra.mxu0 0
    %4033 = vmatprep.subr.bf16.mxu0 0
    %4034 = vmatpush1.bf16.msra.mxu0 0
    %4035 = vmatprep.subr.bf16.mxu0 0
    %4036 = vmatpush1.bf16.msra.mxu0 0
    %4037 = vmatprep.subr.bf16.mxu0 0
    %4038 = vmatpush1.bf16.msra.mxu0 0
    %4039 = vmatprep.subr.bf16.mxu0 0
    %4040 = vmatpush1.bf16.msra.mxu0 0
    %4041 = vmatprep.subr.bf16.mxu0 0
    %4042 = vmatpush1.bf16.msra.mxu0 0
    %4043 = vmatprep.subr.bf16.mxu0 0
    %4044 = vmatpush1.bf16.msra.mxu0 0
    %4045 = vmatprep.subr.bf16.mxu0 0
    %4046 = vmatpush1.bf16.msra.mxu0 0
    %4047 = vmatprep.subr.bf16.mxu0 0
    %4048 = vmatpush1.bf16.msra.mxu0 0
    %4049 = vmatprep.subr.bf16.mxu0 0
    %4050 = vmatpush1.bf16.msra.mxu0 0
    %4051 = vmatprep.subr.bf16.mxu0 0
    %4052 = vmatpush1.bf16.msra.mxu0 0
    %4053 = vmatprep.subr.bf16.mxu0 0
    %4054 = vmatpush1.bf16.msra.mxu0 0
    %4055 = vmatprep.mubr.bf16.mxu0 0
    %4056 = vmatmul.mubr.bf16.gmra.mrb[0].mxu0 %v3985
    %v4057 = vpop.f32.mrb[0].mxu0
    %v4058 = vadd.f32 0.0, %v4057
    %v4059 = vpop.f32.mrb[0].mxu0
    %v4060 = vadd.f32 0.0, %v4059
    %v4061 = vpop.f32.mrb[0].mxu0
    %v4062 = vadd.f32 0.0, %v4061
    %v4063 = vpop.f32.mrb[0].mxu0
    %v4064 = vadd.f32 0.0, %v4063
    %4065 = vmatprep.mubr.bf16.mxu0 0
    %4066 = vmatmul.mubr.bf16.gmra.mrb[0].mxu0 %v3988
    %v4067 = vpop.f32.mrb[0].mxu0
    %v4068 = vadd.f32 0.0, %v4067
    %v4069 = vpop.f32.mrb[0].mxu0
    %v4070 = vadd.f32 0.0, %v4069
    %v4071 = vpop.f32.mrb[0].mxu0
    %v4072 = vadd.f32 0.0, %v4071
    %v4073 = vpop.f32.mrb[0].mxu0
    %v4074 = vadd.f32 0.0, %v4073
    %4075 = vmatprep.mubr.bf16.mxu0 0
    %4076 = vmatmul.mubr.bf16.gmra.mrb[0].mxu0 %v3991
    %v4077 = vpop.f32.mrb[0].mxu0
    %v4078 = vadd.f32 0.0, %v4077
    %v4079 = vpop.f32.mrb[0].mxu0
    %v4080 = vadd.f32 0.0, %v4079
    %v4081 = vpop.f32.mrb[0].mxu0
    %v4082 = vadd.f32 0.0, %v4081
    %v4083 = vpop.f32.mrb[0].mxu0
    %v4084 = vadd.f32 0.0, %v4083
    %4085 = vmatprep.mubr.bf16.mxu0 0
    %4086 = vmatmul.mubr.bf16.gmra.mrb[0].mxu0 %v3994
    %v4087 = vpop.f32.mrb[0].mxu0
    %v4088 = vadd.f32 0.0, %v4087
    %v4089 = vpop.f32.mrb[0].mxu0
    %v4090 = vadd.f32 0.0, %v4089
    %v4091 = vpop.f32.mrb[0].mxu0
    %v4092 = vadd.f32 0.0, %v4091
    %v4093 = vpop.f32.mrb[0].mxu0
    %v4094 = vadd.f32 0.0, %v4093
    %4095 = vmatprep.mubr.bf16.mxu0 0
    %4096 = vmatmul.mubr.bf16.gmra.mrb[0].mxu0 %v3997
    %v4097 = vpop.f32.mrb[0].mxu0
    %v4098 = vadd.f32 0.0, %v4097
    %v4099 = vpop.f32.mrb[0].mxu0
    %v4100 = vadd.f32 0.0, %v4099
    %v4101 = vpop.f32.mrb[0].mxu0
    %v4102 = vadd.f32 0.0, %v4101
    %v4103 = vpop.f32.mrb[0].mxu0
    %v4104 = vadd.f32 0.0, %v4103
    %4105 = vmatprep.mubr.bf16.mxu0 0
    %4106 = vmatmul.mubr.bf16.gmra.mrb[0].mxu0 %v4000
    %v4107 = vpop.f32.mrb[0].mxu0
    %v4108 = vadd.f32 0.0, %v4107
    %v4109 = vpop.f32.mrb[0].mxu0
    %v4110 = vadd.f32 0.0, %v4109
    %v4111 = vpop.f32.mrb[0].mxu0
    %v4112 = vadd.f32 0.0, %v4111
    %v4113 = vpop.f32.mrb[0].mxu0
    %v4114 = vadd.f32 0.0, %v4113
    %4115 = vmatprep.mubr.bf16.mxu0 0
    %4116 = vmatmul.mubr.bf16.gmra.mrb[0].mxu0 %v4003
    %v4117 = vpop.f32.mrb[0].mxu0
    %v4118 = vadd.f32 0.0, %v4117
    %v4119 = vpop.f32.mrb[0].mxu0
    %v4120 = vadd.f32 0.0, %v4119
    %v4121 = vpop.f32.mrb[0].mxu0
    %v4122 = vadd.f32 0.0, %v4121
    %v4123 = vpop.f32.mrb[0].mxu0
    %v4124 = vadd.f32 0.0, %v4123
    %4125 = vmatprep.mubr.bf16.mxu0 0
    %4126 = vmatmul.mubr.bf16.gmra.mrb[0].mxu0 %v4006
    %v4127 = vpop.f32.mrb[0].mxu0
    %v4128 = vadd.f32 0.0, %v4127
    %v4129 = vpop.f32.mrb[0].mxu0
    %v4130 = vadd.f32 0.0, %v4129
    %v4131 = vpop.f32.mrb[0].mxu0
    %v4132 = vadd.f32 0.0, %v4131
    %v4133 = vpop.f32.mrb[0].mxu0
    %v4134 = vadd.f32 0.0, %v4133
    %4135 = vmatprep.mubr.bf16.mxu0 0
    %4136 = vmatmul.mubr.bf16.gmra.mrb[0].mxu0 %v4009
    %v4137 = vpop.f32.mrb[0].mxu0
    %v4138 = vadd.f32 0.0, %v4137
    %v4139 = vpop.f32.mrb[0].mxu0
    %v4140 = vadd.f32 0.0, %v4139
    %v4141 = vpop.f32.mrb[0].mxu0
    %v4142 = vadd.f32 0.0, %v4141
    %v4143 = vpop.f32.mrb[0].mxu0
    %v4144 = vadd.f32 0.0, %v4143
    %4145 = vdwg.mxu0
    %4146 = vmatprep.subr.bf16.mxu0 %v4021
    %4147 = vmatpush1.bf16.msra.mxu0 %v4018
    %4148 = vmatprep.subr.bf16.mxu0 0
    %4149 = vmatpush1.bf16.msra.mxu0 0
    %4150 = vmatprep.subr.bf16.mxu0 0
    %4151 = vmatpush1.bf16.msra.mxu0 0
    %4152 = vmatprep.subr.bf16.mxu0 0
    %4153 = vmatpush1.bf16.msra.mxu0 0
    %4154 = vmatprep.subr.bf16.mxu0 0
    %4155 = vmatpush1.bf16.msra.mxu0 0
    %4156 = vmatprep.subr.bf16.mxu0 0
    %4157 = vmatpush1.bf16.msra.mxu0 0
    %4158 = vmatprep.subr.bf16.mxu0 0
    %4159 = vmatpush1.bf16.msra.mxu0 0
    %4160 = vmatprep.subr.bf16.mxu0 0
    %4161 = vmatpush1.bf16.msra.mxu0 0
    %4162 = vmatprep.subr.bf16.mxu0 0
    %4163 = vmatpush1.bf16.msra.mxu0 0
    %4164 = vmatprep.subr.bf16.mxu0 0
    %4165 = vmatpush1.bf16.msra.mxu0 0
    %4166 = vmatprep.subr.bf16.mxu0 0
    %4167 = vmatpush1.bf16.msra.mxu0 0
    %4168 = vmatprep.subr.bf16.mxu0 0
    %4169 = vmatpush1.bf16.msra.mxu0 0
    %4170 = vmatprep.subr.bf16.mxu0 0
    %4171 = vmatpush1.bf16.msra.mxu0 0
    %4172 = vmatprep.subr.bf16.mxu0 0
    %4173 = vmatpush1.bf16.msra.mxu0 0
    %4174 = vmatprep.subr.bf16.mxu0 0
    %4175 = vmatpush1.bf16.msra.mxu0 0
    %4176 = vmatprep.subr.bf16.mxu0 0
    %4177 = vmatpush1.bf16.msra.mxu0 0
    %4178 = vmatprep.mubr.bf16.mxu0 0
    %4179 = vmatmul.mubr.bf16.gmra.mrb[0].mxu0 %v3985
    %v4180 = vpop.f32.mrb[0].mxu0
    %v4181 = vadd.f32 0.0, %v4180
    %v4182 = vpop.f32.mrb[0].mxu0
    %v4183 = vadd.f32 0.0, %v4182
    %v4184 = vpop.f32.mrb[0].mxu0
    %v4185 = vadd.f32 0.0, %v4184
    %v4186 = vpop.f32.mrb[0].mxu0
    %v4187 = vadd.f32 0.0, %v4186
    %4188 = vmatprep.mubr.bf16.mxu0 0
    %4189 = vmatmul.mubr.bf16.gmra.mrb[0].mxu0 %v3988
    %v4190 = vpop.f32.mrb[0].mxu0
    %v4191 = vadd.f32 0.0, %v4190
    %v4192 = vpop.f32.mrb[0].mxu0
    %v4193 = vadd.f32 0.0, %v4192
    %v4194 = vpop.f32.mrb[0].mxu0
    %v4195 = vadd.f32 0.0, %v4194
    %v4196 = vpop.f32.mrb[0].mxu0
    %v4197 = vadd.f32 0.0, %v4196
    %4198 = vmatprep.mubr.bf16.mxu0 0
    %4199 = vmatmul.mubr.bf16.gmra.mrb[0].mxu0 %v3991
    %v4200 = vpop.f32.mrb[0].mxu0
    %v4201 = vadd.f32 0.0, %v4200
    %v4202 = vpop.f32.mrb[0].mxu0
    %v4203 = vadd.f32 0.0, %v4202
    %v4204 = vpop.f32.mrb[0].mxu0
    %v4205 = vadd.f32 0.0, %v4204
    %v4206 = vpop.f32.mrb[0].mxu0
    %v4207 = vadd.f32 0.0, %v4206
    %4208 = vmatprep.mubr.bf16.mxu0 0
    %4209 = vmatmul.mubr.bf16.gmra.mrb[0].mxu0 %v3994
    %v4210 = vpop.f32.mrb[0].mxu0
    %v4211 = vadd.f32 0.0, %v4210
    %v4212 = vpop.f32.mrb[0].mxu0
    %v4213 = vadd.f32 0.0, %v4212
    %v4214 = vpop.f32.mrb[0].mxu0
    %v4215 = vadd.f32 0.0, %v4214
    %v4216 = vpop.f32.mrb[0].mxu0
    %v4217 = vadd.f32 0.0, %v4216
    %4218 = vmatprep.mubr.bf16.mxu0 0
    %4219 = vmatmul.mubr.bf16.gmra.mrb[0].mxu0 %v3997
    %v4220 = vpop.f32.mrb[0].mxu0
    %v4221 = vadd.f32 0.0, %v4220
    %v4222 = vpop.f32.mrb[0].mxu0
    %v4223 = vadd.f32 0.0, %v4222
    %v4224 = vpop.f32.mrb[0].mxu0
    %v4225 = vadd.f32 0.0, %v4224
    %v4226 = vpop.f32.mrb[0].mxu0
    %v4227 = vadd.f32 0.0, %v4226
    %4228 = vmatprep.mubr.bf16.mxu0 0
    %4229 = vmatmul.mubr.bf16.gmra.mrb[0].mxu0 %v4000
    %v4230 = vpop.f32.mrb[0].mxu0
    %v4231 = vadd.f32 0.0, %v4230
    %v4232 = vpop.f32.mrb[0].mxu0
    %v4233 = vadd.f32 0.0, %v4232
    %v4234 = vpop.f32.mrb[0].mxu0
    %v4235 = vadd.f32 0.0, %v4234
    %v4236 = vpop.f32.mrb[0].mxu0
    %v4237 = vadd.f32 0.0, %v4236
    %4238 = vmatprep.mubr.bf16.mxu0 0
    %4239 = vmatmul.mubr.bf16.gmra.mrb[0].mxu0 %v4003
    %v4240 = vpop.f32.mrb[0].mxu0
    %v4241 = vadd.f32 0.0, %v4240
    %v4242 = vpop.f32.mrb[0].mxu0
    %v4243 = vadd.f32 0.0, %v4242
    %v4244 = vpop.f32.mrb[0].mxu0
    %v4245 = vadd.f32 0.0, %v4244
    %v4246 = vpop.f32.mrb[0].mxu0
    %v4247 = vadd.f32 0.0, %v4246
    %4248 = vmatprep.mubr.bf16.mxu0 0
    %4249 = vmatmul.mubr.bf16.gmra.mrb[0].mxu0 %v4006
    %v4250 = vpop.f32.mrb[0].mxu0
    %v4251 = vadd.f32 0.0, %v4250
    %v4252 = vpop.f32.mrb[0].mxu0
    %v4253 = vadd.f32 0.0, %v4252
    %v4254 = vpop.f32.mrb[0].mxu0
    %v4255 = vadd.f32 0.0, %v4254
    %v4256 = vpop.f32.mrb[0].mxu0
    %v4257 = vadd.f32 0.0, %v4256
    %4258 = vmatprep.mubr.bf16.mxu0 0
    %4259 = vmatmul.mubr.bf16.gmra.mrb[0].mxu0 %v4009
    %v4260 = vpop.f32.mrb[0].mxu0
    %v4261 = vadd.f32 0.0, %v4260
    %v4262 = vpop.f32.mrb[0].mxu0
    %v4263 = vadd.f32 0.0, %v4262
    %v4264 = vpop.f32.mrb[0].mxu0
    %v4265 = vadd.f32 0.0, %v4264
    %v4266 = vpop.f32.mrb[0].mxu0
    %v4267 = vadd.f32 0.0, %v4266
    %4268 = vdwg.mxu0
    %v4269 = vadd.f32 %v3873, %v4058
    %v4270 = vadd.f32 %v3874, %v4060
    %v4271 = vadd.f32 %v3875, %v4181
    %v4272 = vadd.f32 %v3876, %v4183
    %v4273 = vadd.f32 %v3877, %v4062
    %v4274 = vadd.f32 %v3878, %v4064
    %v4275 = vadd.f32 %v3879, %v4185
    %v4276 = vadd.f32 %v3880, %v4187
    %v4277 = vadd.f32 %v3881, %v4068
    %v4278 = vadd.f32 %v3882, %v4070
    %v4279 = vadd.f32 %v3883, %v4191
    %v4280 = vadd.f32 %v3884, %v4193
    %v4281 = vadd.f32 %v3885, %v4072
    %v4282 = vadd.f32 %v3886, %v4074
    %v4283 = vadd.f32 %v3887, %v4195
    %v4284 = vadd.f32 %v3888, %v4197
    %v4285 = vadd.f32 %v3889, %v4078
    %v4286 = vadd.f32 %v3890, %v4080
    %v4287 = vadd.f32 %v3891, %v4201
    %v4288 = vadd.f32 %v3892, %v4203
    %v4289 = vadd.f32 %v3893, %v4082
    %v4290 = vadd.f32 %v3894, %v4084
    %v4291 = vadd.f32 %v3895, %v4205
    %v4292 = vadd.f32 %v3896, %v4207
    %v4293 = vadd.f32 %v3897, %v4088
    %v4294 = vadd.f32 %v3898, %v4090
    %v4295 = vadd.f32 %v3899, %v4211
    %v4296 = vadd.f32 %v3900, %v4213
    %v4297 = vadd.f32 %v3901, %v4092
    %v4298 = vadd.f32 %v3902, %v4094
    %v4299 = vadd.f32 %v3903, %v4215
    %v4300 = vadd.f32 %v3904, %v4217
    %v4301 = vadd.f32 %v3905, %v4098
    %v4302 = vadd.f32 %v3906, %v4100
    %v4303 = vadd.f32 %v3907, %v4221
    %v4304 = vadd.f32 %v3908, %v4223
    %v4305 = vadd.f32 %v3909, %v4102
    %v4306 = vadd.f32 %v3910, %v4104
    %v4307 = vadd.f32 %v3911, %v4225
    %v4308 = vadd.f32 %v3912, %v4227
    %v4309 = vadd.f32 %v3913, %v4108
    %v4310 = vadd.f32 %v3914, %v4110
    %v4311 = vadd.f32 %v3915, %v4231
    %v4312 = vadd.f32 %v3916, %v4233
    %v4313 = vadd.f32 %v3917, %v4112
    %v4314 = vadd.f32 %v3918, %v4114
    %v4315 = vadd.f32 %v3919, %v4235
    %v4316 = vadd.f32 %v3920, %v4237
    %v4317 = vadd.f32 %v3921, %v4118
    %v4318 = vadd.f32 %v3922, %v4120
    %v4319 = vadd.f32 %v3923, %v4241
    %v4320 = vadd.f32 %v3924, %v4243
    %v4321 = vadd.f32 %v3925, %v4122
    %v4322 = vadd.f32 %v3926, %v4124
    %v4323 = vadd.f32 %v3927, %v4245
    %v4324 = vadd.f32 %v3928, %v4247
    %v4325 = vadd.f32 %v3929, %v4128
    %v4326 = vadd.f32 %v3930, %v4130
    %v4327 = vadd.f32 %v3931, %v4251
    %v4328 = vadd.f32 %v3932, %v4253
    %v4329 = vadd.f32 %v3933, %v4132
    %v4330 = vadd.f32 %v3934, %v4134
    %v4331 = vadd.f32 %v3935, %v4255
    %v4332 = vadd.f32 %v3936, %v4257
    %v4333 = vadd.f32 %v3937, %v4138
    %v4334 = vadd.f32 %v3938, %v4140
    %v4335 = vadd.f32 %v3939, %v4261
    %v4336 = vadd.f32 %v3940, %v4263
    %v4337 = vadd.f32 %v3941, %v4142
    %v4338 = vadd.f32 %v3942, %v4144
    %v4339 = vadd.f32 %v3943, %v4265
    %v4340 = vadd.f32 %v3944, %v4267
    %v4341 = vld [vmem:[#allocation2 + $0x14] sm:$0xff]
    %v4342 = vld [vmem:[#allocation2 + $0x1c] sm:$0xff]
    %v4343 = vld [vmem:[#allocation2 + $0x24] sm:$0xff]
    %v4344 = vld [vmem:[#allocation2 + $0x2c] sm:$0xff]
    %v4345 = vld [vmem:[#allocation2 + $0x34] sm:$0xff]
    %v4346 = vld [vmem:[#allocation2 + $0x3c] sm:$0xff]
    %v4347 = vld [vmem:[#allocation2 + $0x44] sm:$0xff]
    %v4348 = vld [vmem:[#allocation2 + $0x4c] sm:$0xff]
    %v4349 = vld [vmem:[#allocation2 + $0x54] sm:$0xff]
    %v4350 = vld [vmem:[#allocation2 + $0x5c] sm:$0xff]
    %v4351 = vld [vmem:[#allocation2 + $0x64] sm:$0xff]
    %v4352 = vld [vmem:[#allocation2 + $0x6c] sm:$0xff]
    %v4353 = vld [vmem:[#allocation2 + $0x74] sm:$0xff]
    %v4354 = vld [vmem:[#allocation2 + $0x7c] sm:$0xff]
    %v4355 = vld [vmem:[#allocation2 + $0x84] sm:$0xff]
    %v4356 = vld [vmem:[#allocation2 + $0x8c] sm:$0xff]
    %v4357 = vld [vmem:[#allocation2 + $0x94] sm:$0xff]
    %v4358 = vld [vmem:[#allocation2 + $0x9c] sm:$0xff]
    %v4359 = vpack.c.bf16 %v4342, %v4341
    %v4360 = vpack.c.bf16 %v4344, %v4343
    %v4361 = vpack.c.bf16 %v4346, %v4345
    %v4362 = vpack.c.bf16 %v4348, %v4347
    %v4363 = vpack.c.bf16 %v4350, %v4349
    %v4364 = vpack.c.bf16 %v4352, %v4351
    %v4365 = vpack.c.bf16 %v4354, %v4353
    %v4366 = vpack.c.bf16 %v4356, %v4355
    %v4367 = vpack.c.bf16 %v4358, %v4357
    %v4368 = vld [vmem:[%s2 + $0xb0] sm:$0xff]
    %v4369 = vld [vmem:[%s2 + $0xb8] sm:$0xff]
    %v4372 = vunpack.c.l.b16 %v4368
    %v4373 = vunpack.c.h.b16 %v4368
    %v4374 = vunpack.c.l.b16 %v4369
    %v4375 = vunpack.c.h.b16 %v4369
    %v4376 = vpack.c.b16 %v4372, %v4372
    %v4377 = vpack.c.b16 %v4373, %v4373
    %v4378 = vpack.c.b16 %v4374, %v4374
    %v4379 = vpack.c.b16 %v4375, %v4375
    %v4381 = vsel %vm82, %v4359, 0
    %v4384 = vsel %vm82, %v4360, 0
    %v4387 = vsel %vm82, %v4361, 0
    %v4390 = vsel %vm82, %v4362, 0
    %v4393 = vsel %vm82, %v4363, 0
    %v4396 = vsel %vm82, %v4364, 0
    %v4399 = vsel %vm82, %v4365, 0
    %v4402 = vsel %vm82, %v4366, 0
    %v4405 = vsel %vm82, %v4367, 0
    %v4408 = vsel %vm223, %v4376, 0
    %v4411 = vsel %vm223, %v4377, 0
    %v4414 = vsel %vm223, %v4378, 0
    %v4417 = vsel %vm223, %v4379, 0
    %4419 = vmatprep.subr.bf16.mxu0 %v4411
    %4420 = vmatpush1.bf16.msra.mxu0 %v4408
    %4421 = vmatprep.subr.bf16.mxu0 0
    %4422 = vmatpush1.bf16.msra.mxu0 0
    %4423 = vmatprep.subr.bf16.mxu0 0
    %4424 = vmatpush1.bf16.msra.mxu0 0
    %4425 = vmatprep.subr.bf16.mxu0 0
    %4426 = vmatpush1.bf16.msra.mxu0 0
    %4427 = vmatprep.subr.bf16.mxu0 0
    %4428 = vmatpush1.bf16.msra.mxu0 0
    %4429 = vmatprep.subr.bf16.mxu0 0
    %4430 = vmatpush1.bf16.msra.mxu0 0
    %4431 = vmatprep.subr.bf16.mxu0 0
    %4432 = vmatpush1.bf16.msra.mxu0 0
    %4433 = vmatprep.subr.bf16.mxu0 0
    %4434 = vmatpush1.bf16.msra.mxu0 0
    %4435 = vmatprep.subr.bf16.mxu0 0
    %4436 = vmatpush1.bf16.msra.mxu0 0
    %4437 = vmatprep.subr.bf16.mxu0 0
    %4438 = vmatpush1.bf16.msra.mxu0 0
    %4439 = vmatprep.subr.bf16.mxu0 0
    %4440 = vmatpush1.bf16.msra.mxu0 0
    %4441 = vmatprep.subr.bf16.mxu0 0
    %4442 = vmatpush1.bf16.msra.mxu0 0
    %4443 = vmatprep.subr.bf16.mxu0 0
    %4444 = vmatpush1.bf16.msra.mxu0 0
    %4445 = vmatprep.subr.bf16.mxu0 0
    %4446 = vmatpush1.bf16.msra.mxu0 0
    %4447 = vmatprep.subr.bf16.mxu0 0
    %4448 = vmatpush1.bf16.msra.mxu0 0
    %4449 = vmatprep.subr.bf16.mxu0 0
    %4450 = vmatpush1.bf16.msra.mxu0 0
    %4451 = vmatprep.mubr.bf16.mxu0 0
    %4452 = vmatmul.mubr.bf16.gmra.mrb[0].mxu0 %v4381
    %v4453 = vpop.f32.mrb[0].mxu0
    %v4454 = vadd.f32 0.0, %v4453
    %v4455 = vpop.f32.mrb[0].mxu0
    %v4456 = vadd.f32 0.0, %v4455
    %v4457 = vpop.f32.mrb[0].mxu0
    %v4458 = vadd.f32 0.0, %v4457
    %v4459 = vpop.f32.mrb[0].mxu0
    %v4460 = vadd.f32 0.0, %v4459
    %4461 = vmatprep.mubr.bf16.mxu0 0
    %4462 = vmatmul.mubr.bf16.gmra.mrb[0].mxu0 %v4384
    %v4463 = vpop.f32.mrb[0].mxu0
    %v4464 = vadd.f32 0.0, %v4463
    %v4465 = vpop.f32.mrb[0].mxu0
    %v4466 = vadd.f32 0.0, %v4465
    %v4467 = vpop.f32.mrb[0].mxu0
    %v4468 = vadd.f32 0.0, %v4467
    %v4469 = vpop.f32.mrb[0].mxu0
    %v4470 = vadd.f32 0.0, %v4469
    %4471 = vmatprep.mubr.bf16.mxu0 0
    %4472 = vmatmul.mubr.bf16.gmra.mrb[0].mxu0 %v4387
    %v4473 = vpop.f32.mrb[0].mxu0
    %v4474 = vadd.f32 0.0, %v4473
    %v4475 = vpop.f32.mrb[0].mxu0
    %v4476 = vadd.f32 0.0, %v4475
    %v4477 = vpop.f32.mrb[0].mxu0
    %v4478 = vadd.f32 0.0, %v4477
    %v4479 = vpop.f32.mrb[0].mxu0
    %v4480 = vadd.f32 0.0, %v4479
    %4481 = vmatprep.mubr.bf16.mxu0 0
    %4482 = vmatmul.mubr.bf16.gmra.mrb[0].mxu0 %v4390
    %v4483 = vpop.f32.mrb[0].mxu0
    %v4484 = vadd.f32 0.0, %v4483
    %v4485 = vpop.f32.mrb[0].mxu0
    %v4486 = vadd.f32 0.0, %v4485
    %v4487 = vpop.f32.mrb[0].mxu0
    %v4488 = vadd.f32 0.0, %v4487
    %v4489 = vpop.f32.mrb[0].mxu0
    %v4490 = vadd.f32 0.0, %v4489
    %4491 = vmatprep.mubr.bf16.mxu0 0
    %4492 = vmatmul.mubr.bf16.gmra.mrb[0].mxu0 %v4393
    %v4493 = vpop.f32.mrb[0].mxu0
    %v4494 = vadd.f32 0.0, %v4493
    %v4495 = vpop.f32.mrb[0].mxu0
    %v4496 = vadd.f32 0.0, %v4495
    %v4497 = vpop.f32.mrb[0].mxu0
    %v4498 = vadd.f32 0.0, %v4497
    %v4499 = vpop.f32.mrb[0].mxu0
    %v4500 = vadd.f32 0.0, %v4499
    %4501 = vmatprep.mubr.bf16.mxu0 0
    %4502 = vmatmul.mubr.bf16.gmra.mrb[0].mxu0 %v4396
    %v4503 = vpop.f32.mrb[0].mxu0
    %v4504 = vadd.f32 0.0, %v4503
    %v4505 = vpop.f32.mrb[0].mxu0
    %v4506 = vadd.f32 0.0, %v4505
    %v4507 = vpop.f32.mrb[0].mxu0
    %v4508 = vadd.f32 0.0, %v4507
    %v4509 = vpop.f32.mrb[0].mxu0
    %v4510 = vadd.f32 0.0, %v4509
    %4511 = vmatprep.mubr.bf16.mxu0 0
    %4512 = vmatmul.mubr.bf16.gmra.mrb[0].mxu0 %v4399
    %v4513 = vpop.f32.mrb[0].mxu0
    %v4514 = vadd.f32 0.0, %v4513
    %v4515 = vpop.f32.mrb[0].mxu0
    %v4516 = vadd.f32 0.0, %v4515
    %v4517 = vpop.f32.mrb[0].mxu0
    %v4518 = vadd.f32 0.0, %v4517
    %v4519 = vpop.f32.mrb[0].mxu0
    %v4520 = vadd.f32 0.0, %v4519
    %4521 = vmatprep.mubr.bf16.mxu0 0
    %4522 = vmatmul.mubr.bf16.gmra.mrb[0].mxu0 %v4402
    %v4523 = vpop.f32.mrb[0].mxu0
    %v4524 = vadd.f32 0.0, %v4523
    %v4525 = vpop.f32.mrb[0].mxu0
    %v4526 = vadd.f32 0.0, %v4525
    %v4527 = vpop.f32.mrb[0].mxu0
    %v4528 = vadd.f32 0.0, %v4527
    %v4529 = vpop.f32.mrb[0].mxu0
    %v4530 = vadd.f32 0.0, %v4529
    %4531 = vmatprep.mubr.bf16.mxu0 0
    %4532 = vmatmul.mubr.bf16.gmra.mrb[0].mxu0 %v4405
    %v4533 = vpop.f32.mrb[0].mxu0
    %v4534 = vadd.f32 0.0, %v4533
    %v4535 = vpop.f32.mrb[0].mxu0
    %v4536 = vadd.f32 0.0, %v4535
    %v4537 = vpop.f32.mrb[0].mxu0
    %v4538 = vadd.f32 0.0, %v4537
    %v4539 = vpop.f32.mrb[0].mxu0
    %v4540 = vadd.f32 0.0, %v4539
    %4541 = vdwg.mxu0
    %4542 = vmatprep.subr.bf16.mxu0 %v4417
    %4543 = vmatpush1.bf16.msra.mxu0 %v4414
    %4544 = vmatprep.subr.bf16.mxu0 0
    %4545 = vmatpush1.bf16.msra.mxu0 0
    %4546 = vmatprep.subr.bf16.mxu0 0
    %4547 = vmatpush1.bf16.msra.mxu0 0
    %4548 = vmatprep.subr.bf16.mxu0 0
    %4549 = vmatpush1.bf16.msra.mxu0 0
    %4550 = vmatprep.subr.bf16.mxu0 0
    %4551 = vmatpush1.bf16.msra.mxu0 0
    %4552 = vmatprep.subr.bf16.mxu0 0
    %4553 = vmatpush1.bf16.msra.mxu0 0
    %4554 = vmatprep.subr.bf16.mxu0 0
    %4555 = vmatpush1.bf16.msra.mxu0 0
    %4556 = vmatprep.subr.bf16.mxu0 0
    %4557 = vmatpush1.bf16.msra.mxu0 0
    %4558 = vmatprep.subr.bf16.mxu0 0
    %4559 = vmatpush1.bf16.msra.mxu0 0
    %4560 = vmatprep.subr.bf16.mxu0 0
    %4561 = vmatpush1.bf16.msra.mxu0 0
    %4562 = vmatprep.subr.bf16.mxu0 0
    %4563 = vmatpush1.bf16.msra.mxu0 0
    %4564 = vmatprep.subr.bf16.mxu0 0
    %4565 = vmatpush1.bf16.msra.mxu0 0
    %4566 = vmatprep.subr.bf16.mxu0 0
    %4567 = vmatpush1.bf16.msra.mxu0 0
    %4568 = vmatprep.subr.bf16.mxu0 0
    %4569 = vmatpush1.bf16.msra.mxu0 0
    %4570 = vmatprep.subr.bf16.mxu0 0
    %4571 = vmatpush1.bf16.msra.mxu0 0
    %4572 = vmatprep.subr.bf16.mxu0 0
    %4573 = vmatpush1.bf16.msra.mxu0 0
    %4574 = vmatprep.mubr.bf16.mxu0 0
    %4575 = vmatmul.mubr.bf16.gmra.mrb[0].mxu0 %v4381
    %v4576 = vpop.f32.mrb[0].mxu0
    %v4577 = vadd.f32 0.0, %v4576
    %v4578 = vpop.f32.mrb[0].mxu0
    %v4579 = vadd.f32 0.0, %v4578
    %v4580 = vpop.f32.mrb[0].mxu0
    %v4581 = vadd.f32 0.0, %v4580
    %v4582 = vpop.f32.mrb[0].mxu0
    %v4583 = vadd.f32 0.0, %v4582
    %4584 = vmatprep.mubr.bf16.mxu0 0
    %4585 = vmatmul.mubr.bf16.gmra.mrb[0].mxu0 %v4384
    %v4586 = vpop.f32.mrb[0].mxu0
    %v4587 = vadd.f32 0.0, %v4586
    %v4588 = vpop.f32.mrb[0].mxu0
    %v4589 = vadd.f32 0.0, %v4588
    %v4590 = vpop.f32.mrb[0].mxu0
    %v4591 = vadd.f32 0.0, %v4590
    %v4592 = vpop.f32.mrb[0].mxu0
    %v4593 = vadd.f32 0.0, %v4592
    %4594 = vmatprep.mubr.bf16.mxu0 0
    %4595 = vmatmul.mubr.bf16.gmra.mrb[0].mxu0 %v4387
    %v4596 = vpop.f32.mrb[0].mxu0
    %v4597 = vadd.f32 0.0, %v4596
    %v4598 = vpop.f32.mrb[0].mxu0
    %v4599 = vadd.f32 0.0, %v4598
    %v4600 = vpop.f32.mrb[0].mxu0
    %v4601 = vadd.f32 0.0, %v4600
    %v4602 = vpop.f32.mrb[0].mxu0
    %v4603 = vadd.f32 0.0, %v4602
    %4604 = vmatprep.mubr.bf16.mxu0 0
    %4605 = vmatmul.mubr.bf16.gmra.mrb[0].mxu0 %v4390
    %v4606 = vpop.f32.mrb[0].mxu0
    %v4607 = vadd.f32 0.0, %v4606
    %v4608 = vpop.f32.mrb[0].mxu0
    %v4609 = vadd.f32 0.0, %v4608
    %v4610 = vpop.f32.mrb[0].mxu0
    %v4611 = vadd.f32 0.0, %v4610
    %v4612 = vpop.f32.mrb[0].mxu0
    %v4613 = vadd.f32 0.0, %v4612
    %4614 = vmatprep.mubr.bf16.mxu0 0
    %4615 = vmatmul.mubr.bf16.gmra.mrb[0].mxu0 %v4393
    %v4616 = vpop.f32.mrb[0].mxu0
    %v4617 = vadd.f32 0.0, %v4616
    %v4618 = vpop.f32.mrb[0].mxu0
    %v4619 = vadd.f32 0.0, %v4618
    %v4620 = vpop.f32.mrb[0].mxu0
    %v4621 = vadd.f32 0.0, %v4620
    %v4622 = vpop.f32.mrb[0].mxu0
    %v4623 = vadd.f32 0.0, %v4622
    %4624 = vmatprep.mubr.bf16.mxu0 0
    %4625 = vmatmul.mubr.bf16.gmra.mrb[0].mxu0 %v4396
    %v4626 = vpop.f32.mrb[0].mxu0
    %v4627 = vadd.f32 0.0, %v4626
    %v4628 = vpop.f32.mrb[0].mxu0
    %v4629 = vadd.f32 0.0, %v4628
    %v4630 = vpop.f32.mrb[0].mxu0
    %v4631 = vadd.f32 0.0, %v4630
    %v4632 = vpop.f32.mrb[0].mxu0
    %v4633 = vadd.f32 0.0, %v4632
    %4634 = vmatprep.mubr.bf16.mxu0 0
    %4635 = vmatmul.mubr.bf16.gmra.mrb[0].mxu0 %v4399
    %v4636 = vpop.f32.mrb[0].mxu0
    %v4637 = vadd.f32 0.0, %v4636
    %v4638 = vpop.f32.mrb[0].mxu0
    %v4639 = vadd.f32 0.0, %v4638
    %v4640 = vpop.f32.mrb[0].mxu0
    %v4641 = vadd.f32 0.0, %v4640
    %v4642 = vpop.f32.mrb[0].mxu0
    %v4643 = vadd.f32 0.0, %v4642
    %4644 = vmatprep.mubr.bf16.mxu0 0
    %4645 = vmatmul.mubr.bf16.gmra.mrb[0].mxu0 %v4402
    %v4646 = vpop.f32.mrb[0].mxu0
    %v4647 = vadd.f32 0.0, %v4646
    %v4648 = vpop.f32.mrb[0].mxu0
    %v4649 = vadd.f32 0.0, %v4648
    %v4650 = vpop.f32.mrb[0].mxu0
    %v4651 = vadd.f32 0.0, %v4650
    %v4652 = vpop.f32.mrb[0].mxu0
    %v4653 = vadd.f32 0.0, %v4652
    %4654 = vmatprep.mubr.bf16.mxu0 0
    %4655 = vmatmul.mubr.bf16.gmra.mrb[0].mxu0 %v4405
    %v4656 = vpop.f32.mrb[0].mxu0
    %v4657 = vadd.f32 0.0, %v4656
    %v4658 = vpop.f32.mrb[0].mxu0
    %v4659 = vadd.f32 0.0, %v4658
    %v4660 = vpop.f32.mrb[0].mxu0
    %v4661 = vadd.f32 0.0, %v4660
    %v4662 = vpop.f32.mrb[0].mxu0
    %v4663 = vadd.f32 0.0, %v4662
    %4664 = vdwg.mxu0
    %v4665 = vadd.f32 %v4269, %v4454
    %v4666 = vadd.f32 %v4270, %v4456
    %v4667 = vadd.f32 %v4271, %v4577
    %v4668 = vadd.f32 %v4272, %v4579
    %v4669 = vadd.f32 %v4273, %v4458
    %v4670 = vadd.f32 %v4274, %v4460
    %v4671 = vadd.f32 %v4275, %v4581
    %v4672 = vadd.f32 %v4276, %v4583
    %v4673 = vadd.f32 %v4277, %v4464
    %v4674 = vadd.f32 %v4278, %v4466
    %v4675 = vadd.f32 %v4279, %v4587
    %v4676 = vadd.f32 %v4280, %v4589
    %v4677 = vadd.f32 %v4281, %v4468
    %v4678 = vadd.f32 %v4282, %v4470
    %v4679 = vadd.f32 %v4283, %v4591
    %v4680 = vadd.f32 %v4284, %v4593
    %v4681 = vadd.f32 %v4285, %v4474
    %v4682 = vadd.f32 %v4286, %v4476
    %v4683 = vadd.f32 %v4287, %v4597
    %v4684 = vadd.f32 %v4288, %v4599
    %v4685 = vadd.f32 %v4289, %v4478
    %v4686 = vadd.f32 %v4290, %v4480
    %v4687 = vadd.f32 %v4291, %v4601
    %v4688 = vadd.f32 %v4292, %v4603
    %v4689 = vadd.f32 %v4293, %v4484
    %v4690 = vadd.f32 %v4294, %v4486
    %v4691 = vadd.f32 %v4295, %v4607
    %v4692 = vadd.f32 %v4296, %v4609
    %v4693 = vadd.f32 %v4297, %v4488
    %v4694 = vadd.f32 %v4298, %v4490
    %v4695 = vadd.f32 %v4299, %v4611
    %v4696 = vadd.f32 %v4300, %v4613
    %v4697 = vadd.f32 %v4301, %v4494
    %v4698 = vadd.f32 %v4302, %v4496
    %v4699 = vadd.f32 %v4303, %v4617
    %v4700 = vadd.f32 %v4304, %v4619
    %v4701 = vadd.f32 %v4305, %v4498
    %v4702 = vadd.f32 %v4306, %v4500
    %v4703 = vadd.f32 %v4307, %v4621
    %v4704 = vadd.f32 %v4308, %v4623
    %v4705 = vadd.f32 %v4309, %v4504
    %v4706 = vadd.f32 %v4310, %v4506
    %v4707 = vadd.f32 %v4311, %v4627
    %v4708 = vadd.f32 %v4312, %v4629
    %v4709 = vadd.f32 %v4313, %v4508
    %v4710 = vadd.f32 %v4314, %v4510
    %v4711 = vadd.f32 %v4315, %v4631
    %v4712 = vadd.f32 %v4316, %v4633
    %v4713 = vadd.f32 %v4317, %v4514
    %v4714 = vadd.f32 %v4318, %v4516
    %v4715 = vadd.f32 %v4319, %v4637
    %v4716 = vadd.f32 %v4320, %v4639
    %v4717 = vadd.f32 %v4321, %v4518
    %v4718 = vadd.f32 %v4322, %v4520
    %v4719 = vadd.f32 %v4323, %v4641
    %v4720 = vadd.f32 %v4324, %v4643
    %v4721 = vadd.f32 %v4325, %v4524
    %v4722 = vadd.f32 %v4326, %v4526
    %v4723 = vadd.f32 %v4327, %v4647
    %v4724 = vadd.f32 %v4328, %v4649
    %v4725 = vadd.f32 %v4329, %v4528
    %v4726 = vadd.f32 %v4330, %v4530
    %v4727 = vadd.f32 %v4331, %v4651
    %v4728 = vadd.f32 %v4332, %v4653
    %v4729 = vadd.f32 %v4333, %v4534
    %v4730 = vadd.f32 %v4334, %v4536
    %v4731 = vadd.f32 %v4335, %v4657
    %v4732 = vadd.f32 %v4336, %v4659
    %v4733 = vadd.f32 %v4337, %v4538
    %v4734 = vadd.f32 %v4338, %v4540
    %v4735 = vadd.f32 %v4339, %v4661
    %v4736 = vadd.f32 %v4340, %v4663
    %v4737 = vld [vmem:[#allocation2 + $0x18] sm:$0xff]
    %v4738 = vld [vmem:[#allocation2 + $0x20] sm:$0xff]
    %v4739 = vld [vmem:[#allocation2 + $0x28] sm:$0xff]
    %v4740 = vld [vmem:[#allocation2 + $0x30] sm:$0xff]
    %v4741 = vld [vmem:[#allocation2 + $0x38] sm:$0xff]
    %v4742 = vld [vmem:[#allocation2 + $0x40] sm:$0xff]
    %v4743 = vld [vmem:[#allocation2 + $0x48] sm:$0xff]
    %v4744 = vld [vmem:[#allocation2 + $0x50] sm:$0xff]
    %v4745 = vld [vmem:[#allocation2 + $0x58] sm:$0xff]
    %v4746 = vld [vmem:[#allocation2 + $0x60] sm:$0xff]
    %v4747 = vld [vmem:[#allocation2 + $0x68] sm:$0xff]
    %v4748 = vld [vmem:[#allocation2 + $0x70] sm:$0xff]
    %v4749 = vld [vmem:[#allocation2 + $0x78] sm:$0xff]
    %v4750 = vld [vmem:[#allocation2 + $0x80] sm:$0xff]
    %v4751 = vld [vmem:[#allocation2 + $0x88] sm:$0xff]
    %v4752 = vld [vmem:[#allocation2 + $0x90] sm:$0xff]
    %v4753 = vld [vmem:[#allocation2 + $0x98] sm:$0xff]
    %v4754 = vld [vmem:[#allocation2 + $0xa0] sm:$0xff]
    %v4755 = vpack.c.bf16 %v4738, %v4737
    %v4756 = vpack.c.bf16 %v4740, %v4739
    %v4757 = vpack.c.bf16 %v4742, %v4741
    %v4758 = vpack.c.bf16 %v4744, %v4743
    %v4759 = vpack.c.bf16 %v4746, %v4745
    %v4760 = vpack.c.bf16 %v4748, %v4747
    %v4761 = vpack.c.bf16 %v4750, %v4749
    %v4762 = vpack.c.bf16 %v4752, %v4751
    %v4763 = vpack.c.bf16 %v4754, %v4753
    %v4764 = vld [vmem:[%s2 + $0xc0] sm:$0xff]
    %v4765 = vld [vmem:[%s2 + $0xc8] sm:$0xff]
    %v4768 = vunpack.c.l.b16 %v4764
    %v4769 = vunpack.c.h.b16 %v4764
    %v4770 = vunpack.c.l.b16 %v4765
    %v4771 = vunpack.c.h.b16 %v4765
    %v4772 = vpack.c.b16 %v4768, %v4768
    %v4773 = vpack.c.b16 %v4769, %v4769
    %v4774 = vpack.c.b16 %v4770, %v4770
    %v4775 = vpack.c.b16 %v4771, %v4771
    %v4777 = vsel %vm82, %v4755, 0
    %v4780 = vsel %vm82, %v4756, 0
    %v4783 = vsel %vm82, %v4757, 0
    %v4786 = vsel %vm82, %v4758, 0
    %v4789 = vsel %vm82, %v4759, 0
    %v4792 = vsel %vm82, %v4760, 0
    %v4795 = vsel %vm82, %v4761, 0
    %v4798 = vsel %vm82, %v4762, 0
    %v4801 = vsel %vm82, %v4763, 0
    %v4804 = vsel %vm223, %v4772, 0
    %v4807 = vsel %vm223, %v4773, 0
    %v4810 = vsel %vm223, %v4774, 0
    %v4813 = vsel %vm223, %v4775, 0
    %4815 = vmatprep.subr.bf16.mxu0 %v4807
    %4816 = vmatpush1.bf16.msra.mxu0 %v4804
    %4817 = vmatprep.subr.bf16.mxu0 0
    %4818 = vmatpush1.bf16.msra.mxu0 0
    %4819 = vmatprep.subr.bf16.mxu0 0
    %4820 = vmatpush1.bf16.msra.mxu0 0
    %4821 = vmatprep.subr.bf16.mxu0 0
    %4822 = vmatpush1.bf16.msra.mxu0 0
    %4823 = vmatprep.subr.bf16.mxu0 0
    %4824 = vmatpush1.bf16.msra.mxu0 0
    %4825 = vmatprep.subr.bf16.mxu0 0
    %4826 = vmatpush1.bf16.msra.mxu0 0
    %4827 = vmatprep.subr.bf16.mxu0 0
    %4828 = vmatpush1.bf16.msra.mxu0 0
    %4829 = vmatprep.subr.bf16.mxu0 0
    %4830 = vmatpush1.bf16.msra.mxu0 0
    %4831 = vmatprep.subr.bf16.mxu0 0
    %4832 = vmatpush1.bf16.msra.mxu0 0
    %4833 = vmatprep.subr.bf16.mxu0 0
    %4834 = vmatpush1.bf16.msra.mxu0 0
    %4835 = vmatprep.subr.bf16.mxu0 0
    %4836 = vmatpush1.bf16.msra.mxu0 0
    %4837 = vmatprep.subr.bf16.mxu0 0
    %4838 = vmatpush1.bf16.msra.mxu0 0
    %4839 = vmatprep.subr.bf16.mxu0 0
    %4840 = vmatpush1.bf16.msra.mxu0 0
    %4841 = vmatprep.subr.bf16.mxu0 0
    %4842 = vmatpush1.bf16.msra.mxu0 0
    %4843 = vmatprep.subr.bf16.mxu0 0
    %4844 = vmatpush1.bf16.msra.mxu0 0
    %4845 = vmatprep.subr.bf16.mxu0 0
    %4846 = vmatpush1.bf16.msra.mxu0 0
    %4847 = vmatprep.mubr.bf16.mxu0 0
    %4848 = vmatmul.mubr.bf16.gmra.mrb[0].mxu0 %v4777
    %v4849 = vpop.f32.mrb[0].mxu0
    %v4850 = vadd.f32 0.0, %v4849
    %v4851 = vpop.f32.mrb[0].mxu0
    %v4852 = vadd.f32 0.0, %v4851
    %v4853 = vpop.f32.mrb[0].mxu0
    %v4854 = vadd.f32 0.0, %v4853
    %v4855 = vpop.f32.mrb[0].mxu0
    %v4856 = vadd.f32 0.0, %v4855
    %4857 = vmatprep.mubr.bf16.mxu0 0
    %4858 = vmatmul.mubr.bf16.gmra.mrb[0].mxu0 %v4780
    %v4859 = vpop.f32.mrb[0].mxu0
    %v4860 = vadd.f32 0.0, %v4859
    %v4861 = vpop.f32.mrb[0].mxu0
    %v4862 = vadd.f32 0.0, %v4861
    %v4863 = vpop.f32.mrb[0].mxu0
    %v4864 = vadd.f32 0.0, %v4863
    %v4865 = vpop.f32.mrb[0].mxu0
    %v4866 = vadd.f32 0.0, %v4865
    %4867 = vmatprep.mubr.bf16.mxu0 0
    %4868 = vmatmul.mubr.bf16.gmra.mrb[0].mxu0 %v4783
    %v4869 = vpop.f32.mrb[0].mxu0
    %v4870 = vadd.f32 0.0, %v4869
    %v4871 = vpop.f32.mrb[0].mxu0
    %v4872 = vadd.f32 0.0, %v4871
    %v4873 = vpop.f32.mrb[0].mxu0
    %v4874 = vadd.f32 0.0, %v4873
    %v4875 = vpop.f32.mrb[0].mxu0
    %v4876 = vadd.f32 0.0, %v4875
    %4877 = vmatprep.mubr.bf16.mxu0 0
    %4878 = vmatmul.mubr.bf16.gmra.mrb[0].mxu0 %v4786
    %v4879 = vpop.f32.mrb[0].mxu0
    %v4880 = vadd.f32 0.0, %v4879
    %v4881 = vpop.f32.mrb[0].mxu0
    %v4882 = vadd.f32 0.0, %v4881
    %v4883 = vpop.f32.mrb[0].mxu0
    %v4884 = vadd.f32 0.0, %v4883
    %v4885 = vpop.f32.mrb[0].mxu0
    %v4886 = vadd.f32 0.0, %v4885
    %4887 = vmatprep.mubr.bf16.mxu0 0
    %4888 = vmatmul.mubr.bf16.gmra.mrb[0].mxu0 %v4789
    %v4889 = vpop.f32.mrb[0].mxu0
    %v4890 = vadd.f32 0.0, %v4889
    %v4891 = vpop.f32.mrb[0].mxu0
    %v4892 = vadd.f32 0.0, %v4891
    %v4893 = vpop.f32.mrb[0].mxu0
    %v4894 = vadd.f32 0.0, %v4893
    %v4895 = vpop.f32.mrb[0].mxu0
    %v4896 = vadd.f32 0.0, %v4895
    %4897 = vmatprep.mubr.bf16.mxu0 0
    %4898 = vmatmul.mubr.bf16.gmra.mrb[0].mxu0 %v4792
    %v4899 = vpop.f32.mrb[0].mxu0
    %v4900 = vadd.f32 0.0, %v4899
    %v4901 = vpop.f32.mrb[0].mxu0
    %v4902 = vadd.f32 0.0, %v4901
    %v4903 = vpop.f32.mrb[0].mxu0
    %v4904 = vadd.f32 0.0, %v4903
    %v4905 = vpop.f32.mrb[0].mxu0
    %v4906 = vadd.f32 0.0, %v4905
    %4907 = vmatprep.mubr.bf16.mxu0 0
    %4908 = vmatmul.mubr.bf16.gmra.mrb[0].mxu0 %v4795
    %v4909 = vpop.f32.mrb[0].mxu0
    %v4910 = vadd.f32 0.0, %v4909
    %v4911 = vpop.f32.mrb[0].mxu0
    %v4912 = vadd.f32 0.0, %v4911
    %v4913 = vpop.f32.mrb[0].mxu0
    %v4914 = vadd.f32 0.0, %v4913
    %v4915 = vpop.f32.mrb[0].mxu0
    %v4916 = vadd.f32 0.0, %v4915
    %4917 = vmatprep.mubr.bf16.mxu0 0
    %4918 = vmatmul.mubr.bf16.gmra.mrb[0].mxu0 %v4798
    %v4919 = vpop.f32.mrb[0].mxu0
    %v4920 = vadd.f32 0.0, %v4919
    %v4921 = vpop.f32.mrb[0].mxu0
    %v4922 = vadd.f32 0.0, %v4921
    %v4923 = vpop.f32.mrb[0].mxu0
    %v4924 = vadd.f32 0.0, %v4923
    %v4925 = vpop.f32.mrb[0].mxu0
    %v4926 = vadd.f32 0.0, %v4925
    %4927 = vmatprep.mubr.bf16.mxu0 0
    %4928 = vmatmul.mubr.bf16.gmra.mrb[0].mxu0 %v4801
    %v4929 = vpop.f32.mrb[0].mxu0
    %v4930 = vadd.f32 0.0, %v4929
    %v4931 = vpop.f32.mrb[0].mxu0
    %v4932 = vadd.f32 0.0, %v4931
    %v4933 = vpop.f32.mrb[0].mxu0
    %v4934 = vadd.f32 0.0, %v4933
    %v4935 = vpop.f32.mrb[0].mxu0
    %v4936 = vadd.f32 0.0, %v4935
    %4937 = vdwg.mxu0
    %4938 = vmatprep.subr.bf16.mxu0 %v4813
    %4939 = vmatpush1.bf16.msra.mxu0 %v4810
    %4940 = vmatprep.subr.bf16.mxu0 0
    %4941 = vmatpush1.bf16.msra.mxu0 0
    %4942 = vmatprep.subr.bf16.mxu0 0
    %4943 = vmatpush1.bf16.msra.mxu0 0
    %4944 = vmatprep.subr.bf16.mxu0 0
    %4945 = vmatpush1.bf16.msra.mxu0 0
    %4946 = vmatprep.subr.bf16.mxu0 0
    %4947 = vmatpush1.bf16.msra.mxu0 0
    %4948 = vmatprep.subr.bf16.mxu0 0
    %4949 = vmatpush1.bf16.msra.mxu0 0
    %4950 = vmatprep.subr.bf16.mxu0 0
    %4951 = vmatpush1.bf16.msra.mxu0 0
    %4952 = vmatprep.subr.bf16.mxu0 0
    %4953 = vmatpush1.bf16.msra.mxu0 0
    %4954 = vmatprep.subr.bf16.mxu0 0
    %4955 = vmatpush1.bf16.msra.mxu0 0
    %4956 = vmatprep.subr.bf16.mxu0 0
    %4957 = vmatpush1.bf16.msra.mxu0 0
    %4958 = vmatprep.subr.bf16.mxu0 0
    %4959 = vmatpush1.bf16.msra.mxu0 0
    %4960 = vmatprep.subr.bf16.mxu0 0
    %4961 = vmatpush1.bf16.msra.mxu0 0
    %4962 = vmatprep.subr.bf16.mxu0 0
    %4963 = vmatpush1.bf16.msra.mxu0 0
    %4964 = vmatprep.subr.bf16.mxu0 0
    %4965 = vmatpush1.bf16.msra.mxu0 0
    %4966 = vmatprep.subr.bf16.mxu0 0
    %4967 = vmatpush1.bf16.msra.mxu0 0
    %4968 = vmatprep.subr.bf16.mxu0 0
    %4969 = vmatpush1.bf16.msra.mxu0 0
    %4970 = vmatprep.mubr.bf16.mxu0 0
    %4971 = vmatmul.mubr.bf16.gmra.mrb[0].mxu0 %v4777
    %v4972 = vpop.f32.mrb[0].mxu0
    %v4973 = vadd.f32 0.0, %v4972
    %v4974 = vpop.f32.mrb[0].mxu0
    %v4975 = vadd.f32 0.0, %v4974
    %v4976 = vpop.f32.mrb[0].mxu0
    %v4977 = vadd.f32 0.0, %v4976
    %v4978 = vpop.f32.mrb[0].mxu0
    %v4979 = vadd.f32 0.0, %v4978
    %4980 = vmatprep.mubr.bf16.mxu0 0
    %4981 = vmatmul.mubr.bf16.gmra.mrb[0].mxu0 %v4780
    %v4982 = vpop.f32.mrb[0].mxu0
    %v4983 = vadd.f32 0.0, %v4982
    %v4984 = vpop.f32.mrb[0].mxu0
    %v4985 = vadd.f32 0.0, %v4984
    %v4986 = vpop.f32.mrb[0].mxu0
    %v4987 = vadd.f32 0.0, %v4986
    %v4988 = vpop.f32.mrb[0].mxu0
    %v4989 = vadd.f32 0.0, %v4988
    %4990 = vmatprep.mubr.bf16.mxu0 0
    %4991 = vmatmul.mubr.bf16.gmra.mrb[0].mxu0 %v4783
    %v4992 = vpop.f32.mrb[0].mxu0
    %v4993 = vadd.f32 0.0, %v4992
    %v4994 = vpop.f32.mrb[0].mxu0
    %v4995 = vadd.f32 0.0, %v4994
    %v4996 = vpop.f32.mrb[0].mxu0
    %v4997 = vadd.f32 0.0, %v4996
    %v4998 = vpop.f32.mrb[0].mxu0
    %v4999 = vadd.f32 0.0, %v4998
    %5000 = vmatprep.mubr.bf16.mxu0 0
    %5001 = vmatmul.mubr.bf16.gmra.mrb[0].mxu0 %v4786
    %v5002 = vpop.f32.mrb[0].mxu0
    %v5003 = vadd.f32 0.0, %v5002
    %v5004 = vpop.f32.mrb[0].mxu0
    %v5005 = vadd.f32 0.0, %v5004
    %v5006 = vpop.f32.mrb[0].mxu0
    %v5007 = vadd.f32 0.0, %v5006
    %v5008 = vpop.f32.mrb[0].mxu0
    %v5009 = vadd.f32 0.0, %v5008
    %5010 = vmatprep.mubr.bf16.mxu0 0
    %5011 = vmatmul.mubr.bf16.gmra.mrb[0].mxu0 %v4789
    %v5012 = vpop.f32.mrb[0].mxu0
    %v5013 = vadd.f32 0.0, %v5012
    %v5014 = vpop.f32.mrb[0].mxu0
    %v5015 = vadd.f32 0.0, %v5014
    %v5016 = vpop.f32.mrb[0].mxu0
    %v5017 = vadd.f32 0.0, %v5016
    %v5018 = vpop.f32.mrb[0].mxu0
    %v5019 = vadd.f32 0.0, %v5018
    %5020 = vmatprep.mubr.bf16.mxu0 0
    %5021 = vmatmul.mubr.bf16.gmra.mrb[0].mxu0 %v4792
    %v5022 = vpop.f32.mrb[0].mxu0
    %v5023 = vadd.f32 0.0, %v5022
    %v5024 = vpop.f32.mrb[0].mxu0
    %v5025 = vadd.f32 0.0, %v5024
    %v5026 = vpop.f32.mrb[0].mxu0
    %v5027 = vadd.f32 0.0, %v5026
    %v5028 = vpop.f32.mrb[0].mxu0
    %v5029 = vadd.f32 0.0, %v5028
    %5030 = vmatprep.mubr.bf16.mxu0 0
    %5031 = vmatmul.mubr.bf16.gmra.mrb[0].mxu0 %v4795
    %v5032 = vpop.f32.mrb[0].mxu0
    %v5033 = vadd.f32 0.0, %v5032
    %v5034 = vpop.f32.mrb[0].mxu0
    %v5035 = vadd.f32 0.0, %v5034
    %v5036 = vpop.f32.mrb[0].mxu0
    %v5037 = vadd.f32 0.0, %v5036
    %v5038 = vpop.f32.mrb[0].mxu0
    %v5039 = vadd.f32 0.0, %v5038
    %5040 = vmatprep.mubr.bf16.mxu0 0
    %5041 = vmatmul.mubr.bf16.gmra.mrb[0].mxu0 %v4798
    %v5042 = vpop.f32.mrb[0].mxu0
    %v5043 = vadd.f32 0.0, %v5042
    %v5044 = vpop.f32.mrb[0].mxu0
    %v5045 = vadd.f32 0.0, %v5044
    %v5046 = vpop.f32.mrb[0].mxu0
    %v5047 = vadd.f32 0.0, %v5046
    %v5048 = vpop.f32.mrb[0].mxu0
    %v5049 = vadd.f32 0.0, %v5048
    %5050 = vmatprep.mubr.bf16.mxu0 0
    %5051 = vmatmul.mubr.bf16.gmra.mrb[0].mxu0 %v4801
    %v5052 = vpop.f32.mrb[0].mxu0
    %v5053 = vadd.f32 0.0, %v5052
    %v5054 = vpop.f32.mrb[0].mxu0
    %v5055 = vadd.f32 0.0, %v5054
    %v5056 = vpop.f32.mrb[0].mxu0
    %v5057 = vadd.f32 0.0, %v5056
    %v5058 = vpop.f32.mrb[0].mxu0
    %v5059 = vadd.f32 0.0, %v5058
    %5060 = vdwg.mxu0
    %v5061 = vadd.f32 %v4665, %v4850
    %v5062 = vadd.f32 %v4666, %v4852
    %v5063 = vadd.f32 %v4667, %v4973
    %v5064 = vadd.f32 %v4668, %v4975
    %v5065 = vadd.f32 %v4669, %v4854
    %v5066 = vadd.f32 %v4670, %v4856
    %v5067 = vadd.f32 %v4671, %v4977
    %v5068 = vadd.f32 %v4672, %v4979
    %v5069 = vadd.f32 %v4673, %v4860
    %v5070 = vadd.f32 %v4674, %v4862
    %v5071 = vadd.f32 %v4675, %v4983
    %v5072 = vadd.f32 %v4676, %v4985
    %v5073 = vadd.f32 %v4677, %v4864
    %v5074 = vadd.f32 %v4678, %v4866
    %v5075 = vadd.f32 %v4679, %v4987
    %v5076 = vadd.f32 %v4680, %v4989
    %v5077 = vadd.f32 %v4681, %v4870
    %v5078 = vadd.f32 %v4682, %v4872
    %v5079 = vadd.f32 %v4683, %v4993
    %v5080 = vadd.f32 %v4684, %v4995
    %v5081 = vadd.f32 %v4685, %v4874
    %v5082 = vadd.f32 %v4686, %v4876
    %v5083 = vadd.f32 %v4687, %v4997
    %v5084 = vadd.f32 %v4688, %v4999
    %v5085 = vadd.f32 %v4689, %v4880
    %v5086 = vadd.f32 %v4690, %v4882
    %v5087 = vadd.f32 %v4691, %v5003
    %v5088 = vadd.f32 %v4692, %v5005
    %v5089 = vadd.f32 %v4693, %v4884
    %v5090 = vadd.f32 %v4694, %v4886
    %v5091 = vadd.f32 %v4695, %v5007
    %v5092 = vadd.f32 %v4696, %v5009
    %v5093 = vadd.f32 %v4697, %v4890
    %v5094 = vadd.f32 %v4698, %v4892
    %v5095 = vadd.f32 %v4699, %v5013
    %v5096 = vadd.f32 %v4700, %v5015
    %v5097 = vadd.f32 %v4701, %v4894
    %v5098 = vadd.f32 %v4702, %v4896
    %v5099 = vadd.f32 %v4703, %v5017
    %v5100 = vadd.f32 %v4704, %v5019
    %v5101 = vadd.f32 %v4705, %v4900
    %v5102 = vadd.f32 %v4706, %v4902
    %v5103 = vadd.f32 %v4707, %v5023
    %v5104 = vadd.f32 %v4708, %v5025
    %v5105 = vadd.f32 %v4709, %v4904
    %v5106 = vadd.f32 %v4710, %v4906
    %v5107 = vadd.f32 %v4711, %v5027
    %v5108 = vadd.f32 %v4712, %v5029
    %v5109 = vadd.f32 %v4713, %v4910
    %v5110 = vadd.f32 %v4714, %v4912
    %v5111 = vadd.f32 %v4715, %v5033
    %v5112 = vadd.f32 %v4716, %v5035
    %v5113 = vadd.f32 %v4717, %v4914
    %v5114 = vadd.f32 %v4718, %v4916
    %v5115 = vadd.f32 %v4719, %v5037
    %v5116 = vadd.f32 %v4720, %v5039
    %v5117 = vadd.f32 %v4721, %v4920
    %v5118 = vadd.f32 %v4722, %v4922
    %v5119 = vadd.f32 %v4723, %v5043
    %v5120 = vadd.f32 %v4724, %v5045
    %v5121 = vadd.f32 %v4725, %v4924
    %v5122 = vadd.f32 %v4726, %v4926
    %v5123 = vadd.f32 %v4727, %v5047
    %v5124 = vadd.f32 %v4728, %v5049
    %v5125 = vadd.f32 %v4729, %v4930
    %v5126 = vadd.f32 %v4730, %v4932
    %v5127 = vadd.f32 %v4731, %v5053
    %v5128 = vadd.f32 %v4732, %v5055
    %v5129 = vadd.f32 %v4733, %v4934
    %v5130 = vadd.f32 %v4734, %v4936
    %v5131 = vadd.f32 %v4735, %v5057
    %v5132 = vadd.f32 %v4736, %v5059
    %v5133 = vld [vmem:[#allocation2 + $0x19] sm:$0xff]
    %v5134 = vld [vmem:[#allocation2 + $0x21] sm:$0xff]
    %v5135 = vld [vmem:[#allocation2 + $0x29] sm:$0xff]
    %v5136 = vld [vmem:[#allocation2 + $0x31] sm:$0xff]
    %v5137 = vld [vmem:[#allocation2 + $0x39] sm:$0xff]
    %v5138 = vld [vmem:[#allocation2 + $0x41] sm:$0xff]
    %v5139 = vld [vmem:[#allocation2 + $0x49] sm:$0xff]
    %v5140 = vld [vmem:[#allocation2 + $0x51] sm:$0xff]
    %v5141 = vld [vmem:[#allocation2 + $0x59] sm:$0xff]
    %v5142 = vld [vmem:[#allocation2 + $0x61] sm:$0xff]
    %v5143 = vld [vmem:[#allocation2 + $0x69] sm:$0xff]
    %v5144 = vld [vmem:[#allocation2 + $0x71] sm:$0xff]
    %v5145 = vld [vmem:[#allocation2 + $0x79] sm:$0xff]
    %v5146 = vld [vmem:[#allocation2 + $0x81] sm:$0xff]
    %v5147 = vld [vmem:[#allocation2 + $0x89] sm:$0xff]
    %v5148 = vld [vmem:[#allocation2 + $0x91] sm:$0xff]
    %v5149 = vld [vmem:[#allocation2 + $0x99] sm:$0xff]
    %v5150 = vld [vmem:[#allocation2 + $0xa1] sm:$0xff]
    %v5151 = vpack.c.bf16 %v5134, %v5133
    %v5152 = vpack.c.bf16 %v5136, %v5135
    %v5153 = vpack.c.bf16 %v5138, %v5137
    %v5154 = vpack.c.bf16 %v5140, %v5139
    %v5155 = vpack.c.bf16 %v5142, %v5141
    %v5156 = vpack.c.bf16 %v5144, %v5143
    %v5157 = vpack.c.bf16 %v5146, %v5145
    %v5158 = vpack.c.bf16 %v5148, %v5147
    %v5159 = vpack.c.bf16 %v5150, %v5149
    %v5160 = vld [vmem:[%s2 + $0xd0] sm:$0xff]
    %v5161 = vld [vmem:[%s2 + $0xd8] sm:$0xff]
    %v5164 = vunpack.c.l.b16 %v5160
    %v5165 = vunpack.c.h.b16 %v5160
    %v5166 = vunpack.c.l.b16 %v5161
    %v5167 = vunpack.c.h.b16 %v5161
    %v5168 = vpack.c.b16 %v5164, %v5164
    %v5169 = vpack.c.b16 %v5165, %v5165
    %v5170 = vpack.c.b16 %v5166, %v5166
    %v5171 = vpack.c.b16 %v5167, %v5167
    %v5173 = vsel %vm82, %v5151, 0
    %v5176 = vsel %vm82, %v5152, 0
    %v5179 = vsel %vm82, %v5153, 0
    %v5182 = vsel %vm82, %v5154, 0
    %v5185 = vsel %vm82, %v5155, 0
    %v5188 = vsel %vm82, %v5156, 0
    %v5191 = vsel %vm82, %v5157, 0
    %v5194 = vsel %vm82, %v5158, 0
    %v5197 = vsel %vm82, %v5159, 0
    %v5200 = vsel %vm223, %v5168, 0
    %v5203 = vsel %vm223, %v5169, 0
    %v5206 = vsel %vm223, %v5170, 0
    %v5209 = vsel %vm223, %v5171, 0
    %5211 = vmatprep.subr.bf16.mxu0 %v5203
    %5212 = vmatpush1.bf16.msra.mxu0 %v5200
    %5213 = vmatprep.subr.bf16.mxu0 0
    %5214 = vmatpush1.bf16.msra.mxu0 0
    %5215 = vmatprep.subr.bf16.mxu0 0
    %5216 = vmatpush1.bf16.msra.mxu0 0
    %5217 = vmatprep.subr.bf16.mxu0 0
    %5218 = vmatpush1.bf16.msra.mxu0 0
    %5219 = vmatprep.subr.bf16.mxu0 0
    %5220 = vmatpush1.bf16.msra.mxu0 0
    %5221 = vmatprep.subr.bf16.mxu0 0
    %5222 = vmatpush1.bf16.msra.mxu0 0
    %5223 = vmatprep.subr.bf16.mxu0 0
    %5224 = vmatpush1.bf16.msra.mxu0 0
    %5225 = vmatprep.subr.bf16.mxu0 0
    %5226 = vmatpush1.bf16.msra.mxu0 0
    %5227 = vmatprep.subr.bf16.mxu0 0
    %5228 = vmatpush1.bf16.msra.mxu0 0
    %5229 = vmatprep.subr.bf16.mxu0 0
    %5230 = vmatpush1.bf16.msra.mxu0 0
    %5231 = vmatprep.subr.bf16.mxu0 0
    %5232 = vmatpush1.bf16.msra.mxu0 0
    %5233 = vmatprep.subr.bf16.mxu0 0
    %5234 = vmatpush1.bf16.msra.mxu0 0
    %5235 = vmatprep.subr.bf16.mxu0 0
    %5236 = vmatpush1.bf16.msra.mxu0 0
    %5237 = vmatprep.subr.bf16.mxu0 0
    %5238 = vmatpush1.bf16.msra.mxu0 0
    %5239 = vmatprep.subr.bf16.mxu0 0
    %5240 = vmatpush1.bf16.msra.mxu0 0
    %5241 = vmatprep.subr.bf16.mxu0 0
    %5242 = vmatpush1.bf16.msra.mxu0 0
    %5243 = vmatprep.mubr.bf16.mxu0 0
    %5244 = vmatmul.mubr.bf16.gmra.mrb[0].mxu0 %v5173
    %v5245 = vpop.f32.mrb[0].mxu0
    %v5246 = vadd.f32 0.0, %v5245
    %v5247 = vpop.f32.mrb[0].mxu0
    %v5248 = vadd.f32 0.0, %v5247
    %v5249 = vpop.f32.mrb[0].mxu0
    %v5250 = vadd.f32 0.0, %v5249
    %v5251 = vpop.f32.mrb[0].mxu0
    %v5252 = vadd.f32 0.0, %v5251
    %5253 = vmatprep.mubr.bf16.mxu0 0
    %5254 = vmatmul.mubr.bf16.gmra.mrb[0].mxu0 %v5176
    %v5255 = vpop.f32.mrb[0].mxu0
    %v5256 = vadd.f32 0.0, %v5255
    %v5257 = vpop.f32.mrb[0].mxu0
    %v5258 = vadd.f32 0.0, %v5257
    %v5259 = vpop.f32.mrb[0].mxu0
    %v5260 = vadd.f32 0.0, %v5259
    %v5261 = vpop.f32.mrb[0].mxu0
    %v5262 = vadd.f32 0.0, %v5261
    %5263 = vmatprep.mubr.bf16.mxu0 0
    %5264 = vmatmul.mubr.bf16.gmra.mrb[0].mxu0 %v5179
    %v5265 = vpop.f32.mrb[0].mxu0
    %v5266 = vadd.f32 0.0, %v5265
    %v5267 = vpop.f32.mrb[0].mxu0
    %v5268 = vadd.f32 0.0, %v5267
    %v5269 = vpop.f32.mrb[0].mxu0
    %v5270 = vadd.f32 0.0, %v5269
    %v5271 = vpop.f32.mrb[0].mxu0
    %v5272 = vadd.f32 0.0, %v5271
    %5273 = vmatprep.mubr.bf16.mxu0 0
    %5274 = vmatmul.mubr.bf16.gmra.mrb[0].mxu0 %v5182
    %v5275 = vpop.f32.mrb[0].mxu0
    %v5276 = vadd.f32 0.0, %v5275
    %v5277 = vpop.f32.mrb[0].mxu0
    %v5278 = vadd.f32 0.0, %v5277
    %v5279 = vpop.f32.mrb[0].mxu0
    %v5280 = vadd.f32 0.0, %v5279
    %v5281 = vpop.f32.mrb[0].mxu0
    %v5282 = vadd.f32 0.0, %v5281
    %5283 = vmatprep.mubr.bf16.mxu0 0
    %5284 = vmatmul.mubr.bf16.gmra.mrb[0].mxu0 %v5185
    %v5285 = vpop.f32.mrb[0].mxu0
    %v5286 = vadd.f32 0.0, %v5285
    %v5287 = vpop.f32.mrb[0].mxu0
    %v5288 = vadd.f32 0.0, %v5287
    %v5289 = vpop.f32.mrb[0].mxu0
    %v5290 = vadd.f32 0.0, %v5289
    %v5291 = vpop.f32.mrb[0].mxu0
    %v5292 = vadd.f32 0.0, %v5291
    %5293 = vmatprep.mubr.bf16.mxu0 0
    %5294 = vmatmul.mubr.bf16.gmra.mrb[0].mxu0 %v5188
    %v5295 = vpop.f32.mrb[0].mxu0
    %v5296 = vadd.f32 0.0, %v5295
    %v5297 = vpop.f32.mrb[0].mxu0
    %v5298 = vadd.f32 0.0, %v5297
    %v5299 = vpop.f32.mrb[0].mxu0
    %v5300 = vadd.f32 0.0, %v5299
    %v5301 = vpop.f32.mrb[0].mxu0
    %v5302 = vadd.f32 0.0, %v5301
    %5303 = vmatprep.mubr.bf16.mxu0 0
    %5304 = vmatmul.mubr.bf16.gmra.mrb[0].mxu0 %v5191
    %v5305 = vpop.f32.mrb[0].mxu0
    %v5306 = vadd.f32 0.0, %v5305
    %v5307 = vpop.f32.mrb[0].mxu0
    %v5308 = vadd.f32 0.0, %v5307
    %v5309 = vpop.f32.mrb[0].mxu0
    %v5310 = vadd.f32 0.0, %v5309
    %v5311 = vpop.f32.mrb[0].mxu0
    %v5312 = vadd.f32 0.0, %v5311
    %5313 = vmatprep.mubr.bf16.mxu0 0
    %5314 = vmatmul.mubr.bf16.gmra.mrb[0].mxu0 %v5194
    %v5315 = vpop.f32.mrb[0].mxu0
    %v5316 = vadd.f32 0.0, %v5315
    %v5317 = vpop.f32.mrb[0].mxu0
    %v5318 = vadd.f32 0.0, %v5317
    %v5319 = vpop.f32.mrb[0].mxu0
    %v5320 = vadd.f32 0.0, %v5319
    %v5321 = vpop.f32.mrb[0].mxu0
    %v5322 = vadd.f32 0.0, %v5321
    %5323 = vmatprep.mubr.bf16.mxu0 0
    %5324 = vmatmul.mubr.bf16.gmra.mrb[0].mxu0 %v5197
    %v5325 = vpop.f32.mrb[0].mxu0
    %v5326 = vadd.f32 0.0, %v5325
    %v5327 = vpop.f32.mrb[0].mxu0
    %v5328 = vadd.f32 0.0, %v5327
    %v5329 = vpop.f32.mrb[0].mxu0
    %v5330 = vadd.f32 0.0, %v5329
    %v5331 = vpop.f32.mrb[0].mxu0
    %v5332 = vadd.f32 0.0, %v5331
    %5333 = vdwg.mxu0
    %5334 = vmatprep.subr.bf16.mxu0 %v5209
    %5335 = vmatpush1.bf16.msra.mxu0 %v5206
    %5336 = vmatprep.subr.bf16.mxu0 0
    %5337 = vmatpush1.bf16.msra.mxu0 0
    %5338 = vmatprep.subr.bf16.mxu0 0
    %5339 = vmatpush1.bf16.msra.mxu0 0
    %5340 = vmatprep.subr.bf16.mxu0 0
    %5341 = vmatpush1.bf16.msra.mxu0 0
    %5342 = vmatprep.subr.bf16.mxu0 0
    %5343 = vmatpush1.bf16.msra.mxu0 0
    %5344 = vmatprep.subr.bf16.mxu0 0
    %5345 = vmatpush1.bf16.msra.mxu0 0
    %5346 = vmatprep.subr.bf16.mxu0 0
    %5347 = vmatpush1.bf16.msra.mxu0 0
    %5348 = vmatprep.subr.bf16.mxu0 0
    %5349 = vmatpush1.bf16.msra.mxu0 0
    %5350 = vmatprep.subr.bf16.mxu0 0
    %5351 = vmatpush1.bf16.msra.mxu0 0
    %5352 = vmatprep.subr.bf16.mxu0 0
    %5353 = vmatpush1.bf16.msra.mxu0 0
    %5354 = vmatprep.subr.bf16.mxu0 0
    %5355 = vmatpush1.bf16.msra.mxu0 0
    %5356 = vmatprep.subr.bf16.mxu0 0
    %5357 = vmatpush1.bf16.msra.mxu0 0
    %5358 = vmatprep.subr.bf16.mxu0 0
    %5359 = vmatpush1.bf16.msra.mxu0 0
    %5360 = vmatprep.subr.bf16.mxu0 0
    %5361 = vmatpush1.bf16.msra.mxu0 0
    %5362 = vmatprep.subr.bf16.mxu0 0
    %5363 = vmatpush1.bf16.msra.mxu0 0
    %5364 = vmatprep.subr.bf16.mxu0 0
    %5365 = vmatpush1.bf16.msra.mxu0 0
    %5366 = vmatprep.mubr.bf16.mxu0 0
    %5367 = vmatmul.mubr.bf16.gmra.mrb[0].mxu0 %v5173
    %v5368 = vpop.f32.mrb[0].mxu0
    %v5369 = vadd.f32 0.0, %v5368
    %v5370 = vpop.f32.mrb[0].mxu0
    %v5371 = vadd.f32 0.0, %v5370
    %v5372 = vpop.f32.mrb[0].mxu0
    %v5373 = vadd.f32 0.0, %v5372
    %v5374 = vpop.f32.mrb[0].mxu0
    %v5375 = vadd.f32 0.0, %v5374
    %5376 = vmatprep.mubr.bf16.mxu0 0
    %5377 = vmatmul.mubr.bf16.gmra.mrb[0].mxu0 %v5176
    %v5378 = vpop.f32.mrb[0].mxu0
    %v5379 = vadd.f32 0.0, %v5378
    %v5380 = vpop.f32.mrb[0].mxu0
    %v5381 = vadd.f32 0.0, %v5380
    %v5382 = vpop.f32.mrb[0].mxu0
    %v5383 = vadd.f32 0.0, %v5382
    %v5384 = vpop.f32.mrb[0].mxu0
    %v5385 = vadd.f32 0.0, %v5384
    %5386 = vmatprep.mubr.bf16.mxu0 0
    %5387 = vmatmul.mubr.bf16.gmra.mrb[0].mxu0 %v5179
    %v5388 = vpop.f32.mrb[0].mxu0
    %v5389 = vadd.f32 0.0, %v5388
    %v5390 = vpop.f32.mrb[0].mxu0
    %v5391 = vadd.f32 0.0, %v5390
    %v5392 = vpop.f32.mrb[0].mxu0
    %v5393 = vadd.f32 0.0, %v5392
    %v5394 = vpop.f32.mrb[0].mxu0
    %v5395 = vadd.f32 0.0, %v5394
    %5396 = vmatprep.mubr.bf16.mxu0 0
    %5397 = vmatmul.mubr.bf16.gmra.mrb[0].mxu0 %v5182
    %v5398 = vpop.f32.mrb[0].mxu0
    %v5399 = vadd.f32 0.0, %v5398
    %v5400 = vpop.f32.mrb[0].mxu0
    %v5401 = vadd.f32 0.0, %v5400
    %v5402 = vpop.f32.mrb[0].mxu0
    %v5403 = vadd.f32 0.0, %v5402
    %v5404 = vpop.f32.mrb[0].mxu0
    %v5405 = vadd.f32 0.0, %v5404
    %5406 = vmatprep.mubr.bf16.mxu0 0
    %5407 = vmatmul.mubr.bf16.gmra.mrb[0].mxu0 %v5185
    %v5408 = vpop.f32.mrb[0].mxu0
    %v5409 = vadd.f32 0.0, %v5408
    %v5410 = vpop.f32.mrb[0].mxu0
    %v5411 = vadd.f32 0.0, %v5410
    %v5412 = vpop.f32.mrb[0].mxu0
    %v5413 = vadd.f32 0.0, %v5412
    %v5414 = vpop.f32.mrb[0].mxu0
    %v5415 = vadd.f32 0.0, %v5414
    %5416 = vmatprep.mubr.bf16.mxu0 0
    %5417 = vmatmul.mubr.bf16.gmra.mrb[0].mxu0 %v5188
    %v5418 = vpop.f32.mrb[0].mxu0
    %v5419 = vadd.f32 0.0, %v5418
    %v5420 = vpop.f32.mrb[0].mxu0
    %v5421 = vadd.f32 0.0, %v5420
    %v5422 = vpop.f32.mrb[0].mxu0
    %v5423 = vadd.f32 0.0, %v5422
    %v5424 = vpop.f32.mrb[0].mxu0
    %v5425 = vadd.f32 0.0, %v5424
    %5426 = vmatprep.mubr.bf16.mxu0 0
    %5427 = vmatmul.mubr.bf16.gmra.mrb[0].mxu0 %v5191
    %v5428 = vpop.f32.mrb[0].mxu0
    %v5429 = vadd.f32 0.0, %v5428
    %v5430 = vpop.f32.mrb[0].mxu0
    %v5431 = vadd.f32 0.0, %v5430
    %v5432 = vpop.f32.mrb[0].mxu0
    %v5433 = vadd.f32 0.0, %v5432
    %v5434 = vpop.f32.mrb[0].mxu0
    %v5435 = vadd.f32 0.0, %v5434
    %5436 = vmatprep.mubr.bf16.mxu0 0
    %5437 = vmatmul.mubr.bf16.gmra.mrb[0].mxu0 %v5194
    %v5438 = vpop.f32.mrb[0].mxu0
    %v5439 = vadd.f32 0.0, %v5438
    %v5440 = vpop.f32.mrb[0].mxu0
    %v5441 = vadd.f32 0.0, %v5440
    %v5442 = vpop.f32.mrb[0].mxu0
    %v5443 = vadd.f32 0.0, %v5442
    %v5444 = vpop.f32.mrb[0].mxu0
    %v5445 = vadd.f32 0.0, %v5444
    %5446 = vmatprep.mubr.bf16.mxu0 0
    %5447 = vmatmul.mubr.bf16.gmra.mrb[0].mxu0 %v5197
    %v5448 = vpop.f32.mrb[0].mxu0
    %v5449 = vadd.f32 0.0, %v5448
    %v5450 = vpop.f32.mrb[0].mxu0
    %v5451 = vadd.f32 0.0, %v5450
    %v5452 = vpop.f32.mrb[0].mxu0
    %v5453 = vadd.f32 0.0, %v5452
    %v5454 = vpop.f32.mrb[0].mxu0
    %v5455 = vadd.f32 0.0, %v5454
    %5456 = vdwg.mxu0
    %v5457 = vadd.f32 %v5061, %v5246
    %v5458 = vadd.f32 %v5062, %v5248
    %v5459 = vadd.f32 %v5063, %v5369
    %v5460 = vadd.f32 %v5064, %v5371
    %v5461 = vadd.f32 %v5065, %v5250
    %v5462 = vadd.f32 %v5066, %v5252
    %v5463 = vadd.f32 %v5067, %v5373
    %v5464 = vadd.f32 %v5068, %v5375
    %v5465 = vadd.f32 %v5069, %v5256
    %v5466 = vadd.f32 %v5070, %v5258
    %v5467 = vadd.f32 %v5071, %v5379
    %v5468 = vadd.f32 %v5072, %v5381
    %v5469 = vadd.f32 %v5073, %v5260
    %v5470 = vadd.f32 %v5074, %v5262
    %v5471 = vadd.f32 %v5075, %v5383
    %v5472 = vadd.f32 %v5076, %v5385
    %v5473 = vadd.f32 %v5077, %v5266
    %v5474 = vadd.f32 %v5078, %v5268
    %v5475 = vadd.f32 %v5079, %v5389
    %v5476 = vadd.f32 %v5080, %v5391
    %v5477 = vadd.f32 %v5081, %v5270
    %v5478 = vadd.f32 %v5082, %v5272
    %v5479 = vadd.f32 %v5083, %v5393
    %v5480 = vadd.f32 %v5084, %v5395
    %v5481 = vadd.f32 %v5085, %v5276
    %v5482 = vadd.f32 %v5086, %v5278
    %v5483 = vadd.f32 %v5087, %v5399
    %v5484 = vadd.f32 %v5088, %v5401
    %v5485 = vadd.f32 %v5089, %v5280
    %v5486 = vadd.f32 %v5090, %v5282
    %v5487 = vadd.f32 %v5091, %v5403
    %v5488 = vadd.f32 %v5092, %v5405
    %v5489 = vadd.f32 %v5093, %v5286
    %v5490 = vadd.f32 %v5094, %v5288
    %v5491 = vadd.f32 %v5095, %v5409
    %v5492 = vadd.f32 %v5096, %v5411
    %v5493 = vadd.f32 %v5097, %v5290
    %v5494 = vadd.f32 %v5098, %v5292
    %v5495 = vadd.f32 %v5099, %v5413
    %v5496 = vadd.f32 %v5100, %v5415
    %v5497 = vadd.f32 %v5101, %v5296
    %v5498 = vadd.f32 %v5102, %v5298
    %v5499 = vadd.f32 %v5103, %v5419
    %v5500 = vadd.f32 %v5104, %v5421
    %v5501 = vadd.f32 %v5105, %v5300
    %v5502 = vadd.f32 %v5106, %v5302
    %v5503 = vadd.f32 %v5107, %v5423
    %v5504 = vadd.f32 %v5108, %v5425
    %v5505 = vadd.f32 %v5109, %v5306
    %v5506 = vadd.f32 %v5110, %v5308
    %v5507 = vadd.f32 %v5111, %v5429
    %v5508 = vadd.f32 %v5112, %v5431
    %v5509 = vadd.f32 %v5113, %v5310
    %v5510 = vadd.f32 %v5114, %v5312
    %v5511 = vadd.f32 %v5115, %v5433
    %v5512 = vadd.f32 %v5116, %v5435
    %v5513 = vadd.f32 %v5117, %v5316
    %v5514 = vadd.f32 %v5118, %v5318
    %v5515 = vadd.f32 %v5119, %v5439
    %v5516 = vadd.f32 %v5120, %v5441
    %v5517 = vadd.f32 %v5121, %v5320
    %v5518 = vadd.f32 %v5122, %v5322
    %v5519 = vadd.f32 %v5123, %v5443
    %v5520 = vadd.f32 %v5124, %v5445
    %v5521 = vadd.f32 %v5125, %v5326
    %v5522 = vadd.f32 %v5126, %v5328
    %v5523 = vadd.f32 %v5127, %v5449
    %v5524 = vadd.f32 %v5128, %v5451
    %v5525 = vadd.f32 %v5129, %v5330
    %v5526 = vadd.f32 %v5130, %v5332
    %v5527 = vadd.f32 %v5131, %v5453
    %v5528 = vadd.f32 %v5132, %v5455
    %v5529 = vld [vmem:[#allocation2 + $0x1a] sm:$0xff]
    %v5530 = vld [vmem:[#allocation2 + $0x22] sm:$0xff]
    %v5531 = vld [vmem:[#allocation2 + $0x2a] sm:$0xff]
    %v5532 = vld [vmem:[#allocation2 + $0x32] sm:$0xff]
    %v5533 = vld [vmem:[#allocation2 + $0x3a] sm:$0xff]
    %v5534 = vld [vmem:[#allocation2 + $0x42] sm:$0xff]
    %v5535 = vld [vmem:[#allocation2 + $0x4a] sm:$0xff]
    %v5536 = vld [vmem:[#allocation2 + $0x52] sm:$0xff]
    %v5537 = vld [vmem:[#allocation2 + $0x5a] sm:$0xff]
    %v5538 = vld [vmem:[#allocation2 + $0x62] sm:$0xff]
    %v5539 = vld [vmem:[#allocation2 + $0x6a] sm:$0xff]
    %v5540 = vld [vmem:[#allocation2 + $0x72] sm:$0xff]
    %v5541 = vld [vmem:[#allocation2 + $0x7a] sm:$0xff]
    %v5542 = vld [vmem:[#allocation2 + $0x82] sm:$0xff]
    %v5543 = vld [vmem:[#allocation2 + $0x8a] sm:$0xff]
    %v5544 = vld [vmem:[#allocation2 + $0x92] sm:$0xff]
    %v5545 = vld [vmem:[#allocation2 + $0x9a] sm:$0xff]
    %v5546 = vld [vmem:[#allocation2 + $0xa2] sm:$0xff]
    %v5547 = vpack.c.bf16 %v5530, %v5529
    %v5548 = vpack.c.bf16 %v5532, %v5531
    %v5549 = vpack.c.bf16 %v5534, %v5533
    %v5550 = vpack.c.bf16 %v5536, %v5535
    %v5551 = vpack.c.bf16 %v5538, %v5537
    %v5552 = vpack.c.bf16 %v5540, %v5539
    %v5553 = vpack.c.bf16 %v5542, %v5541
    %v5554 = vpack.c.bf16 %v5544, %v5543
    %v5555 = vpack.c.bf16 %v5546, %v5545
    %v5556 = vld [vmem:[%s2 + $0xe0] sm:$0xff]
    %v5557 = vld [vmem:[%s2 + $0xe8] sm:$0xff]
    %v5560 = vunpack.c.l.b16 %v5556
    %v5561 = vunpack.c.h.b16 %v5556
    %v5562 = vunpack.c.l.b16 %v5557
    %v5563 = vunpack.c.h.b16 %v5557
    %v5564 = vpack.c.b16 %v5560, %v5560
    %v5565 = vpack.c.b16 %v5561, %v5561
    %v5566 = vpack.c.b16 %v5562, %v5562
    %v5567 = vpack.c.b16 %v5563, %v5563
    %v5569 = vsel %vm82, %v5547, 0
    %v5572 = vsel %vm82, %v5548, 0
    %v5575 = vsel %vm82, %v5549, 0
    %v5578 = vsel %vm82, %v5550, 0
    %v5581 = vsel %vm82, %v5551, 0
    %v5584 = vsel %vm82, %v5552, 0
    %v5587 = vsel %vm82, %v5553, 0
    %v5590 = vsel %vm82, %v5554, 0
    %v5593 = vsel %vm82, %v5555, 0
    %v5596 = vsel %vm223, %v5564, 0
    %v5599 = vsel %vm223, %v5565, 0
    %v5602 = vsel %vm223, %v5566, 0
    %v5605 = vsel %vm223, %v5567, 0
    %5607 = vmatprep.subr.bf16.mxu0 %v5599
    %5608 = vmatpush1.bf16.msra.mxu0 %v5596
    %5609 = vmatprep.subr.bf16.mxu0 0
    %5610 = vmatpush1.bf16.msra.mxu0 0
    %5611 = vmatprep.subr.bf16.mxu0 0
    %5612 = vmatpush1.bf16.msra.mxu0 0
    %5613 = vmatprep.subr.bf16.mxu0 0
    %5614 = vmatpush1.bf16.msra.mxu0 0
    %5615 = vmatprep.subr.bf16.mxu0 0
    %5616 = vmatpush1.bf16.msra.mxu0 0
    %5617 = vmatprep.subr.bf16.mxu0 0
    %5618 = vmatpush1.bf16.msra.mxu0 0
    %5619 = vmatprep.subr.bf16.mxu0 0
    %5620 = vmatpush1.bf16.msra.mxu0 0
    %5621 = vmatprep.subr.bf16.mxu0 0
    %5622 = vmatpush1.bf16.msra.mxu0 0
    %5623 = vmatprep.subr.bf16.mxu0 0
    %5624 = vmatpush1.bf16.msra.mxu0 0
    %5625 = vmatprep.subr.bf16.mxu0 0
    %5626 = vmatpush1.bf16.msra.mxu0 0
    %5627 = vmatprep.subr.bf16.mxu0 0
    %5628 = vmatpush1.bf16.msra.mxu0 0
    %5629 = vmatprep.subr.bf16.mxu0 0
    %5630 = vmatpush1.bf16.msra.mxu0 0
    %5631 = vmatprep.subr.bf16.mxu0 0
    %5632 = vmatpush1.bf16.msra.mxu0 0
    %5633 = vmatprep.subr.bf16.mxu0 0
    %5634 = vmatpush1.bf16.msra.mxu0 0
    %5635 = vmatprep.subr.bf16.mxu0 0
    %5636 = vmatpush1.bf16.msra.mxu0 0
    %5637 = vmatprep.subr.bf16.mxu0 0
    %5638 = vmatpush1.bf16.msra.mxu0 0
    %5639 = vmatprep.mubr.bf16.mxu0 0
    %5640 = vmatmul.mubr.bf16.gmra.mrb[0].mxu0 %v5569
    %v5641 = vpop.f32.mrb[0].mxu0
    %v5642 = vadd.f32 0.0, %v5641
    %v5643 = vpop.f32.mrb[0].mxu0
    %v5644 = vadd.f32 0.0, %v5643
    %v5645 = vpop.f32.mrb[0].mxu0
    %v5646 = vadd.f32 0.0, %v5645
    %v5647 = vpop.f32.mrb[0].mxu0
    %v5648 = vadd.f32 0.0, %v5647
    %5649 = vmatprep.mubr.bf16.mxu0 0
    %5650 = vmatmul.mubr.bf16.gmra.mrb[0].mxu0 %v5572
    %v5651 = vpop.f32.mrb[0].mxu0
    %v5652 = vadd.f32 0.0, %v5651
    %v5653 = vpop.f32.mrb[0].mxu0
    %v5654 = vadd.f32 0.0, %v5653
    %v5655 = vpop.f32.mrb[0].mxu0
    %v5656 = vadd.f32 0.0, %v5655
    %v5657 = vpop.f32.mrb[0].mxu0
    %v5658 = vadd.f32 0.0, %v5657
    %5659 = vmatprep.mubr.bf16.mxu0 0
    %5660 = vmatmul.mubr.bf16.gmra.mrb[0].mxu0 %v5575
    %v5661 = vpop.f32.mrb[0].mxu0
    %v5662 = vadd.f32 0.0, %v5661
    %v5663 = vpop.f32.mrb[0].mxu0
    %v5664 = vadd.f32 0.0, %v5663
    %v5665 = vpop.f32.mrb[0].mxu0
    %v5666 = vadd.f32 0.0, %v5665
    %v5667 = vpop.f32.mrb[0].mxu0
    %v5668 = vadd.f32 0.0, %v5667
    %5669 = vmatprep.mubr.bf16.mxu0 0
    %5670 = vmatmul.mubr.bf16.gmra.mrb[0].mxu0 %v5578
    %v5671 = vpop.f32.mrb[0].mxu0
    %v5672 = vadd.f32 0.0, %v5671
    %v5673 = vpop.f32.mrb[0].mxu0
    %v5674 = vadd.f32 0.0, %v5673
    %v5675 = vpop.f32.mrb[0].mxu0
    %v5676 = vadd.f32 0.0, %v5675
    %v5677 = vpop.f32.mrb[0].mxu0
    %v5678 = vadd.f32 0.0, %v5677
    %5679 = vmatprep.mubr.bf16.mxu0 0
    %5680 = vmatmul.mubr.bf16.gmra.mrb[0].mxu0 %v5581
    %v5681 = vpop.f32.mrb[0].mxu0
    %v5682 = vadd.f32 0.0, %v5681
    %v5683 = vpop.f32.mrb[0].mxu0
    %v5684 = vadd.f32 0.0, %v5683
    %v5685 = vpop.f32.mrb[0].mxu0
    %v5686 = vadd.f32 0.0, %v5685
    %v5687 = vpop.f32.mrb[0].mxu0
    %v5688 = vadd.f32 0.0, %v5687
    %5689 = vmatprep.mubr.bf16.mxu0 0
    %5690 = vmatmul.mubr.bf16.gmra.mrb[0].mxu0 %v5584
    %v5691 = vpop.f32.mrb[0].mxu0
    %v5692 = vadd.f32 0.0, %v5691
    %v5693 = vpop.f32.mrb[0].mxu0
    %v5694 = vadd.f32 0.0, %v5693
    %v5695 = vpop.f32.mrb[0].mxu0
    %v5696 = vadd.f32 0.0, %v5695
    %v5697 = vpop.f32.mrb[0].mxu0
    %v5698 = vadd.f32 0.0, %v5697
    %5699 = vmatprep.mubr.bf16.mxu0 0
    %5700 = vmatmul.mubr.bf16.gmra.mrb[0].mxu0 %v5587
    %v5701 = vpop.f32.mrb[0].mxu0
    %v5702 = vadd.f32 0.0, %v5701
    %v5703 = vpop.f32.mrb[0].mxu0
    %v5704 = vadd.f32 0.0, %v5703
    %v5705 = vpop.f32.mrb[0].mxu0
    %v5706 = vadd.f32 0.0, %v5705
    %v5707 = vpop.f32.mrb[0].mxu0
    %v5708 = vadd.f32 0.0, %v5707
    %5709 = vmatprep.mubr.bf16.mxu0 0
    %5710 = vmatmul.mubr.bf16.gmra.mrb[0].mxu0 %v5590
    %v5711 = vpop.f32.mrb[0].mxu0
    %v5712 = vadd.f32 0.0, %v5711
    %v5713 = vpop.f32.mrb[0].mxu0
    %v5714 = vadd.f32 0.0, %v5713
    %v5715 = vpop.f32.mrb[0].mxu0
    %v5716 = vadd.f32 0.0, %v5715
    %v5717 = vpop.f32.mrb[0].mxu0
    %v5718 = vadd.f32 0.0, %v5717
    %5719 = vmatprep.mubr.bf16.mxu0 0
    %5720 = vmatmul.mubr.bf16.gmra.mrb[0].mxu0 %v5593
    %v5721 = vpop.f32.mrb[0].mxu0
    %v5722 = vadd.f32 0.0, %v5721
    %v5723 = vpop.f32.mrb[0].mxu0
    %v5724 = vadd.f32 0.0, %v5723
    %v5725 = vpop.f32.mrb[0].mxu0
    %v5726 = vadd.f32 0.0, %v5725
    %v5727 = vpop.f32.mrb[0].mxu0
    %v5728 = vadd.f32 0.0, %v5727
    %5729 = vdwg.mxu0
    %5730 = vmatprep.subr.bf16.mxu0 %v5605
    %5731 = vmatpush1.bf16.msra.mxu0 %v5602
    %5732 = vmatprep.subr.bf16.mxu0 0
    %5733 = vmatpush1.bf16.msra.mxu0 0
    %5734 = vmatprep.subr.bf16.mxu0 0
    %5735 = vmatpush1.bf16.msra.mxu0 0
    %5736 = vmatprep.subr.bf16.mxu0 0
    %5737 = vmatpush1.bf16.msra.mxu0 0
    %5738 = vmatprep.subr.bf16.mxu0 0
    %5739 = vmatpush1.bf16.msra.mxu0 0
    %5740 = vmatprep.subr.bf16.mxu0 0
    %5741 = vmatpush1.bf16.msra.mxu0 0
    %5742 = vmatprep.subr.bf16.mxu0 0
    %5743 = vmatpush1.bf16.msra.mxu0 0
    %5744 = vmatprep.subr.bf16.mxu0 0
    %5745 = vmatpush1.bf16.msra.mxu0 0
    %5746 = vmatprep.subr.bf16.mxu0 0
    %5747 = vmatpush1.bf16.msra.mxu0 0
    %5748 = vmatprep.subr.bf16.mxu0 0
    %5749 = vmatpush1.bf16.msra.mxu0 0
    %5750 = vmatprep.subr.bf16.mxu0 0
    %5751 = vmatpush1.bf16.msra.mxu0 0
    %5752 = vmatprep.subr.bf16.mxu0 0
    %5753 = vmatpush1.bf16.msra.mxu0 0
    %5754 = vmatprep.subr.bf16.mxu0 0
    %5755 = vmatpush1.bf16.msra.mxu0 0
    %5756 = vmatprep.subr.bf16.mxu0 0
    %5757 = vmatpush1.bf16.msra.mxu0 0
    %5758 = vmatprep.subr.bf16.mxu0 0
    %5759 = vmatpush1.bf16.msra.mxu0 0
    %5760 = vmatprep.subr.bf16.mxu0 0
    %5761 = vmatpush1.bf16.msra.mxu0 0
    %5762 = vmatprep.mubr.bf16.mxu0 0
    %5763 = vmatmul.mubr.bf16.gmra.mrb[0].mxu0 %v5569
    %v5764 = vpop.f32.mrb[0].mxu0
    %v5765 = vadd.f32 0.0, %v5764
    %v5766 = vpop.f32.mrb[0].mxu0
    %v5767 = vadd.f32 0.0, %v5766
    %v5768 = vpop.f32.mrb[0].mxu0
    %v5769 = vadd.f32 0.0, %v5768
    %v5770 = vpop.f32.mrb[0].mxu0
    %v5771 = vadd.f32 0.0, %v5770
    %5772 = vmatprep.mubr.bf16.mxu0 0
    %5773 = vmatmul.mubr.bf16.gmra.mrb[0].mxu0 %v5572
    %v5774 = vpop.f32.mrb[0].mxu0
    %v5775 = vadd.f32 0.0, %v5774
    %v5776 = vpop.f32.mrb[0].mxu0
    %v5777 = vadd.f32 0.0, %v5776
    %v5778 = vpop.f32.mrb[0].mxu0
    %v5779 = vadd.f32 0.0, %v5778
    %v5780 = vpop.f32.mrb[0].mxu0
    %v5781 = vadd.f32 0.0, %v5780
    %5782 = vmatprep.mubr.bf16.mxu0 0
    %5783 = vmatmul.mubr.bf16.gmra.mrb[0].mxu0 %v5575
    %v5784 = vpop.f32.mrb[0].mxu0
    %v5785 = vadd.f32 0.0, %v5784
    %v5786 = vpop.f32.mrb[0].mxu0
    %v5787 = vadd.f32 0.0, %v5786
    %v5788 = vpop.f32.mrb[0].mxu0
    %v5789 = vadd.f32 0.0, %v5788
    %v5790 = vpop.f32.mrb[0].mxu0
    %v5791 = vadd.f32 0.0, %v5790
    %5792 = vmatprep.mubr.bf16.mxu0 0
    %5793 = vmatmul.mubr.bf16.gmra.mrb[0].mxu0 %v5578
    %v5794 = vpop.f32.mrb[0].mxu0
    %v5795 = vadd.f32 0.0, %v5794
    %v5796 = vpop.f32.mrb[0].mxu0
    %v5797 = vadd.f32 0.0, %v5796
    %v5798 = vpop.f32.mrb[0].mxu0
    %v5799 = vadd.f32 0.0, %v5798
    %v5800 = vpop.f32.mrb[0].mxu0
    %v5801 = vadd.f32 0.0, %v5800
    %5802 = vmatprep.mubr.bf16.mxu0 0
    %5803 = vmatmul.mubr.bf16.gmra.mrb[0].mxu0 %v5581
    %v5804 = vpop.f32.mrb[0].mxu0
    %v5805 = vadd.f32 0.0, %v5804
    %v5806 = vpop.f32.mrb[0].mxu0
    %v5807 = vadd.f32 0.0, %v5806
    %v5808 = vpop.f32.mrb[0].mxu0
    %v5809 = vadd.f32 0.0, %v5808
    %v5810 = vpop.f32.mrb[0].mxu0
    %v5811 = vadd.f32 0.0, %v5810
    %5812 = vmatprep.mubr.bf16.mxu0 0
    %5813 = vmatmul.mubr.bf16.gmra.mrb[0].mxu0 %v5584
    %v5814 = vpop.f32.mrb[0].mxu0
    %v5815 = vadd.f32 0.0, %v5814
    %v5816 = vpop.f32.mrb[0].mxu0
    %v5817 = vadd.f32 0.0, %v5816
    %v5818 = vpop.f32.mrb[0].mxu0
    %v5819 = vadd.f32 0.0, %v5818
    %v5820 = vpop.f32.mrb[0].mxu0
    %v5821 = vadd.f32 0.0, %v5820
    %5822 = vmatprep.mubr.bf16.mxu0 0
    %5823 = vmatmul.mubr.bf16.gmra.mrb[0].mxu0 %v5587
    %v5824 = vpop.f32.mrb[0].mxu0
    %v5825 = vadd.f32 0.0, %v5824
    %v5826 = vpop.f32.mrb[0].mxu0
    %v5827 = vadd.f32 0.0, %v5826
    %v5828 = vpop.f32.mrb[0].mxu0
    %v5829 = vadd.f32 0.0, %v5828
    %v5830 = vpop.f32.mrb[0].mxu0
    %v5831 = vadd.f32 0.0, %v5830
    %5832 = vmatprep.mubr.bf16.mxu0 0
    %5833 = vmatmul.mubr.bf16.gmra.mrb[0].mxu0 %v5590
    %v5834 = vpop.f32.mrb[0].mxu0
    %v5835 = vadd.f32 0.0, %v5834
    %v5836 = vpop.f32.mrb[0].mxu0
    %v5837 = vadd.f32 0.0, %v5836
    %v5838 = vpop.f32.mrb[0].mxu0
    %v5839 = vadd.f32 0.0, %v5838
    %v5840 = vpop.f32.mrb[0].mxu0
    %v5841 = vadd.f32 0.0, %v5840
    %5842 = vmatprep.mubr.bf16.mxu0 0
    %5843 = vmatmul.mubr.bf16.gmra.mrb[0].mxu0 %v5593
    %v5844 = vpop.f32.mrb[0].mxu0
    %v5845 = vadd.f32 0.0, %v5844
    %v5846 = vpop.f32.mrb[0].mxu0
    %v5847 = vadd.f32 0.0, %v5846
    %v5848 = vpop.f32.mrb[0].mxu0
    %v5849 = vadd.f32 0.0, %v5848
    %v5850 = vpop.f32.mrb[0].mxu0
    %v5851 = vadd.f32 0.0, %v5850
    %5852 = vdwg.mxu0
    %v5853 = vadd.f32 %v5457, %v5642
    %v5854 = vadd.f32 %v5458, %v5644
    %v5855 = vadd.f32 %v5459, %v5765
    %v5856 = vadd.f32 %v5460, %v5767
    %v5857 = vadd.f32 %v5461, %v5646
    %v5858 = vadd.f32 %v5462, %v5648
    %v5859 = vadd.f32 %v5463, %v5769
    %v5860 = vadd.f32 %v5464, %v5771
    %v5861 = vadd.f32 %v5465, %v5652
    %v5862 = vadd.f32 %v5466, %v5654
    %v5863 = vadd.f32 %v5467, %v5775
    %v5864 = vadd.f32 %v5468, %v5777
    %v5865 = vadd.f32 %v5469, %v5656
    %v5866 = vadd.f32 %v5470, %v5658
    %v5867 = vadd.f32 %v5471, %v5779
    %v5868 = vadd.f32 %v5472, %v5781
    %v5869 = vadd.f32 %v5473, %v5662
    %v5870 = vadd.f32 %v5474, %v5664
    %v5871 = vadd.f32 %v5475, %v5785
    %v5872 = vadd.f32 %v5476, %v5787
    %v5873 = vadd.f32 %v5477, %v5666
    %v5874 = vadd.f32 %v5478, %v5668
    %v5875 = vadd.f32 %v5479, %v5789
    %v5876 = vadd.f32 %v5480, %v5791
    %v5877 = vadd.f32 %v5481, %v5672
    %v5878 = vadd.f32 %v5482, %v5674
    %v5879 = vadd.f32 %v5483, %v5795
    %v5880 = vadd.f32 %v5484, %v5797
    %v5881 = vadd.f32 %v5485, %v5676
    %v5882 = vadd.f32 %v5486, %v5678
    %v5883 = vadd.f32 %v5487, %v5799
    %v5884 = vadd.f32 %v5488, %v5801
    %v5885 = vadd.f32 %v5489, %v5682
    %v5886 = vadd.f32 %v5490, %v5684
    %v5887 = vadd.f32 %v5491, %v5805
    %v5888 = vadd.f32 %v5492, %v5807
    %v5889 = vadd.f32 %v5493, %v5686
    %v5890 = vadd.f32 %v5494, %v5688
    %v5891 = vadd.f32 %v5495, %v5809
    %v5892 = vadd.f32 %v5496, %v5811
    %v5893 = vadd.f32 %v5497, %v5692
    %v5894 = vadd.f32 %v5498, %v5694
    %v5895 = vadd.f32 %v5499, %v5815
    %v5896 = vadd.f32 %v5500, %v5817
    %v5897 = vadd.f32 %v5501, %v5696
    %v5898 = vadd.f32 %v5502, %v5698
    %v5899 = vadd.f32 %v5503, %v5819
    %v5900 = vadd.f32 %v5504, %v5821
    %v5901 = vadd.f32 %v5505, %v5702
    %v5902 = vadd.f32 %v5506, %v5704
    %v5903 = vadd.f32 %v5507, %v5825
    %v5904 = vadd.f32 %v5508, %v5827
    %v5905 = vadd.f32 %v5509, %v5706
    %v5906 = vadd.f32 %v5510, %v5708
    %v5907 = vadd.f32 %v5511, %v5829
    %v5908 = vadd.f32 %v5512, %v5831
    %v5909 = vadd.f32 %v5513, %v5712
    %v5910 = vadd.f32 %v5514, %v5714
    %v5911 = vadd.f32 %v5515, %v5835
    %v5912 = vadd.f32 %v5516, %v5837
    %v5913 = vadd.f32 %v5517, %v5716
    %v5914 = vadd.f32 %v5518, %v5718
    %v5915 = vadd.f32 %v5519, %v5839
    %v5916 = vadd.f32 %v5520, %v5841
    %v5917 = vadd.f32 %v5521, %v5722
    %v5918 = vadd.f32 %v5522, %v5724
    %v5919 = vadd.f32 %v5523, %v5845
    %v5920 = vadd.f32 %v5524, %v5847
    %v5921 = vadd.f32 %v5525, %v5726
    %v5922 = vadd.f32 %v5526, %v5728
    %v5923 = vadd.f32 %v5527, %v5849
    %v5924 = vadd.f32 %v5528, %v5851
    %v5925 = vld [vmem:[%s3] sm:$0xf]
    %v5927 = vlaneseq
    %v5928 = vshrl.u32 %v5927, 7
    %v5929 = vsub.s32 0, %v5928
    %v5930 = vrot.slane %v5925, %v5929
    %v5931 = vlaneseq
    %v5932 = vshrl.u32 %v5931, 7
    %v5933 = vsub.s32 1, %v5932
    %v5934 = vrot.slane %v5925, %v5933
    %v5935 = vlaneseq
    %v5936 = vshrl.u32 %v5935, 7
    %v5937 = vsub.s32 2, %v5936
    %v5938 = vrot.slane %v5925, %v5937
    %v5939 = vlaneseq
    %v5940 = vshrl.u32 %v5939, 7
    %v5941 = vsub.s32 3, %v5940
    %v5942 = vrot.slane %v5925, %v5941
    %v5947 = vadd.f32 %v5853, %v5930
    %v5948 = vadd.f32 %v5854, %v5934
    %v5949 = vadd.f32 %v5855, %v5938
    %v5950 = vadd.f32 %v5856, %v5942
    %v5951 = vadd.f32 %v5857, %v5930
    %v5952 = vadd.f32 %v5858, %v5934
    %v5953 = vadd.f32 %v5859, %v5938
    %v5954 = vadd.f32 %v5860, %v5942
    %v5955 = vadd.f32 %v5861, %v5930
    %v5956 = vadd.f32 %v5862, %v5934
    %v5957 = vadd.f32 %v5863, %v5938
    %v5958 = vadd.f32 %v5864, %v5942
    %v5959 = vadd.f32 %v5865, %v5930
    %v5960 = vadd.f32 %v5866, %v5934
    %v5961 = vadd.f32 %v5867, %v5938
    %v5962 = vadd.f32 %v5868, %v5942
    %v5963 = vadd.f32 %v5869, %v5930
    %v5964 = vadd.f32 %v5870, %v5934
    %v5965 = vadd.f32 %v5871, %v5938
    %v5966 = vadd.f32 %v5872, %v5942
    %v5967 = vadd.f32 %v5873, %v5930
    %v5968 = vadd.f32 %v5874, %v5934
    %v5969 = vadd.f32 %v5875, %v5938
    %v5970 = vadd.f32 %v5876, %v5942
    %v5971 = vadd.f32 %v5877, %v5930
    %v5972 = vadd.f32 %v5878, %v5934
    %v5973 = vadd.f32 %v5879, %v5938
    %v5974 = vadd.f32 %v5880, %v5942
    %v5975 = vadd.f32 %v5881, %v5930
    %v5976 = vadd.f32 %v5882, %v5934
    %v5977 = vadd.f32 %v5883, %v5938
    %v5978 = vadd.f32 %v5884, %v5942
    %v5979 = vadd.f32 %v5885, %v5930
    %v5980 = vadd.f32 %v5886, %v5934
    %v5981 = vadd.f32 %v5887, %v5938
    %v5982 = vadd.f32 %v5888, %v5942
    %v5983 = vadd.f32 %v5889, %v5930
    %v5984 = vadd.f32 %v5890, %v5934
    %v5985 = vadd.f32 %v5891, %v5938
    %v5986 = vadd.f32 %v5892, %v5942
    %v5987 = vadd.f32 %v5893, %v5930
    %v5988 = vadd.f32 %v5894, %v5934
    %v5989 = vadd.f32 %v5895, %v5938
    %v5990 = vadd.f32 %v5896, %v5942
    %v5991 = vadd.f32 %v5897, %v5930
    %v5992 = vadd.f32 %v5898, %v5934
    %v5993 = vadd.f32 %v5899, %v5938
    %v5994 = vadd.f32 %v5900, %v5942
    %v5995 = vadd.f32 %v5901, %v5930
    %v5996 = vadd.f32 %v5902, %v5934
    %v5997 = vadd.f32 %v5903, %v5938
    %v5998 = vadd.f32 %v5904, %v5942
    %v5999 = vadd.f32 %v5905, %v5930
    %v6000 = vadd.f32 %v5906, %v5934
    %v6001 = vadd.f32 %v5907, %v5938
    %v6002 = vadd.f32 %v5908, %v5942
    %v6003 = vadd.f32 %v5909, %v5930
    %v6004 = vadd.f32 %v5910, %v5934
    %v6005 = vadd.f32 %v5911, %v5938
    %v6006 = vadd.f32 %v5912, %v5942
    %v6007 = vadd.f32 %v5913, %v5930
    %v6008 = vadd.f32 %v5914, %v5934
    %v6009 = vadd.f32 %v5915, %v5938
    %v6010 = vadd.f32 %v5916, %v5942
    %v6011 = vadd.f32 %v5917, %v5930
    %v6012 = vadd.f32 %v5918, %v5934
    %v6013 = vadd.f32 %v5919, %v5938
    %v6014 = vadd.f32 %v5920, %v5942
    %v6015 = vadd.f32 %v5921, %v5930
    %v6016 = vadd.f32 %v5922, %v5934
    %v6017 = vadd.f32 %v5923, %v5938
    %v6018 = vadd.f32 %v5924, %v5942
    %v6019 = vmax.f32 %v5947, 0.0
    %v6020 = vmax.f32 %v5948, 0.0
    %v6021 = vmax.f32 %v5949, 0.0
    %v6022 = vmax.f32 %v5950, 0.0
    %v6023 = vmax.f32 %v5951, 0.0
    %v6024 = vmax.f32 %v5952, 0.0
    %v6025 = vmax.f32 %v5953, 0.0
    %v6026 = vmax.f32 %v5954, 0.0
    %v6027 = vmax.f32 %v5955, 0.0
    %v6028 = vmax.f32 %v5956, 0.0
    %v6029 = vmax.f32 %v5957, 0.0
    %v6030 = vmax.f32 %v5958, 0.0
    %v6031 = vmax.f32 %v5959, 0.0
    %v6032 = vmax.f32 %v5960, 0.0
    %v6033 = vmax.f32 %v5961, 0.0
    %v6034 = vmax.f32 %v5962, 0.0
    %v6035 = vmax.f32 %v5963, 0.0
    %v6036 = vmax.f32 %v5964, 0.0
    %v6037 = vmax.f32 %v5965, 0.0
    %v6038 = vmax.f32 %v5966, 0.0
    %v6039 = vmax.f32 %v5967, 0.0
    %v6040 = vmax.f32 %v5968, 0.0
    %v6041 = vmax.f32 %v5969, 0.0
    %v6042 = vmax.f32 %v5970, 0.0
    %v6043 = vmax.f32 %v5971, 0.0
    %v6044 = vmax.f32 %v5972, 0.0
    %v6045 = vmax.f32 %v5973, 0.0
    %v6046 = vmax.f32 %v5974, 0.0
    %v6047 = vmax.f32 %v5975, 0.0
    %v6048 = vmax.f32 %v5976, 0.0
    %v6049 = vmax.f32 %v5977, 0.0
    %v6050 = vmax.f32 %v5978, 0.0
    %v6051 = vmax.f32 %v5979, 0.0
    %v6052 = vmax.f32 %v5980, 0.0
    %v6053 = vmax.f32 %v5981, 0.0
    %v6054 = vmax.f32 %v5982, 0.0
    %v6055 = vmax.f32 %v5983, 0.0
    %v6056 = vmax.f32 %v5984, 0.0
    %v6057 = vmax.f32 %v5985, 0.0
    %v6058 = vmax.f32 %v5986, 0.0
    %v6059 = vmax.f32 %v5987, 0.0
    %v6060 = vmax.f32 %v5988, 0.0
    %v6061 = vmax.f32 %v5989, 0.0
    %v6062 = vmax.f32 %v5990, 0.0
    %v6063 = vmax.f32 %v5991, 0.0
    %v6064 = vmax.f32 %v5992, 0.0
    %v6065 = vmax.f32 %v5993, 0.0
    %v6066 = vmax.f32 %v5994, 0.0
    %v6067 = vmax.f32 %v5995, 0.0
    %v6068 = vmax.f32 %v5996, 0.0
    %v6069 = vmax.f32 %v5997, 0.0
    %v6070 = vmax.f32 %v5998, 0.0
    %v6071 = vmax.f32 %v5999, 0.0
    %v6072 = vmax.f32 %v6000, 0.0
    %v6073 = vmax.f32 %v6001, 0.0
    %v6074 = vmax.f32 %v6002, 0.0
    %v6075 = vmax.f32 %v6003, 0.0
    %v6076 = vmax.f32 %v6004, 0.0
    %v6077 = vmax.f32 %v6005, 0.0
    %v6078 = vmax.f32 %v6006, 0.0
    %v6079 = vmax.f32 %v6007, 0.0
    %v6080 = vmax.f32 %v6008, 0.0
    %v6081 = vmax.f32 %v6009, 0.0
    %v6082 = vmax.f32 %v6010, 0.0
    %v6083 = vmax.f32 %v6011, 0.0
    %v6084 = vmax.f32 %v6012, 0.0
    %v6085 = vmax.f32 %v6013, 0.0
    %v6086 = vmax.f32 %v6014, 0.0
    %v6087 = vmax.f32 %v6015, 0.0
    %v6088 = vmax.f32 %v6016, 0.0
    %v6089 = vmax.f32 %v6017, 0.0
    %v6090 = vmax.f32 %v6018, 0.0
    %v6091 = vpack.c.bf16 %v6023, %v6019
    %v6092 = vpack.c.bf16 %v6024, %v6020
    %v6093 = vpack.c.bf16 %v6025, %v6021
    %v6094 = vpack.c.bf16 %v6026, %v6022
    %v6095 = vpack.c.bf16 %v6031, %v6027
    %v6096 = vpack.c.bf16 %v6032, %v6028
    %v6097 = vpack.c.bf16 %v6033, %v6029
    %v6098 = vpack.c.bf16 %v6034, %v6030
    %v6099 = vpack.c.bf16 %v6039, %v6035
    %v6100 = vpack.c.bf16 %v6040, %v6036
    %v6101 = vpack.c.bf16 %v6041, %v6037
    %v6102 = vpack.c.bf16 %v6042, %v6038
    %v6103 = vpack.c.bf16 %v6047, %v6043
    %v6104 = vpack.c.bf16 %v6048, %v6044
    %v6105 = vpack.c.bf16 %v6049, %v6045
    %v6106 = vpack.c.bf16 %v6050, %v6046
    %v6107 = vpack.c.bf16 %v6055, %v6051
    %v6108 = vpack.c.bf16 %v6056, %v6052
    %v6109 = vpack.c.bf16 %v6057, %v6053
    %v6110 = vpack.c.bf16 %v6058, %v6054
    %v6111 = vpack.c.bf16 %v6063, %v6059
    %v6112 = vpack.c.bf16 %v6064, %v6060
    %v6113 = vpack.c.bf16 %v6065, %v6061
    %v6114 = vpack.c.bf16 %v6066, %v6062
    %v6115 = vpack.c.bf16 %v6071, %v6067
    %v6116 = vpack.c.bf16 %v6072, %v6068
    %v6117 = vpack.c.bf16 %v6073, %v6069
    %v6118 = vpack.c.bf16 %v6074, %v6070
    %v6119 = vpack.c.bf16 %v6079, %v6075
    %v6120 = vpack.c.bf16 %v6080, %v6076
    %v6121 = vpack.c.bf16 %v6081, %v6077
    %v6122 = vpack.c.bf16 %v6082, %v6078
    %v6123 = vpack.c.bf16 %v6087, %v6083
    %v6124 = vpack.c.bf16 %v6088, %v6084
    %v6125 = vpack.c.bf16 %v6089, %v6085
    %v6126 = vpack.c.bf16 %v6090, %v6086
    %v6163 = vunpack.c.l.b16 %v6091
    %v6164 = vunpack.c.l.b16 %v6092
    %v6165 = vunpack.c.l.b16 %v6093
    %v6166 = vunpack.c.l.b16 %v6094
    %v6167 = vunpack.c.h.b16 %v6091
    %v6168 = vunpack.c.h.b16 %v6092
    %v6169 = vunpack.c.h.b16 %v6093
    %v6170 = vunpack.c.h.b16 %v6094
    %v6171 = vunpack.c.l.b16 %v6095
    %v6172 = vunpack.c.l.b16 %v6096
    %v6173 = vunpack.c.l.b16 %v6097
    %v6174 = vunpack.c.l.b16 %v6098
    %v6175 = vunpack.c.h.b16 %v6095
    %v6176 = vunpack.c.h.b16 %v6096
    %v6177 = vunpack.c.h.b16 %v6097
    %v6178 = vunpack.c.h.b16 %v6098
    %v6179 = vunpack.c.l.b16 %v6099
    %v6180 = vunpack.c.l.b16 %v6100
    %v6181 = vunpack.c.l.b16 %v6101
    %v6182 = vunpack.c.l.b16 %v6102
    %v6183 = vunpack.c.h.b16 %v6099
    %v6184 = vunpack.c.h.b16 %v6100
    %v6185 = vunpack.c.h.b16 %v6101
    %v6186 = vunpack.c.h.b16 %v6102
    %v6187 = vunpack.c.l.b16 %v6103
    %v6188 = vunpack.c.l.b16 %v6104
    %v6189 = vunpack.c.l.b16 %v6105
    %v6190 = vunpack.c.l.b16 %v6106
    %v6191 = vunpack.c.h.b16 %v6103
    %v6192 = vunpack.c.h.b16 %v6104
    %v6193 = vunpack.c.h.b16 %v6105
    %v6194 = vunpack.c.h.b16 %v6106
    %v6195 = vunpack.c.l.b16 %v6107
    %v6196 = vunpack.c.l.b16 %v6108
    %v6197 = vunpack.c.l.b16 %v6109
    %v6198 = vunpack.c.l.b16 %v6110
    %v6199 = vunpack.c.h.b16 %v6107
    %v6200 = vunpack.c.h.b16 %v6108
    %v6201 = vunpack.c.h.b16 %v6109
    %v6202 = vunpack.c.h.b16 %v6110
    %v6203 = vunpack.c.l.b16 %v6111
    %v6204 = vunpack.c.l.b16 %v6112
    %v6205 = vunpack.c.l.b16 %v6113
    %v6206 = vunpack.c.l.b16 %v6114
    %v6207 = vunpack.c.h.b16 %v6111
    %v6208 = vunpack.c.h.b16 %v6112
    %v6209 = vunpack.c.h.b16 %v6113
    %v6210 = vunpack.c.h.b16 %v6114
    %v6211 = vunpack.c.l.b16 %v6115
    %v6212 = vunpack.c.l.b16 %v6116
    %v6213 = vunpack.c.l.b16 %v6117
    %v6214 = vunpack.c.l.b16 %v6118
    %v6215 = vunpack.c.h.b16 %v6115
    %v6216 = vunpack.c.h.b16 %v6116
    %v6217 = vunpack.c.h.b16 %v6117
    %v6218 = vunpack.c.h.b16 %v6118
    %v6219 = vunpack.c.l.b16 %v6119
    %v6220 = vunpack.c.l.b16 %v6120
    %v6221 = vunpack.c.l.b16 %v6121
    %v6222 = vunpack.c.l.b16 %v6122
    %v6223 = vunpack.c.h.b16 %v6119
    %v6224 = vunpack.c.h.b16 %v6120
    %v6225 = vunpack.c.h.b16 %v6121
    %v6226 = vunpack.c.h.b16 %v6122
    %v6227 = vunpack.c.l.b16 %v6123
    %v6228 = vunpack.c.l.b16 %v6124
    %v6229 = vunpack.c.l.b16 %v6125
    %v6230 = vunpack.c.l.b16 %v6126
    %v6231 = vunpack.c.h.b16 %v6123
    %v6232 = vunpack.c.h.b16 %v6124
    %v6233 = vunpack.c.h.b16 %v6125
    %v6234 = vunpack.c.h.b16 %v6126
    %v6235 = vpack.c.b16 %v6164, %v6163
    %v6236 = vpack.c.b16 %v6166, %v6165
    %v6237 = vpack.c.b16 %v6168, %v6167
    %v6238 = vpack.c.b16 %v6170, %v6169
    %v6239 = vpack.c.b16 %v6172, %v6171
    %v6240 = vpack.c.b16 %v6174, %v6173
    %v6241 = vpack.c.b16 %v6176, %v6175
    %v6242 = vpack.c.b16 %v6178, %v6177
    %v6243 = vpack.c.b16 %v6180, %v6179
    %v6244 = vpack.c.b16 %v6182, %v6181
    %v6245 = vpack.c.b16 %v6184, %v6183
    %v6246 = vpack.c.b16 %v6186, %v6185
    %v6247 = vpack.c.b16 %v6188, %v6187
    %v6248 = vpack.c.b16 %v6190, %v6189
    %v6249 = vpack.c.b16 %v6192, %v6191
    %v6250 = vpack.c.b16 %v6194, %v6193
    %v6251 = vpack.c.b16 %v6196, %v6195
    %v6252 = vpack.c.b16 %v6198, %v6197
    %v6253 = vpack.c.b16 %v6200, %v6199
    %v6254 = vpack.c.b16 %v6202, %v6201
    %v6255 = vpack.c.b16 %v6204, %v6203
    %v6256 = vpack.c.b16 %v6206, %v6205
    %v6257 = vpack.c.b16 %v6208, %v6207
    %v6258 = vpack.c.b16 %v6210, %v6209
    %v6259 = vpack.c.b16 %v6212, %v6211
    %v6260 = vpack.c.b16 %v6214, %v6213
    %v6261 = vpack.c.b16 %v6216, %v6215
    %v6262 = vpack.c.b16 %v6218, %v6217
    %v6263 = vpack.c.b16 %v6220, %v6219
    %v6264 = vpack.c.b16 %v6222, %v6221
    %v6265 = vpack.c.b16 %v6224, %v6223
    %v6266 = vpack.c.b16 %v6226, %v6225
    %v6267 = vpack.c.b16 %v6228, %v6227
    %v6268 = vpack.c.b16 %v6230, %v6229
    %v6269 = vpack.c.b16 %v6232, %v6231
    %v6270 = vpack.c.b16 %v6234, %v6233
    %6307 = vst [vmem:[#allocation3] sm:$0xff] %v6235
    %6308 = vst [vmem:[#allocation3 + $0x8] sm:$0xff] %v6236
    %6309 = vst [vmem:[#allocation3 + $0x10] sm:$0xff] %v6237
    %6310 = vst [vmem:[#allocation3 + $0x18] sm:$0xff] %v6238
    %6311 = vst [vmem:[#allocation3 + $0x20] sm:$0xff] %v6239
    %6312 = vst [vmem:[#allocation3 + $0x28] sm:$0xff] %v6240
    %6313 = vst [vmem:[#allocation3 + $0x30] sm:$0xff] %v6241
    %6314 = vst [vmem:[#allocation3 + $0x38] sm:$0xff] %v6242
    %6315 = vst [vmem:[#allocation3 + $0x40] sm:$0xff] %v6243
    %6316 = vst [vmem:[#allocation3 + $0x48] sm:$0xff] %v6244
    %6317 = vst [vmem:[#allocation3 + $0x50] sm:$0xff] %v6245
    %6318 = vst [vmem:[#allocation3 + $0x58] sm:$0xff] %v6246
    %6319 = vst [vmem:[#allocation3 + $0x60] sm:$0xff] %v6247
    %6320 = vst [vmem:[#allocation3 + $0x68] sm:$0xff] %v6248
    %6321 = vst [vmem:[#allocation3 + $0x70] sm:$0xff] %v6249
    %6322 = vst [vmem:[#allocation3 + $0x78] sm:$0xff] %v6250
    %6323 = vst [vmem:[#allocation3 + $0x80] sm:$0xff] %v6251
    %6324 = vst [vmem:[#allocation3 + $0x88] sm:$0xff] %v6252
    %6325 = vst [vmem:[#allocation3 + $0x90] sm:$0xff] %v6253
    %6326 = vst [vmem:[#allocation3 + $0x98] sm:$0xff] %v6254
    %6327 = vst [vmem:[#allocation3 + $0xa0] sm:$0xff] %v6255
    %6328 = vst [vmem:[#allocation3 + $0xa8] sm:$0xff] %v6256
    %6329 = vst [vmem:[#allocation3 + $0xb0] sm:$0xff] %v6257
    %6330 = vst [vmem:[#allocation3 + $0xb8] sm:$0xff] %v6258
    %6331 = vst [vmem:[#allocation3 + $0xc0] sm:$0xff] %v6259
    %6332 = vst [vmem:[#allocation3 + $0xc8] sm:$0xff] %v6260
    %6333 = vst [vmem:[#allocation3 + $0xd0] sm:$0xff] %v6261
    %6334 = vst [vmem:[#allocation3 + $0xd8] sm:$0xff] %v6262
    %6335 = vst [vmem:[#allocation3 + $0xe0] sm:$0xff] %v6263
    %6336 = vst [vmem:[#allocation3 + $0xe8] sm:$0xff] %v6264
    %6337 = vst [vmem:[#allocation3 + $0xf0] sm:$0xff] %v6265
    %6338 = vst [vmem:[#allocation3 + $0xf8] sm:$0xff] %v6266
    %6339 = vst [vmem:[#allocation3 + $0x100] sm:$0xff] %v6267
    %6340 = vst [vmem:[#allocation3 + $0x108] sm:$0xff] %v6268
    %6341 = vst [vmem:[#allocation3 + $0x110] sm:$0xff] %v6269
    %6342 = vst [vmem:[#allocation3 + $0x118] sm:$0xff] %v6270
    // Predicated region
    $region18: #{tpu_custom_call.1} parent=1 // pred_check
      _
    $region19: #{tpu_custom_call.1} parent=1 // pred_check_branch
      %6344 = sbr.rel (0) target = $region21
    $region20: #{tpu_custom_call.1} parent=1 // pred_region
      %s6346 = ssub.s32 4608, 4608
      %6347 = vsyncadd [#allocation4], %s6346
      %s6348 = sshll.u32 [#allocation3], 4
      %s6349 = int_to_ptr.vmem [resolvable:$true] %s6348
      %6354 = dma.vmem_to_hbm [thread:$0]  %s6349, 4608, %s4, [#allocation4], 256, 256, 16
    $region21: #{tpu_custom_call.1} parent=1 // pred_fallthru
      _
    // Predicated region
    $region22: #{tpu_custom_call.1} parent=1 // pred_check
      _
    $region23: #{tpu_custom_call.1} parent=1 // pred_check_branch
      %6356 = sbr.rel (0) target = $region25
    $region24: #{tpu_custom_call.1} parent=1 // pred_region
      %6357 = dma.done [#allocation4], 4608
    $region25: #{tpu_custom_call.1} parent=1 // pred_fallthru
      _
    %6358 = vsyncpa [#allocation4], 1

</llo_original>
